<compile_context>
chip_gen: v7x
topology: tpu7x:2x2x1
jax: 0.10.0
libtpu: 0.0.40
codegen_flags: <defaults>
</compile_context>

<pallas_src>
import functools

import jax
import jax.numpy as jnp
import numpy as np
from jax import lax
from jax.experimental import pallas as pl
from jax.experimental.pallas import tpu as pltpu


def _round_up(n, m):
    return ((n + m - 1) // m) * m


def _permute_gates(w):
    """PyTorch LSTM gate order (i,f,g,o) -> (i,f,o,g) along the leading 4H axis."""
    H = w.shape[0] // 4
    return jnp.concatenate([w[0:H], w[H:2 * H], w[3 * H:4 * H], w[2 * H:3 * H]],
                           axis=0)


# ---------------------------------------------------------------------------
# Fused kernel: per-chunk input projections + serial LSTM recurrence + head.
# Grid = (time_chunks,), semantics = ("arbitrary",) (state carries across).
# ---------------------------------------------------------------------------
def _lstm_mog_kernel(H, Tc, T_total, needs_mask, prec,
                     x_ref, h1_0_ref, c1_0_ref, h2_0_ref, c2_0_ref,
                     w_in_ref, b_in_ref, w_hh_ref, w_ih2h_ref,
                     w_head_ref, b_head_ref,
                     out_ref, h1n_ref, c1n_ref, h2n_ref, c2n_ref,
                     gx_s, hseq_s):
    i = pl.program_id(0)
    Bp = x_ref.shape[1]
    OUT_P = out_ref.shape[-1]

    # The final-state output refs double as the resident recurrent state
    # (constant out index_map -> block stays in VMEM across chunks).
    @pl.when(i == 0)
    def _():
        h1n_ref[...] = h1_0_ref[...]
        c1n_ref[...] = c1_0_ref[...]
        h2n_ref[...] = h2_0_ref[...]
        c2n_ref[...] = c2_0_ref[...]

    # ---- prologue (off the serial path): both layers' input projections ----
    xin = x_ref[...].reshape(Tc * Bp, 3)
    gx = jnp.dot(xin, w_in_ref[...], preferred_element_type=jnp.float32,
                 precision=prec) + b_in_ref[...]
    gx_s[...] = gx.reshape(Tc, Bp, 8 * H)

    # Recurrent weights stay resident for the whole chunk.
    w_hh = w_hh_ref[...]          # block-diagonal [whh1, 0; 0, whh2]  (2H, 8H)
    w_ih2h = w_ih2h_ref[...]      # layer-2 input weight, h1 part      (H, 4H)

    def gates_to_hc(g, c):
        # Permuted gate order (i, f, o, g): one sigmoid over 3H, one tanh.
        sg = jax.nn.sigmoid(g[:, :3 * H])
        ig = sg[:, 0 * H:1 * H]
        fg = sg[:, 1 * H:2 * H]
        og = sg[:, 2 * H:3 * H]
        gg = jnp.tanh(g[:, 3 * H:4 * H])
        c_new = fg * c + ig * gg
        h_new = og * jnp.tanh(c_new)
        return h_new, c_new

    def step(t, carry):
        h_cat, c1, c2 = carry
        # One block-diagonal recurrent matmul for both layers.
        g_hh = jnp.dot(h_cat, w_hh, preferred_element_type=jnp.float32,
                       precision=prec)
        g_all = gx_s[t] + g_hh                         # (Bp, 8H)
        h1, c1_new = gates_to_hc(g_all[:, :4 * H], c1)
        # Layer-2 skip connection: the only dot on the cross-layer dependency.
        g2 = g_all[:, 4 * H:] + jnp.dot(h1, w_ih2h,
                                        preferred_element_type=jnp.float32,
                                        precision=prec)
        h2, c2_new = gates_to_hc(g2, c2)
        h_cat_new = jnp.concatenate([h1, h2], axis=-1)
        if needs_mask:
            valid = (i * Tc + t) < T_total
            h_cat_new = jnp.where(valid, h_cat_new, h_cat)
            c1_new = jnp.where(valid, c1_new, c1)
            c2_new = jnp.where(valid, c2_new, c2)
        hseq_s[t] = h_cat_new                          # single per-step store
        return (h_cat_new, c1_new, c2_new)

    h_cat0 = jnp.concatenate([h1n_ref[...], h2n_ref[...]], axis=-1)
    carry0 = (h_cat0, c1n_ref[...], c2n_ref[...])

    if Tc <= 8:
        unroll = Tc
    elif Tc % 8 == 0:
        unroll = 8
    elif Tc % 4 == 0:
        unroll = 4
    elif Tc % 2 == 0:
        unroll = 2
    else:
        unroll = 1
    h_cat, c1, c2 = lax.fori_loop(0, Tc, step, carry0, unroll=unroll)

    h1n_ref[...] = h_cat[:, :H]
    h2n_ref[...] = h_cat[:, H:]
    c1n_ref[...] = c1
    c2n_ref[...] = c2

    # ---- epilogue (off the serial path): MoG head, lane-dense padded out ---
    flat = hseq_s[...].reshape(Tc * Bp, 2 * H)
    p = jnp.dot(flat, w_head_ref[...], preferred_element_type=jnp.float32,
                precision=prec) + b_head_ref[...]
    out_ref[...] = p.reshape(Tc, Bp, OUT_P)


def init_params(key, cell_size, nclusters):
    """Deterministic parameter init mirroring the nn.Module __init__ shapes."""
    H, K = cell_size, nclusters
    out_dim = 1 + 6 * K
    k_lstm = 1.0 / np.sqrt(H)
    k_lin = 1.0 / np.sqrt(2 * H)
    keys = jax.random.split(key, 10)

    def u(k, shape, bound):
        return jax.random.uniform(k, shape, jnp.float32, -bound, bound)

    return {
        "w_ih1": u(keys[0], (4 * H, 3), k_lstm),
        "w_hh1": u(keys[1], (4 * H, H), k_lstm),
        "b_ih1": u(keys[2], (4 * H,), k_lstm),
        "b_hh1": u(keys[3], (4 * H,), k_lstm),
        "w_ih2": u(keys[4], (4 * H, H + 3), k_lstm),
        "w_hh2": u(keys[5], (4 * H, H), k_lstm),
        "b_ih2": u(keys[6], (4 * H,), k_lstm),
        "b_hh2": u(keys[7], (4 * H,), k_lstm),
        "w_lin": u(keys[8], (out_dim, 2 * H), k_lin),
        "b_lin": u(keys[9], (out_dim,), k_lin),
    }


@functools.partial(jax.jit, static_argnames=("nclusters",))
def mog_handwriting_forward(x, prev_state_first, prev_state_second, params,
                            nclusters):
    """x: [B, T, 3] (batch_first), prev states: ([1, B, H], [1, B, H])."""
    f32 = jnp.float32
    B, T, _ = x.shape
    h1_0, c1_0 = prev_state_first
    h2_0, c2_0 = prev_state_second
    H = h1_0.shape[-1]
    K = nclusters
    OUT = 1 + 6 * K
    OUT_P = _round_up(OUT, 128)
    # Single-pass bf16 MXU on the serial path (f32 accumulation).
    prec = lax.Precision.DEFAULT

    # ---- padding / tiling decisions --------------------------------------
    B_pad = _round_up(B, 8)                       # fill f32 sublanes
    n_chunks = (T + 255) // 256                   # time chunks (<= 256 steps)
    Tc = _round_up(-(-T // n_chunks), 8)          # static chunk trip count
    T_pad = Tc * n_chunks
    needs_mask = (T_pad != T)

    # ---- weight plumbing (all free, wrapper-side) -------------------------
    x_tm = jnp.transpose(x, (1, 0, 2)).astype(f32)            # [T, B, 3]
    x_tm = jnp.pad(x_tm, ((0, T_pad - T), (0, B_pad - B), (0, 0)))

    wih1_t = _permute_gates(params["w_ih1"].astype(f32)).T    # [3, 4H]
    wih2 = _permute_gates(params["w_ih2"].astype(f32))        # [4H, H+3]
    wih2x_t = wih2[:, H:].T                                   # [3, 4H]
    wih2h_t = wih2[:, :H].T                                   # [H, 4H]
    whh1_t = _permute_gates(params["w_hh1"].astype(f32)).T    # [H, 4H]
    whh2_t = _permute_gates(params["w_hh2"].astype(f32)).T    # [H, 4H]
    b1 = _permute_gates((params["b_ih1"] + params["b_hh1"]).astype(f32))
    b2 = _permute_gates((params["b_ih2"] + params["b_hh2"]).astype(f32))

    w_in = jnp.concatenate([wih1_t, wih2x_t], axis=1)                 # [3, 8H]
    b_in = jnp.concatenate([b1, b2], axis=0).reshape(1, 8 * H)        # [1, 8H]

    zeros_h = jnp.zeros((H, 4 * H), f32)
    w_hh_bd = jnp.concatenate(
        [jnp.concatenate([whh1_t, zeros_h], axis=1),
         jnp.concatenate([zeros_h, whh2_t], axis=1)], axis=0)         # [2H, 8H]

    w_lin = params["w_lin"].astype(f32)                               # [OUT, 2H]
    w_head = jnp.pad(w_lin.T, ((0, 0), (0, OUT_P - OUT)))             # [2H, OUT_P]
    b_head = jnp.pad(params["b_lin"].astype(f32),
                     (0, OUT_P - OUT)).reshape(1, OUT_P)

    def pad_state(s):
        return jnp.pad(s[0].astype(f32), ((0, B_pad - B), (0, 0)))
    h1_0p, c1_0p, h2_0p, c2_0p = map(pad_state, (h1_0, c1_0, h2_0, c2_0))

    # ---- the fused Pallas kernel ------------------------------------------
    st_spec = pl.BlockSpec((B_pad, H), lambda i: (0, 0))
    kernel = functools.partial(_lstm_mog_kernel, H, Tc, T, needs_mask, prec)

    params_out, h1n, c1n, h2n, c2n = pl.pallas_call(
        kernel,
        grid=(n_chunks,),
        in_specs=[pl.BlockSpec((Tc, B_pad, 3), lambda i: (i, 0, 0)),
                  st_spec, st_spec, st_spec, st_spec,
                  pl.BlockSpec((3, 8 * H), lambda i: (0, 0)),
                  pl.BlockSpec((1, 8 * H), lambda i: (0, 0)),
                  pl.BlockSpec((2 * H, 8 * H), lambda i: (0, 0)),
                  pl.BlockSpec((H, 4 * H), lambda i: (0, 0)),
                  pl.BlockSpec((2 * H, OUT_P), lambda i: (0, 0)),
                  pl.BlockSpec((1, OUT_P), lambda i: (0, 0))],
        out_specs=(pl.BlockSpec((Tc, B_pad, OUT_P), lambda i: (i, 0, 0)),
                   st_spec, st_spec, st_spec, st_spec),
        out_shape=(jax.ShapeDtypeStruct((T_pad, B_pad, OUT_P), f32),
                   jax.ShapeDtypeStruct((B_pad, H), f32),
                   jax.ShapeDtypeStruct((B_pad, H), f32),
                   jax.ShapeDtypeStruct((B_pad, H), f32),
                   jax.ShapeDtypeStruct((B_pad, H), f32)),
        scratch_shapes=[pltpu.VMEM((Tc, B_pad, 8 * H), f32),
                        pltpu.VMEM((Tc, B_pad, 2 * H), f32)],
        compiler_params=pltpu.CompilerParams(
            dimension_semantics=("arbitrary",),
            vmem_limit_bytes=32 * 1024 * 1024),
    )(x_tm, h1_0p, c1_0p, h2_0p, c2_0p, w_in, b_in, w_hh_bd, wih2h_t,
      w_head, b_head)

    # ---- cheap per-element MoG activations + layout glue (fused by XLA) ---
    p_bt = jnp.transpose(params_out[:T, :B, :OUT], (1, 0, 2))         # [B,T,OUT]
    mix = jax.nn.softmax(p_bt[..., 0 * K:1 * K], axis=-1)
    mu1 = p_bt[..., 1 * K:2 * K]
    mu2 = p_bt[..., 2 * K:3 * K]
    ls1 = p_bt[..., 3 * K:4 * K]
    ls2 = p_bt[..., 4 * K:5 * K]
    rho = jnp.tanh(p_bt[..., 5 * K:6 * K])
    eos = jax.nn.sigmoid(p_bt[..., 6 * K:6 * K + 1])

    return (eos, mix, mu1, mu2, ls1, ls2, rho,
            (h1n[:B][None], c1n[:B][None]),
            (h2n[:B][None], c2n[:B][None]))


def mog_handwriting_reference(x, prev_state_first, prev_state_second, params,
                              nclusters):
    """Pure-JAX reference replicating the PyTorch forward exactly (f32)."""
    K = nclusters
    w_ih1, w_hh1 = params["w_ih1"], params["w_hh1"]
    b1 = params["b_ih1"] + params["b_hh1"]
    w_ih2, w_hh2 = params["w_ih2"], params["w_hh2"]
    b2 = params["b_ih2"] + params["b_hh2"]
    w_lin, b_lin = params["w_lin"], params["b_lin"]
    hp = lax.Precision.HIGHEST

    def cell(xt, h, c, wih, whh, b):
        gates = (jnp.dot(xt, wih.T, precision=hp)
                 + jnp.dot(h, whh.T, precision=hp) + b)
        i, f, g, o = jnp.split(gates, 4, axis=-1)
        c_new = jax.nn.sigmoid(f) * c + jax.nn.sigmoid(i) * jnp.tanh(g)
        h_new = jax.nn.sigmoid(o) * jnp.tanh(c_new)
        return h_new, c_new

    def step(carry, xt):
        h1, c1, h2, c2 = carry
        h1, c1 = cell(xt, h1, c1, w_ih1, w_hh1, b1)
        x2 = jnp.concatenate([h1, xt], axis=-1)
        h2, c2 = cell(x2, h2, c2, w_ih2, w_hh2, b2)
        comb = jnp.concatenate([h1, h2], axis=-1)
        p = jnp.dot(comb, w_lin.T, precision=hp) + b_lin
        return (h1, c1, h2, c2), p

    carry0 = (prev_state_first[0][0], prev_state_first[1][0],
              prev_state_second[0][0], prev_state_second[1][0])
    (h1n, c1n, h2n, c2n), p_seq = lax.scan(step, carry0,
                                           jnp.transpose(x, (1, 0, 2)))
    p = jnp.transpose(p_seq, (1, 0, 2))
    mog = p[..., :6 * K]
    mix, mu1, mu2, ls1, ls2, rho_raw = jnp.split(mog, 6, axis=-1)
    mix = jax.nn.softmax(mix, axis=-1)
    rho = jnp.tanh(rho_raw)
    eos = jax.nn.sigmoid(p[..., -1:])
    return (eos, mix, mu1, mu2, ls1, ls2, rho,
            (h1n[None], c1n[None]), (h2n[None], c2n[None]))


if __name__ == "__main__":
    cell_size = 32     # hidden size H
    nclusters = 4      # K -> linear output dim 1 + 6*4 = 25
    B, T = 2, 8

    key = jax.random.PRNGKey(0)
    k_p, k_x, k_h1, k_c1, k_h2, k_c2 = jax.random.split(key, 6)

    params = init_params(k_p, cell_size, nclusters)
    x = jax.random.normal(k_x, (B, T, 3), jnp.float32)
    prev_state_first = (
        0.1 * jax.random.normal(k_h1, (1, B, cell_size), jnp.float32),
        0.1 * jax.random.normal(k_c1, (1, B, cell_size), jnp.float32),
    )
    prev_state_second = (
        0.1 * jax.random.normal(k_h2, (1, B, cell_size), jnp.float32),
        0.1 * jax.random.normal(k_c2, (1, B, cell_size), jnp.float32),
    )

    out = mog_handwriting_forward(x, prev_state_first, prev_state_second,
                                  params, nclusters)
    out = jax.block_until_ready(out)

    ref = mog_handwriting_reference(x, prev_state_first, prev_state_second,
                                    params, nclusters)
    # Tolerance accounts for single-pass bf16 MXU matmuls vs. the f32
    # HIGHEST-precision reference accumulated over T timesteps.
    for a, b in zip(jax.tree_util.tree_leaves(out),
                    jax.tree_util.tree_leaves(ref)):
        np.testing.assert_allclose(np.asarray(a), np.asarray(b),
                                   rtol=2e-2, atol=2e-2)

    print("KERNEL_OK")
</pallas_src>

<mosaic_0001>
module attributes {stable_mosaic.version = 11 : i64} {
  func.func @_lstm_mog_kernel(%arg0: i32, %arg1: memref<8x8x3xf32, #tpu.memory_space<vmem>>, %arg2: memref<8x32xf32, #tpu.memory_space<vmem>>, %arg3: memref<8x32xf32, #tpu.memory_space<vmem>>, %arg4: memref<8x32xf32, #tpu.memory_space<vmem>>, %arg5: memref<8x32xf32, #tpu.memory_space<vmem>>, %arg6: memref<3x256xf32, #tpu.memory_space<vmem>>, %arg7: memref<1x256xf32, #tpu.memory_space<vmem>>, %arg8: memref<64x256xf32, #tpu.memory_space<vmem>>, %arg9: memref<32x128xf32, #tpu.memory_space<vmem>>, %arg10: memref<64x128xf32, #tpu.memory_space<vmem>>, %arg11: memref<1x128xf32, #tpu.memory_space<vmem>>, %arg12: memref<8x8x128xf32, #tpu.memory_space<vmem>>, %arg13: memref<8x32xf32, #tpu.memory_space<vmem>>, %arg14: memref<8x32xf32, #tpu.memory_space<vmem>>, %arg15: memref<8x32xf32, #tpu.memory_space<vmem>>, %arg16: memref<8x32xf32, #tpu.memory_space<vmem>>, %arg17: memref<8x8x256xf32, #tpu.memory_space<vmem>>, %arg18: memref<8x8x64xf32, #tpu.memory_space<vmem>>) attributes {dimension_semantics = [#tpu.dimension_semantics<arbitrary>], iteration_bounds = array<i64: 1>, scalar_prefetch = 0 : i64, scratch_operands = 2 : i64, tpu.core_type = #tpu.core_type<tc>, window_params = [{transform_indices = @transform_0, window_bounds = array<i64: 8, 8, 3>}, {pipeline_mode = #tpu.pipeline_mode<synchronous>, transform_indices = @transform_1, window_bounds = array<i64: 8, 32>}, {pipeline_mode = #tpu.pipeline_mode<synchronous>, transform_indices = @transform_2, window_bounds = array<i64: 8, 32>}, {pipeline_mode = #tpu.pipeline_mode<synchronous>, transform_indices = @transform_3, window_bounds = array<i64: 8, 32>}, {pipeline_mode = #tpu.pipeline_mode<synchronous>, transform_indices = @transform_4, window_bounds = array<i64: 8, 32>}, {pipeline_mode = #tpu.pipeline_mode<synchronous>, transform_indices = @transform_5, window_bounds = array<i64: 3, 256>}, {pipeline_mode = #tpu.pipeline_mode<synchronous>, transform_indices = @transform_6, window_bounds = array<i64: 1, 256>}, {pipeline_mode = #tpu.pipeline_mode<synchronous>, transform_indices = @transform_7, window_bounds = array<i64: 64, 256>}, {pipeline_mode = #tpu.pipeline_mode<synchronous>, transform_indices = @transform_8, window_bounds = array<i64: 32, 128>}, {pipeline_mode = #tpu.pipeline_mode<synchronous>, transform_indices = @transform_9, window_bounds = array<i64: 64, 128>}, {pipeline_mode = #tpu.pipeline_mode<synchronous>, transform_indices = @transform_10, window_bounds = array<i64: 1, 128>}, {transform_indices = @transform_11, window_bounds = array<i64: 8, 8, 128>}, {pipeline_mode = #tpu.pipeline_mode<synchronous>, transform_indices = @transform_12, window_bounds = array<i64: 8, 32>}, {pipeline_mode = #tpu.pipeline_mode<synchronous>, transform_indices = @transform_13, window_bounds = array<i64: 8, 32>}, {pipeline_mode = #tpu.pipeline_mode<synchronous>, transform_indices = @transform_14, window_bounds = array<i64: 8, 32>}, {pipeline_mode = #tpu.pipeline_mode<synchronous>, transform_indices = @transform_15, window_bounds = array<i64: 8, 32>}]} {
    %c0_i32 = arith.constant 0 : i32
    %0 = arith.cmpi eq, %arg0, %c0_i32 : i32
    %1 = arith.extui %0 : i1 to i32
    %c0_i32_0 = arith.constant 0 : i32
    %2 = arith.cmpi ne, %1, %c0_i32_0 : i32
    scf.if %2 {
      %c0_106 = arith.constant 0 : index
      %c0_107 = arith.constant 0 : index
      %402 = vector.load %arg2[%c0_106, %c0_107] : memref<8x32xf32, #tpu.memory_space<vmem>>, vector<8x32xf32>
      %c0_108 = arith.constant 0 : index
      %c0_109 = arith.constant 0 : index
      %403 = vector.load %arg13[%c0_108, %c0_109] : memref<8x32xf32, #tpu.memory_space<vmem>>, vector<8x32xf32>
      tpu.vector_store %arg13[%c0_108, %c0_109], %402 {strides = array<i32>} : memref<8x32xf32, #tpu.memory_space<vmem>>, vector<8x32xf32>,
      %c0_110 = arith.constant 0 : index
      %c0_111 = arith.constant 0 : index
      %404 = vector.load %arg3[%c0_110, %c0_111] : memref<8x32xf32, #tpu.memory_space<vmem>>, vector<8x32xf32>
      %c0_112 = arith.constant 0 : index
      %c0_113 = arith.constant 0 : index
      %405 = vector.load %arg14[%c0_112, %c0_113] : memref<8x32xf32, #tpu.memory_space<vmem>>, vector<8x32xf32>
      tpu.vector_store %arg14[%c0_112, %c0_113], %404 {strides = array<i32>} : memref<8x32xf32, #tpu.memory_space<vmem>>, vector<8x32xf32>,
      %c0_114 = arith.constant 0 : index
      %c0_115 = arith.constant 0 : index
      %406 = vector.load %arg4[%c0_114, %c0_115] : memref<8x32xf32, #tpu.memory_space<vmem>>, vector<8x32xf32>
      %c0_116 = arith.constant 0 : index
      %c0_117 = arith.constant 0 : index
      %407 = vector.load %arg15[%c0_116, %c0_117] : memref<8x32xf32, #tpu.memory_space<vmem>>, vector<8x32xf32>
      tpu.vector_store %arg15[%c0_116, %c0_117], %406 {strides = array<i32>} : memref<8x32xf32, #tpu.memory_space<vmem>>, vector<8x32xf32>,
      %c0_118 = arith.constant 0 : index
      %c0_119 = arith.constant 0 : index
      %408 = vector.load %arg5[%c0_118, %c0_119] : memref<8x32xf32, #tpu.memory_space<vmem>>, vector<8x32xf32>
      %c0_120 = arith.constant 0 : index
      %c0_121 = arith.constant 0 : index
      %409 = vector.load %arg16[%c0_120, %c0_121] : memref<8x32xf32, #tpu.memory_space<vmem>>, vector<8x32xf32>
      tpu.vector_store %arg16[%c0_120, %c0_121], %408 {strides = array<i32>} : memref<8x32xf32, #tpu.memory_space<vmem>>, vector<8x32xf32>,
    } else {
    }
    %c0 = arith.constant 0 : index
    %c0_1 = arith.constant 0 : index
    %c0_2 = arith.constant 0 : index
    %3 = vector.load %arg1[%c0, %c0_1, %c0_2] : memref<8x8x3xf32, #tpu.memory_space<vmem>>, vector<8x8x3xf32>
    %4 = vector.shape_cast %3 : vector<8x8x3xf32> to vector<64x3xf32>
    %c0_3 = arith.constant 0 : index
    %c0_4 = arith.constant 0 : index
    %5 = vector.load %arg6[%c0_3, %c0_4] : memref<3x256xf32, #tpu.memory_space<vmem>>, vector<3x256xf32>
    %cst = arith.constant dense<0.000000e+00> : vector<64x256xf32>
    %6 = tpu.matmul %4, %5, %cst {dimension_numbers = #tpu.dot_dimension_numbers<[1], [0], [0], [1], [0, 0, 1, 1], [], []>} : vector<64x3xf32>, vector<3x256xf32>, vector<64x256xf32> -> vector<64x256xf32>
    %c0_5 = arith.constant 0 : index
    %c0_6 = arith.constant 0 : index
    %7 = vector.load %arg7[%c0_5, %c0_6] : memref<1x256xf32, #tpu.memory_space<vmem>>, vector<1x256xf32>
    %8 = vector.broadcast %7 : vector<1x256xf32> to vector<64x256xf32>
    %9 = arith.addf %6, %8 : vector<64x256xf32>
    %10 = vector.shape_cast %9 : vector<64x256xf32> to vector<8x8x256xf32>
    %c0_7 = arith.constant 0 : index
    %c0_8 = arith.constant 0 : index
    %c0_9 = arith.constant 0 : index
    %11 = vector.load %arg17[%c0_7, %c0_8, %c0_9] : memref<8x8x256xf32, #tpu.memory_space<vmem>>, vector<8x8x256xf32>
    tpu.vector_store %arg17[%c0_7, %c0_8, %c0_9], %10 {strides = array<i32>} : memref<8x8x256xf32, #tpu.memory_space<vmem>>, vector<8x8x256xf32>,
    %c0_10 = arith.constant 0 : index
    %c0_11 = arith.constant 0 : index
    %12 = vector.load %arg8[%c0_10, %c0_11] : memref<64x256xf32, #tpu.memory_space<vmem>>, vector<64x256xf32>
    %c0_12 = arith.constant 0 : index
    %c0_13 = arith.constant 0 : index
    %13 = vector.load %arg9[%c0_12, %c0_13] : memref<32x128xf32, #tpu.memory_space<vmem>>, vector<32x128xf32>
    %c0_14 = arith.constant 0 : index
    %c0_15 = arith.constant 0 : index
    %14 = vector.load %arg13[%c0_14, %c0_15] : memref<8x32xf32, #tpu.memory_space<vmem>>, vector<8x32xf32>
    %c0_16 = arith.constant 0 : index
    %c0_17 = arith.constant 0 : index
    %15 = vector.load %arg15[%c0_16, %c0_17] : memref<8x32xf32, #tpu.memory_space<vmem>>, vector<8x32xf32>
    %16 = tpu.concatenate %14, %15 in 1 : vector<8x32xf32>, vector<8x32xf32> -> vector<8x64xf32>
    %c0_18 = arith.constant 0 : index
    %c0_19 = arith.constant 0 : index
    %17 = vector.load %arg14[%c0_18, %c0_19] : memref<8x32xf32, #tpu.memory_space<vmem>>, vector<8x32xf32>
    %c0_20 = arith.constant 0 : index
    %c0_21 = arith.constant 0 : index
    %18 = vector.load %arg16[%c0_20, %c0_21] : memref<8x32xf32, #tpu.memory_space<vmem>>, vector<8x32xf32>
    %c0_i32_22 = arith.constant 0 : i32
    %cst_23 = arith.constant dense<0.000000e+00> : vector<8x256xf32>
    %19 = tpu.matmul %16, %12, %cst_23 {dimension_numbers = #tpu.dot_dimension_numbers<[1], [0], [0], [1], [0, 0, 1, 1], [], []>} : vector<8x64xf32>, vector<64x256xf32>, vector<8x256xf32> -> vector<8x256xf32>
    %20 = arith.index_cast %c0_i32_22 : i32 to index
    %c0_24 = arith.constant 0 : index
    %c0_25 = arith.constant 0 : index
    %21 = vector.load %arg17[%20, %c0_24, %c0_25] : memref<8x8x256xf32, #tpu.memory_space<vmem>>, vector<1x8x256xf32>
    %22 = vector.shape_cast %21 : vector<1x8x256xf32> to vector<8x256xf32>
    %23 = arith.addf %22, %19 : vector<8x256xf32>
    %24 = vector.extract_strided_slice %23 {offsets = [0, 0], sizes = [8, 128], strides = [1, 1]} : vector<8x256xf32> to vector<8x128xf32>
    %25 = vector.extract_strided_slice %24 {offsets = [0, 0], sizes = [8, 96], strides = [1, 1]} : vector<8x128xf32> to vector<8x96xf32>
    %26 = arith.negf %25 : vector<8x96xf32>
    %27 = math.exp %26 : vector<8x96xf32>
    %cst_26 = arith.constant 1.000000e+00 : f32
    %28 = vector.broadcast %cst_26 : f32 to vector<8x96xf32>
    %29 = arith.addf %28, %27 : vector<8x96xf32>
    %30 = arith.divf %28, %29 : vector<8x96xf32>
    %31 = vector.extract_strided_slice %30 {offsets = [0, 0], sizes = [8, 32], strides = [1, 1]} : vector<8x96xf32> to vector<8x32xf32>
    %32 = vector.extract_strided_slice %30 {offsets = [0, 32], sizes = [8, 32], strides = [1, 1]} : vector<8x96xf32> to vector<8x32xf32>
    %33 = vector.extract_strided_slice %30 {offsets = [0, 64], sizes = [8, 32], strides = [1, 1]} : vector<8x96xf32> to vector<8x32xf32>
    %34 = vector.extract_strided_slice %24 {offsets = [0, 96], sizes = [8, 32], strides = [1, 1]} : vector<8x128xf32> to vector<8x32xf32>
    %35 = math.tanh %34 : vector<8x32xf32>
    %36 = arith.mulf %32, %17 : vector<8x32xf32>
    %37 = arith.mulf %31, %35 : vector<8x32xf32>
    %38 = arith.addf %36, %37 : vector<8x32xf32>
    %39 = math.tanh %38 : vector<8x32xf32>
    %40 = arith.mulf %33, %39 : vector<8x32xf32>
    %41 = vector.extract_strided_slice %23 {offsets = [0, 128], sizes = [8, 128], strides = [1, 1]} : vector<8x256xf32> to vector<8x128xf32>
    %cst_27 = arith.constant dense<0.000000e+00> : vector<8x128xf32>
    %42 = tpu.matmul %40, %13, %cst_27 {dimension_numbers = #tpu.dot_dimension_numbers<[1], [0], [0], [1], [0, 0, 1, 1], [], []>} : vector<8x32xf32>, vector<32x128xf32>, vector<8x128xf32> -> vector<8x128xf32>
    %43 = arith.addf %41, %42 : vector<8x128xf32>
    %44 = vector.extract_strided_slice %43 {offsets = [0, 0], sizes = [8, 96], strides = [1, 1]} : vector<8x128xf32> to vector<8x96xf32>
    %45 = arith.negf %44 : vector<8x96xf32>
    %46 = math.exp %45 : vector<8x96xf32>
    %cst_28 = arith.constant 1.000000e+00 : f32
    %47 = vector.broadcast %cst_28 : f32 to vector<8x96xf32>
    %48 = arith.addf %47, %46 : vector<8x96xf32>
    %49 = arith.divf %47, %48 : vector<8x96xf32>
    %50 = vector.extract_strided_slice %49 {offsets = [0, 0], sizes = [8, 32], strides = [1, 1]} : vector<8x96xf32> to vector<8x32xf32>
    %51 = vector.extract_strided_slice %49 {offsets = [0, 32], sizes = [8, 32], strides = [1, 1]} : vector<8x96xf32> to vector<8x32xf32>
    %52 = vector.extract_strided_slice %49 {offsets = [0, 64], sizes = [8, 32], strides = [1, 1]} : vector<8x96xf32> to vector<8x32xf32>
    %53 = vector.extract_strided_slice %43 {offsets = [0, 96], sizes = [8, 32], strides = [1, 1]} : vector<8x128xf32> to vector<8x32xf32>
    %54 = math.tanh %53 : vector<8x32xf32>
    %55 = arith.mulf %51, %18 : vector<8x32xf32>
    %56 = arith.mulf %50, %54 : vector<8x32xf32>
    %57 = arith.addf %55, %56 : vector<8x32xf32>
    %58 = math.tanh %57 : vector<8x32xf32>
    %59 = arith.mulf %52, %58 : vector<8x32xf32>
    %60 = tpu.concatenate %40, %59 in 1 : vector<8x32xf32>, vector<8x32xf32> -> vector<8x64xf32>
    %61 = arith.index_cast %c0_i32_22 : i32 to index
    %c0_29 = arith.constant 0 : index
    %c0_30 = arith.constant 0 : index
    %62 = vector.load %arg18[%61, %c0_29, %c0_30] : memref<8x8x64xf32, #tpu.memory_space<vmem>>, vector<1x8x64xf32>
    %63 = vector.shape_cast %62 : vector<1x8x64xf32> to vector<8x64xf32>
    %64 = vector.shape_cast %60 : vector<8x64xf32> to vector<1x8x64xf32>
    tpu.vector_store %arg18[%61, %c0_29, %c0_30], %64 {strides = array<i32>} : memref<8x8x64xf32, #tpu.memory_space<vmem>>, vector<1x8x64xf32>,
    %c1_i32 = arith.constant 1 : i32
    %cst_31 = arith.constant dense<0.000000e+00> : vector<8x256xf32>
    %65 = tpu.matmul %60, %12, %cst_31 {dimension_numbers = #tpu.dot_dimension_numbers<[1], [0], [0], [1], [0, 0, 1, 1], [], []>} : vector<8x64xf32>, vector<64x256xf32>, vector<8x256xf32> -> vector<8x256xf32>
    %66 = arith.index_cast %c1_i32 : i32 to index
    %c0_32 = arith.constant 0 : index
    %c0_33 = arith.constant 0 : index
    %67 = vector.load %arg17[%66, %c0_32, %c0_33] : memref<8x8x256xf32, #tpu.memory_space<vmem>>, vector<1x8x256xf32>
    %68 = vector.shape_cast %67 : vector<1x8x256xf32> to vector<8x256xf32>
    %69 = arith.addf %68, %65 : vector<8x256xf32>
    %70 = vector.extract_strided_slice %69 {offsets = [0, 0], sizes = [8, 128], strides = [1, 1]} : vector<8x256xf32> to vector<8x128xf32>
    %71 = vector.extract_strided_slice %70 {offsets = [0, 0], sizes = [8, 96], strides = [1, 1]} : vector<8x128xf32> to vector<8x96xf32>
    %72 = arith.negf %71 : vector<8x96xf32>
    %73 = math.exp %72 : vector<8x96xf32>
    %cst_34 = arith.constant 1.000000e+00 : f32
    %74 = vector.broadcast %cst_34 : f32 to vector<8x96xf32>
    %75 = arith.addf %74, %73 : vector<8x96xf32>
    %76 = arith.divf %74, %75 : vector<8x96xf32>
    %77 = vector.extract_strided_slice %76 {offsets = [0, 0], sizes = [8, 32], strides = [1, 1]} : vector<8x96xf32> to vector<8x32xf32>
    %78 = vector.extract_strided_slice %76 {offsets = [0, 32], sizes = [8, 32], strides = [1, 1]} : vector<8x96xf32> to vector<8x32xf32>
    %79 = vector.extract_strided_slice %76 {offsets = [0, 64], sizes = [8, 32], strides = [1, 1]} : vector<8x96xf32> to vector<8x32xf32>
    %80 = vector.extract_strided_slice %70 {offsets = [0, 96], sizes = [8, 32], strides = [1, 1]} : vector<8x128xf32> to vector<8x32xf32>
    %81 = math.tanh %80 : vector<8x32xf32>
    %82 = arith.mulf %78, %38 : vector<8x32xf32>
    %83 = arith.mulf %77, %81 : vector<8x32xf32>
    %84 = arith.addf %82, %83 : vector<8x32xf32>
    %85 = math.tanh %84 : vector<8x32xf32>
    %86 = arith.mulf %79, %85 : vector<8x32xf32>
    %87 = vector.extract_strided_slice %69 {offsets = [0, 128], sizes = [8, 128], strides = [1, 1]} : vector<8x256xf32> to vector<8x128xf32>
    %cst_35 = arith.constant dense<0.000000e+00> : vector<8x128xf32>
    %88 = tpu.matmul %86, %13, %cst_35 {dimension_numbers = #tpu.dot_dimension_numbers<[1], [0], [0], [1], [0, 0, 1, 1], [], []>} : vector<8x32xf32>, vector<32x128xf32>, vector<8x128xf32> -> vector<8x128xf32>
    %89 = arith.addf %87, %88 : vector<8x128xf32>
    %90 = vector.extract_strided_slice %89 {offsets = [0, 0], sizes = [8, 96], strides = [1, 1]} : vector<8x128xf32> to vector<8x96xf32>
    %91 = arith.negf %90 : vector<8x96xf32>
    %92 = math.exp %91 : vector<8x96xf32>
    %cst_36 = arith.constant 1.000000e+00 : f32
    %93 = vector.broadcast %cst_36 : f32 to vector<8x96xf32>
    %94 = arith.addf %93, %92 : vector<8x96xf32>
    %95 = arith.divf %93, %94 : vector<8x96xf32>
    %96 = vector.extract_strided_slice %95 {offsets = [0, 0], sizes = [8, 32], strides = [1, 1]} : vector<8x96xf32> to vector<8x32xf32>
    %97 = vector.extract_strided_slice %95 {offsets = [0, 32], sizes = [8, 32], strides = [1, 1]} : vector<8x96xf32> to vector<8x32xf32>
    %98 = vector.extract_strided_slice %95 {offsets = [0, 64], sizes = [8, 32], strides = [1, 1]} : vector<8x96xf32> to vector<8x32xf32>
    %99 = vector.extract_strided_slice %89 {offsets = [0, 96], sizes = [8, 32], strides = [1, 1]} : vector<8x128xf32> to vector<8x32xf32>
    %100 = math.tanh %99 : vector<8x32xf32>
    %101 = arith.mulf %97, %57 : vector<8x32xf32>
    %102 = arith.mulf %96, %100 : vector<8x32xf32>
    %103 = arith.addf %101, %102 : vector<8x32xf32>
    %104 = math.tanh %103 : vector<8x32xf32>
    %105 = arith.mulf %98, %104 : vector<8x32xf32>
    %106 = tpu.concatenate %86, %105 in 1 : vector<8x32xf32>, vector<8x32xf32> -> vector<8x64xf32>
    %107 = arith.index_cast %c1_i32 : i32 to index
    %c0_37 = arith.constant 0 : index
    %c0_38 = arith.constant 0 : index
    %108 = vector.load %arg18[%107, %c0_37, %c0_38] : memref<8x8x64xf32, #tpu.memory_space<vmem>>, vector<1x8x64xf32>
    %109 = vector.shape_cast %108 : vector<1x8x64xf32> to vector<8x64xf32>
    %110 = vector.shape_cast %106 : vector<8x64xf32> to vector<1x8x64xf32>
    tpu.vector_store %arg18[%107, %c0_37, %c0_38], %110 {strides = array<i32>} : memref<8x8x64xf32, #tpu.memory_space<vmem>>, vector<1x8x64xf32>,
    %c2_i32 = arith.constant 2 : i32
    %cst_39 = arith.constant dense<0.000000e+00> : vector<8x256xf32>
    %111 = tpu.matmul %106, %12, %cst_39 {dimension_numbers = #tpu.dot_dimension_numbers<[1], [0], [0], [1], [0, 0, 1, 1], [], []>} : vector<8x64xf32>, vector<64x256xf32>, vector<8x256xf32> -> vector<8x256xf32>
    %112 = arith.index_cast %c2_i32 : i32 to index
    %c0_40 = arith.constant 0 : index
    %c0_41 = arith.constant 0 : index
    %113 = vector.load %arg17[%112, %c0_40, %c0_41] : memref<8x8x256xf32, #tpu.memory_space<vmem>>, vector<1x8x256xf32>
    %114 = vector.shape_cast %113 : vector<1x8x256xf32> to vector<8x256xf32>
    %115 = arith.addf %114, %111 : vector<8x256xf32>
    %116 = vector.extract_strided_slice %115 {offsets = [0, 0], sizes = [8, 128], strides = [1, 1]} : vector<8x256xf32> to vector<8x128xf32>
    %117 = vector.extract_strided_slice %116 {offsets = [0, 0], sizes = [8, 96], strides = [1, 1]} : vector<8x128xf32> to vector<8x96xf32>
    %118 = arith.negf %117 : vector<8x96xf32>
    %119 = math.exp %118 : vector<8x96xf32>
    %cst_42 = arith.constant 1.000000e+00 : f32
    %120 = vector.broadcast %cst_42 : f32 to vector<8x96xf32>
    %121 = arith.addf %120, %119 : vector<8x96xf32>
    %122 = arith.divf %120, %121 : vector<8x96xf32>
    %123 = vector.extract_strided_slice %122 {offsets = [0, 0], sizes = [8, 32], strides = [1, 1]} : vector<8x96xf32> to vector<8x32xf32>
    %124 = vector.extract_strided_slice %122 {offsets = [0, 32], sizes = [8, 32], strides = [1, 1]} : vector<8x96xf32> to vector<8x32xf32>
    %125 = vector.extract_strided_slice %122 {offsets = [0, 64], sizes = [8, 32], strides = [1, 1]} : vector<8x96xf32> to vector<8x32xf32>
    %126 = vector.extract_strided_slice %116 {offsets = [0, 96], sizes = [8, 32], strides = [1, 1]} : vector<8x128xf32> to vector<8x32xf32>
    %127 = math.tanh %126 : vector<8x32xf32>
    %128 = arith.mulf %124, %84 : vector<8x32xf32>
    %129 = arith.mulf %123, %127 : vector<8x32xf32>
    %130 = arith.addf %128, %129 : vector<8x32xf32>
    %131 = math.tanh %130 : vector<8x32xf32>
    %132 = arith.mulf %125, %131 : vector<8x32xf32>
    %133 = vector.extract_strided_slice %115 {offsets = [0, 128], sizes = [8, 128], strides = [1, 1]} : vector<8x256xf32> to vector<8x128xf32>
    %cst_43 = arith.constant dense<0.000000e+00> : vector<8x128xf32>
    %134 = tpu.matmul %132, %13, %cst_43 {dimension_numbers = #tpu.dot_dimension_numbers<[1], [0], [0], [1], [0, 0, 1, 1], [], []>} : vector<8x32xf32>, vector<32x128xf32>, vector<8x128xf32> -> vector<8x128xf32>
    %135 = arith.addf %133, %134 : vector<8x128xf32>
    %136 = vector.extract_strided_slice %135 {offsets = [0, 0], sizes = [8, 96], strides = [1, 1]} : vector<8x128xf32> to vector<8x96xf32>
    %137 = arith.negf %136 : vector<8x96xf32>
    %138 = math.exp %137 : vector<8x96xf32>
    %cst_44 = arith.constant 1.000000e+00 : f32
    %139 = vector.broadcast %cst_44 : f32 to vector<8x96xf32>
    %140 = arith.addf %139, %138 : vector<8x96xf32>
    %141 = arith.divf %139, %140 : vector<8x96xf32>
    %142 = vector.extract_strided_slice %141 {offsets = [0, 0], sizes = [8, 32], strides = [1, 1]} : vector<8x96xf32> to vector<8x32xf32>
    %143 = vector.extract_strided_slice %141 {offsets = [0, 32], sizes = [8, 32], strides = [1, 1]} : vector<8x96xf32> to vector<8x32xf32>
    %144 = vector.extract_strided_slice %141 {offsets = [0, 64], sizes = [8, 32], strides = [1, 1]} : vector<8x96xf32> to vector<8x32xf32>
    %145 = vector.extract_strided_slice %135 {offsets = [0, 96], sizes = [8, 32], strides = [1, 1]} : vector<8x128xf32> to vector<8x32xf32>
    %146 = math.tanh %145 : vector<8x32xf32>
    %147 = arith.mulf %143, %103 : vector<8x32xf32>
    %148 = arith.mulf %142, %146 : vector<8x32xf32>
    %149 = arith.addf %147, %148 : vector<8x32xf32>
    %150 = math.tanh %149 : vector<8x32xf32>
    %151 = arith.mulf %144, %150 : vector<8x32xf32>
    %152 = tpu.concatenate %132, %151 in 1 : vector<8x32xf32>, vector<8x32xf32> -> vector<8x64xf32>
    %153 = arith.index_cast %c2_i32 : i32 to index
    %c0_45 = arith.constant 0 : index
    %c0_46 = arith.constant 0 : index
    %154 = vector.load %arg18[%153, %c0_45, %c0_46] : memref<8x8x64xf32, #tpu.memory_space<vmem>>, vector<1x8x64xf32>
    %155 = vector.shape_cast %154 : vector<1x8x64xf32> to vector<8x64xf32>
    %156 = vector.shape_cast %152 : vector<8x64xf32> to vector<1x8x64xf32>
    tpu.vector_store %arg18[%153, %c0_45, %c0_46], %156 {strides = array<i32>} : memref<8x8x64xf32, #tpu.memory_space<vmem>>, vector<1x8x64xf32>,
    %c3_i32 = arith.constant 3 : i32
    %cst_47 = arith.constant dense<0.000000e+00> : vector<8x256xf32>
    %157 = tpu.matmul %152, %12, %cst_47 {dimension_numbers = #tpu.dot_dimension_numbers<[1], [0], [0], [1], [0, 0, 1, 1], [], []>} : vector<8x64xf32>, vector<64x256xf32>, vector<8x256xf32> -> vector<8x256xf32>
    %158 = arith.index_cast %c3_i32 : i32 to index
    %c0_48 = arith.constant 0 : index
    %c0_49 = arith.constant 0 : index
    %159 = vector.load %arg17[%158, %c0_48, %c0_49] : memref<8x8x256xf32, #tpu.memory_space<vmem>>, vector<1x8x256xf32>
    %160 = vector.shape_cast %159 : vector<1x8x256xf32> to vector<8x256xf32>
    %161 = arith.addf %160, %157 : vector<8x256xf32>
    %162 = vector.extract_strided_slice %161 {offsets = [0, 0], sizes = [8, 128], strides = [1, 1]} : vector<8x256xf32> to vector<8x128xf32>
    %163 = vector.extract_strided_slice %162 {offsets = [0, 0], sizes = [8, 96], strides = [1, 1]} : vector<8x128xf32> to vector<8x96xf32>
    %164 = arith.negf %163 : vector<8x96xf32>
    %165 = math.exp %164 : vector<8x96xf32>
    %cst_50 = arith.constant 1.000000e+00 : f32
    %166 = vector.broadcast %cst_50 : f32 to vector<8x96xf32>
    %167 = arith.addf %166, %165 : vector<8x96xf32>
    %168 = arith.divf %166, %167 : vector<8x96xf32>
    %169 = vector.extract_strided_slice %168 {offsets = [0, 0], sizes = [8, 32], strides = [1, 1]} : vector<8x96xf32> to vector<8x32xf32>
    %170 = vector.extract_strided_slice %168 {offsets = [0, 32], sizes = [8, 32], strides = [1, 1]} : vector<8x96xf32> to vector<8x32xf32>
    %171 = vector.extract_strided_slice %168 {offsets = [0, 64], sizes = [8, 32], strides = [1, 1]} : vector<8x96xf32> to vector<8x32xf32>
    %172 = vector.extract_strided_slice %162 {offsets = [0, 96], sizes = [8, 32], strides = [1, 1]} : vector<8x128xf32> to vector<8x32xf32>
    %173 = math.tanh %172 : vector<8x32xf32>
    %174 = arith.mulf %170, %130 : vector<8x32xf32>
    %175 = arith.mulf %169, %173 : vector<8x32xf32>
    %176 = arith.addf %174, %175 : vector<8x32xf32>
    %177 = math.tanh %176 : vector<8x32xf32>
    %178 = arith.mulf %171, %177 : vector<8x32xf32>
    %179 = vector.extract_strided_slice %161 {offsets = [0, 128], sizes = [8, 128], strides = [1, 1]} : vector<8x256xf32> to vector<8x128xf32>
    %cst_51 = arith.constant dense<0.000000e+00> : vector<8x128xf32>
    %180 = tpu.matmul %178, %13, %cst_51 {dimension_numbers = #tpu.dot_dimension_numbers<[1], [0], [0], [1], [0, 0, 1, 1], [], []>} : vector<8x32xf32>, vector<32x128xf32>, vector<8x128xf32> -> vector<8x128xf32>
    %181 = arith.addf %179, %180 : vector<8x128xf32>
    %182 = vector.extract_strided_slice %181 {offsets = [0, 0], sizes = [8, 96], strides = [1, 1]} : vector<8x128xf32> to vector<8x96xf32>
    %183 = arith.negf %182 : vector<8x96xf32>
    %184 = math.exp %183 : vector<8x96xf32>
    %cst_52 = arith.constant 1.000000e+00 : f32
    %185 = vector.broadcast %cst_52 : f32 to vector<8x96xf32>
    %186 = arith.addf %185, %184 : vector<8x96xf32>
    %187 = arith.divf %185, %186 : vector<8x96xf32>
    %188 = vector.extract_strided_slice %187 {offsets = [0, 0], sizes = [8, 32], strides = [1, 1]} : vector<8x96xf32> to vector<8x32xf32>
    %189 = vector.extract_strided_slice %187 {offsets = [0, 32], sizes = [8, 32], strides = [1, 1]} : vector<8x96xf32> to vector<8x32xf32>
    %190 = vector.extract_strided_slice %187 {offsets = [0, 64], sizes = [8, 32], strides = [1, 1]} : vector<8x96xf32> to vector<8x32xf32>
    %191 = vector.extract_strided_slice %181 {offsets = [0, 96], sizes = [8, 32], strides = [1, 1]} : vector<8x128xf32> to vector<8x32xf32>
    %192 = math.tanh %191 : vector<8x32xf32>
    %193 = arith.mulf %189, %149 : vector<8x32xf32>
    %194 = arith.mulf %188, %192 : vector<8x32xf32>
    %195 = arith.addf %193, %194 : vector<8x32xf32>
    %196 = math.tanh %195 : vector<8x32xf32>
    %197 = arith.mulf %190, %196 : vector<8x32xf32>
    %198 = tpu.concatenate %178, %197 in 1 : vector<8x32xf32>, vector<8x32xf32> -> vector<8x64xf32>
    %199 = arith.index_cast %c3_i32 : i32 to index
    %c0_53 = arith.constant 0 : index
    %c0_54 = arith.constant 0 : index
    %200 = vector.load %arg18[%199, %c0_53, %c0_54] : memref<8x8x64xf32, #tpu.memory_space<vmem>>, vector<1x8x64xf32>
    %201 = vector.shape_cast %200 : vector<1x8x64xf32> to vector<8x64xf32>
    %202 = vector.shape_cast %198 : vector<8x64xf32> to vector<1x8x64xf32>
    tpu.vector_store %arg18[%199, %c0_53, %c0_54], %202 {strides = array<i32>} : memref<8x8x64xf32, #tpu.memory_space<vmem>>, vector<1x8x64xf32>,
    %c4_i32 = arith.constant 4 : i32
    %cst_55 = arith.constant dense<0.000000e+00> : vector<8x256xf32>
    %203 = tpu.matmul %198, %12, %cst_55 {dimension_numbers = #tpu.dot_dimension_numbers<[1], [0], [0], [1], [0, 0, 1, 1], [], []>} : vector<8x64xf32>, vector<64x256xf32>, vector<8x256xf32> -> vector<8x256xf32>
    %204 = arith.index_cast %c4_i32 : i32 to index
    %c0_56 = arith.constant 0 : index
    %c0_57 = arith.constant 0 : index
    %205 = vector.load %arg17[%204, %c0_56, %c0_57] : memref<8x8x256xf32, #tpu.memory_space<vmem>>, vector<1x8x256xf32>
    %206 = vector.shape_cast %205 : vector<1x8x256xf32> to vector<8x256xf32>
    %207 = arith.addf %206, %203 : vector<8x256xf32>
    %208 = vector.extract_strided_slice %207 {offsets = [0, 0], sizes = [8, 128], strides = [1, 1]} : vector<8x256xf32> to vector<8x128xf32>
    %209 = vector.extract_strided_slice %208 {offsets = [0, 0], sizes = [8, 96], strides = [1, 1]} : vector<8x128xf32> to vector<8x96xf32>
    %210 = arith.negf %209 : vector<8x96xf32>
    %211 = math.exp %210 : vector<8x96xf32>
    %cst_58 = arith.constant 1.000000e+00 : f32
    %212 = vector.broadcast %cst_58 : f32 to vector<8x96xf32>
    %213 = arith.addf %212, %211 : vector<8x96xf32>
    %214 = arith.divf %212, %213 : vector<8x96xf32>
    %215 = vector.extract_strided_slice %214 {offsets = [0, 0], sizes = [8, 32], strides = [1, 1]} : vector<8x96xf32> to vector<8x32xf32>
    %216 = vector.extract_strided_slice %214 {offsets = [0, 32], sizes = [8, 32], strides = [1, 1]} : vector<8x96xf32> to vector<8x32xf32>
    %217 = vector.extract_strided_slice %214 {offsets = [0, 64], sizes = [8, 32], strides = [1, 1]} : vector<8x96xf32> to vector<8x32xf32>
    %218 = vector.extract_strided_slice %208 {offsets = [0, 96], sizes = [8, 32], strides = [1, 1]} : vector<8x128xf32> to vector<8x32xf32>
    %219 = math.tanh %218 : vector<8x32xf32>
    %220 = arith.mulf %216, %176 : vector<8x32xf32>
    %221 = arith.mulf %215, %219 : vector<8x32xf32>
    %222 = arith.addf %220, %221 : vector<8x32xf32>
    %223 = math.tanh %222 : vector<8x32xf32>
    %224 = arith.mulf %217, %223 : vector<8x32xf32>
    %225 = vector.extract_strided_slice %207 {offsets = [0, 128], sizes = [8, 128], strides = [1, 1]} : vector<8x256xf32> to vector<8x128xf32>
    %cst_59 = arith.constant dense<0.000000e+00> : vector<8x128xf32>
    %226 = tpu.matmul %224, %13, %cst_59 {dimension_numbers = #tpu.dot_dimension_numbers<[1], [0], [0], [1], [0, 0, 1, 1], [], []>} : vector<8x32xf32>, vector<32x128xf32>, vector<8x128xf32> -> vector<8x128xf32>
    %227 = arith.addf %225, %226 : vector<8x128xf32>
    %228 = vector.extract_strided_slice %227 {offsets = [0, 0], sizes = [8, 96], strides = [1, 1]} : vector<8x128xf32> to vector<8x96xf32>
    %229 = arith.negf %228 : vector<8x96xf32>
    %230 = math.exp %229 : vector<8x96xf32>
    %cst_60 = arith.constant 1.000000e+00 : f32
    %231 = vector.broadcast %cst_60 : f32 to vector<8x96xf32>
    %232 = arith.addf %231, %230 : vector<8x96xf32>
    %233 = arith.divf %231, %232 : vector<8x96xf32>
    %234 = vector.extract_strided_slice %233 {offsets = [0, 0], sizes = [8, 32], strides = [1, 1]} : vector<8x96xf32> to vector<8x32xf32>
    %235 = vector.extract_strided_slice %233 {offsets = [0, 32], sizes = [8, 32], strides = [1, 1]} : vector<8x96xf32> to vector<8x32xf32>
    %236 = vector.extract_strided_slice %233 {offsets = [0, 64], sizes = [8, 32], strides = [1, 1]} : vector<8x96xf32> to vector<8x32xf32>
    %237 = vector.extract_strided_slice %227 {offsets = [0, 96], sizes = [8, 32], strides = [1, 1]} : vector<8x128xf32> to vector<8x32xf32>
    %238 = math.tanh %237 : vector<8x32xf32>
    %239 = arith.mulf %235, %195 : vector<8x32xf32>
    %240 = arith.mulf %234, %238 : vector<8x32xf32>
    %241 = arith.addf %239, %240 : vector<8x32xf32>
    %242 = math.tanh %241 : vector<8x32xf32>
    %243 = arith.mulf %236, %242 : vector<8x32xf32>
    %244 = tpu.concatenate %224, %243 in 1 : vector<8x32xf32>, vector<8x32xf32> -> vector<8x64xf32>
    %245 = arith.index_cast %c4_i32 : i32 to index
    %c0_61 = arith.constant 0 : index
    %c0_62 = arith.constant 0 : index
    %246 = vector.load %arg18[%245, %c0_61, %c0_62] : memref<8x8x64xf32, #tpu.memory_space<vmem>>, vector<1x8x64xf32>
    %247 = vector.shape_cast %246 : vector<1x8x64xf32> to vector<8x64xf32>
    %248 = vector.shape_cast %244 : vector<8x64xf32> to vector<1x8x64xf32>
    tpu.vector_store %arg18[%245, %c0_61, %c0_62], %248 {strides = array<i32>} : memref<8x8x64xf32, #tpu.memory_space<vmem>>, vector<1x8x64xf32>,
    %c5_i32 = arith.constant 5 : i32
    %cst_63 = arith.constant dense<0.000000e+00> : vector<8x256xf32>
    %249 = tpu.matmul %244, %12, %cst_63 {dimension_numbers = #tpu.dot_dimension_numbers<[1], [0], [0], [1], [0, 0, 1, 1], [], []>} : vector<8x64xf32>, vector<64x256xf32>, vector<8x256xf32> -> vector<8x256xf32>
    %250 = arith.index_cast %c5_i32 : i32 to index
    %c0_64 = arith.constant 0 : index
    %c0_65 = arith.constant 0 : index
    %251 = vector.load %arg17[%250, %c0_64, %c0_65] : memref<8x8x256xf32, #tpu.memory_space<vmem>>, vector<1x8x256xf32>
    %252 = vector.shape_cast %251 : vector<1x8x256xf32> to vector<8x256xf32>
    %253 = arith.addf %252, %249 : vector<8x256xf32>
    %254 = vector.extract_strided_slice %253 {offsets = [0, 0], sizes = [8, 128], strides = [1, 1]} : vector<8x256xf32> to vector<8x128xf32>
    %255 = vector.extract_strided_slice %254 {offsets = [0, 0], sizes = [8, 96], strides = [1, 1]} : vector<8x128xf32> to vector<8x96xf32>
    %256 = arith.negf %255 : vector<8x96xf32>
    %257 = math.exp %256 : vector<8x96xf32>
    %cst_66 = arith.constant 1.000000e+00 : f32
    %258 = vector.broadcast %cst_66 : f32 to vector<8x96xf32>
    %259 = arith.addf %258, %257 : vector<8x96xf32>
    %260 = arith.divf %258, %259 : vector<8x96xf32>
    %261 = vector.extract_strided_slice %260 {offsets = [0, 0], sizes = [8, 32], strides = [1, 1]} : vector<8x96xf32> to vector<8x32xf32>
    %262 = vector.extract_strided_slice %260 {offsets = [0, 32], sizes = [8, 32], strides = [1, 1]} : vector<8x96xf32> to vector<8x32xf32>
    %263 = vector.extract_strided_slice %260 {offsets = [0, 64], sizes = [8, 32], strides = [1, 1]} : vector<8x96xf32> to vector<8x32xf32>
    %264 = vector.extract_strided_slice %254 {offsets = [0, 96], sizes = [8, 32], strides = [1, 1]} : vector<8x128xf32> to vector<8x32xf32>
    %265 = math.tanh %264 : vector<8x32xf32>
    %266 = arith.mulf %262, %222 : vector<8x32xf32>
    %267 = arith.mulf %261, %265 : vector<8x32xf32>
    %268 = arith.addf %266, %267 : vector<8x32xf32>
    %269 = math.tanh %268 : vector<8x32xf32>
    %270 = arith.mulf %263, %269 : vector<8x32xf32>
    %271 = vector.extract_strided_slice %253 {offsets = [0, 128], sizes = [8, 128], strides = [1, 1]} : vector<8x256xf32> to vector<8x128xf32>
    %cst_67 = arith.constant dense<0.000000e+00> : vector<8x128xf32>
    %272 = tpu.matmul %270, %13, %cst_67 {dimension_numbers = #tpu.dot_dimension_numbers<[1], [0], [0], [1], [0, 0, 1, 1], [], []>} : vector<8x32xf32>, vector<32x128xf32>, vector<8x128xf32> -> vector<8x128xf32>
    %273 = arith.addf %271, %272 : vector<8x128xf32>
    %274 = vector.extract_strided_slice %273 {offsets = [0, 0], sizes = [8, 96], strides = [1, 1]} : vector<8x128xf32> to vector<8x96xf32>
    %275 = arith.negf %274 : vector<8x96xf32>
    %276 = math.exp %275 : vector<8x96xf32>
    %cst_68 = arith.constant 1.000000e+00 : f32
    %277 = vector.broadcast %cst_68 : f32 to vector<8x96xf32>
    %278 = arith.addf %277, %276 : vector<8x96xf32>
    %279 = arith.divf %277, %278 : vector<8x96xf32>
    %280 = vector.extract_strided_slice %279 {offsets = [0, 0], sizes = [8, 32], strides = [1, 1]} : vector<8x96xf32> to vector<8x32xf32>
    %281 = vector.extract_strided_slice %279 {offsets = [0, 32], sizes = [8, 32], strides = [1, 1]} : vector<8x96xf32> to vector<8x32xf32>
    %282 = vector.extract_strided_slice %279 {offsets = [0, 64], sizes = [8, 32], strides = [1, 1]} : vector<8x96xf32> to vector<8x32xf32>
    %283 = vector.extract_strided_slice %273 {offsets = [0, 96], sizes = [8, 32], strides = [1, 1]} : vector<8x128xf32> to vector<8x32xf32>
    %284 = math.tanh %283 : vector<8x32xf32>
    %285 = arith.mulf %281, %241 : vector<8x32xf32>
    %286 = arith.mulf %280, %284 : vector<8x32xf32>
    %287 = arith.addf %285, %286 : vector<8x32xf32>
    %288 = math.tanh %287 : vector<8x32xf32>
    %289 = arith.mulf %282, %288 : vector<8x32xf32>
    %290 = tpu.concatenate %270, %289 in 1 : vector<8x32xf32>, vector<8x32xf32> -> vector<8x64xf32>
    %291 = arith.index_cast %c5_i32 : i32 to index
    %c0_69 = arith.constant 0 : index
    %c0_70 = arith.constant 0 : index
    %292 = vector.load %arg18[%291, %c0_69, %c0_70] : memref<8x8x64xf32, #tpu.memory_space<vmem>>, vector<1x8x64xf32>
    %293 = vector.shape_cast %292 : vector<1x8x64xf32> to vector<8x64xf32>
    %294 = vector.shape_cast %290 : vector<8x64xf32> to vector<1x8x64xf32>
    tpu.vector_store %arg18[%291, %c0_69, %c0_70], %294 {strides = array<i32>} : memref<8x8x64xf32, #tpu.memory_space<vmem>>, vector<1x8x64xf32>,
    %c6_i32 = arith.constant 6 : i32
    %cst_71 = arith.constant dense<0.000000e+00> : vector<8x256xf32>
    %295 = tpu.matmul %290, %12, %cst_71 {dimension_numbers = #tpu.dot_dimension_numbers<[1], [0], [0], [1], [0, 0, 1, 1], [], []>} : vector<8x64xf32>, vector<64x256xf32>, vector<8x256xf32> -> vector<8x256xf32>
    %296 = arith.index_cast %c6_i32 : i32 to index
    %c0_72 = arith.constant 0 : index
    %c0_73 = arith.constant 0 : index
    %297 = vector.load %arg17[%296, %c0_72, %c0_73] : memref<8x8x256xf32, #tpu.memory_space<vmem>>, vector<1x8x256xf32>
    %298 = vector.shape_cast %297 : vector<1x8x256xf32> to vector<8x256xf32>
    %299 = arith.addf %298, %295 : vector<8x256xf32>
    %300 = vector.extract_strided_slice %299 {offsets = [0, 0], sizes = [8, 128], strides = [1, 1]} : vector<8x256xf32> to vector<8x128xf32>
    %301 = vector.extract_strided_slice %300 {offsets = [0, 0], sizes = [8, 96], strides = [1, 1]} : vector<8x128xf32> to vector<8x96xf32>
    %302 = arith.negf %301 : vector<8x96xf32>
    %303 = math.exp %302 : vector<8x96xf32>
    %cst_74 = arith.constant 1.000000e+00 : f32
    %304 = vector.broadcast %cst_74 : f32 to vector<8x96xf32>
    %305 = arith.addf %304, %303 : vector<8x96xf32>
    %306 = arith.divf %304, %305 : vector<8x96xf32>
    %307 = vector.extract_strided_slice %306 {offsets = [0, 0], sizes = [8, 32], strides = [1, 1]} : vector<8x96xf32> to vector<8x32xf32>
    %308 = vector.extract_strided_slice %306 {offsets = [0, 32], sizes = [8, 32], strides = [1, 1]} : vector<8x96xf32> to vector<8x32xf32>
    %309 = vector.extract_strided_slice %306 {offsets = [0, 64], sizes = [8, 32], strides = [1, 1]} : vector<8x96xf32> to vector<8x32xf32>
    %310 = vector.extract_strided_slice %300 {offsets = [0, 96], sizes = [8, 32], strides = [1, 1]} : vector<8x128xf32> to vector<8x32xf32>
    %311 = math.tanh %310 : vector<8x32xf32>
    %312 = arith.mulf %308, %268 : vector<8x32xf32>
    %313 = arith.mulf %307, %311 : vector<8x32xf32>
    %314 = arith.addf %312, %313 : vector<8x32xf32>
    %315 = math.tanh %314 : vector<8x32xf32>
    %316 = arith.mulf %309, %315 : vector<8x32xf32>
    %317 = vector.extract_strided_slice %299 {offsets = [0, 128], sizes = [8, 128], strides = [1, 1]} : vector<8x256xf32> to vector<8x128xf32>
    %cst_75 = arith.constant dense<0.000000e+00> : vector<8x128xf32>
    %318 = tpu.matmul %316, %13, %cst_75 {dimension_numbers = #tpu.dot_dimension_numbers<[1], [0], [0], [1], [0, 0, 1, 1], [], []>} : vector<8x32xf32>, vector<32x128xf32>, vector<8x128xf32> -> vector<8x128xf32>
    %319 = arith.addf %317, %318 : vector<8x128xf32>
    %320 = vector.extract_strided_slice %319 {offsets = [0, 0], sizes = [8, 96], strides = [1, 1]} : vector<8x128xf32> to vector<8x96xf32>
    %321 = arith.negf %320 : vector<8x96xf32>
    %322 = math.exp %321 : vector<8x96xf32>
    %cst_76 = arith.constant 1.000000e+00 : f32
    %323 = vector.broadcast %cst_76 : f32 to vector<8x96xf32>
    %324 = arith.addf %323, %322 : vector<8x96xf32>
    %325 = arith.divf %323, %324 : vector<8x96xf32>
    %326 = vector.extract_strided_slice %325 {offsets = [0, 0], sizes = [8, 32], strides = [1, 1]} : vector<8x96xf32> to vector<8x32xf32>
    %327 = vector.extract_strided_slice %325 {offsets = [0, 32], sizes = [8, 32], strides = [1, 1]} : vector<8x96xf32> to vector<8x32xf32>
    %328 = vector.extract_strided_slice %325 {offsets = [0, 64], sizes = [8, 32], strides = [1, 1]} : vector<8x96xf32> to vector<8x32xf32>
    %329 = vector.extract_strided_slice %319 {offsets = [0, 96], sizes = [8, 32], strides = [1, 1]} : vector<8x128xf32> to vector<8x32xf32>
    %330 = math.tanh %329 : vector<8x32xf32>
    %331 = arith.mulf %327, %287 : vector<8x32xf32>
    %332 = arith.mulf %326, %330 : vector<8x32xf32>
    %333 = arith.addf %331, %332 : vector<8x32xf32>
    %334 = math.tanh %333 : vector<8x32xf32>
    %335 = arith.mulf %328, %334 : vector<8x32xf32>
    %336 = tpu.concatenate %316, %335 in 1 : vector<8x32xf32>, vector<8x32xf32> -> vector<8x64xf32>
    %337 = arith.index_cast %c6_i32 : i32 to index
    %c0_77 = arith.constant 0 : index
    %c0_78 = arith.constant 0 : index
    %338 = vector.load %arg18[%337, %c0_77, %c0_78] : memref<8x8x64xf32, #tpu.memory_space<vmem>>, vector<1x8x64xf32>
    %339 = vector.shape_cast %338 : vector<1x8x64xf32> to vector<8x64xf32>
    %340 = vector.shape_cast %336 : vector<8x64xf32> to vector<1x8x64xf32>
    tpu.vector_store %arg18[%337, %c0_77, %c0_78], %340 {strides = array<i32>} : memref<8x8x64xf32, #tpu.memory_space<vmem>>, vector<1x8x64xf32>,
    %c7_i32 = arith.constant 7 : i32
    %cst_79 = arith.constant dense<0.000000e+00> : vector<8x256xf32>
    %341 = tpu.matmul %336, %12, %cst_79 {dimension_numbers = #tpu.dot_dimension_numbers<[1], [0], [0], [1], [0, 0, 1, 1], [], []>} : vector<8x64xf32>, vector<64x256xf32>, vector<8x256xf32> -> vector<8x256xf32>
    %342 = arith.index_cast %c7_i32 : i32 to index
    %c0_80 = arith.constant 0 : index
    %c0_81 = arith.constant 0 : index
    %343 = vector.load %arg17[%342, %c0_80, %c0_81] : memref<8x8x256xf32, #tpu.memory_space<vmem>>, vector<1x8x256xf32>
    %344 = vector.shape_cast %343 : vector<1x8x256xf32> to vector<8x256xf32>
    %345 = arith.addf %344, %341 : vector<8x256xf32>
    %346 = vector.extract_strided_slice %345 {offsets = [0, 0], sizes = [8, 128], strides = [1, 1]} : vector<8x256xf32> to vector<8x128xf32>
    %347 = vector.extract_strided_slice %346 {offsets = [0, 0], sizes = [8, 96], strides = [1, 1]} : vector<8x128xf32> to vector<8x96xf32>
    %348 = arith.negf %347 : vector<8x96xf32>
    %349 = math.exp %348 : vector<8x96xf32>
    %cst_82 = arith.constant 1.000000e+00 : f32
    %350 = vector.broadcast %cst_82 : f32 to vector<8x96xf32>
    %351 = arith.addf %350, %349 : vector<8x96xf32>
    %352 = arith.divf %350, %351 : vector<8x96xf32>
    %353 = vector.extract_strided_slice %352 {offsets = [0, 0], sizes = [8, 32], strides = [1, 1]} : vector<8x96xf32> to vector<8x32xf32>
    %354 = vector.extract_strided_slice %352 {offsets = [0, 32], sizes = [8, 32], strides = [1, 1]} : vector<8x96xf32> to vector<8x32xf32>
    %355 = vector.extract_strided_slice %352 {offsets = [0, 64], sizes = [8, 32], strides = [1, 1]} : vector<8x96xf32> to vector<8x32xf32>
    %356 = vector.extract_strided_slice %346 {offsets = [0, 96], sizes = [8, 32], strides = [1, 1]} : vector<8x128xf32> to vector<8x32xf32>
    %357 = math.tanh %356 : vector<8x32xf32>
    %358 = arith.mulf %354, %314 : vector<8x32xf32>
    %359 = arith.mulf %353, %357 : vector<8x32xf32>
    %360 = arith.addf %358, %359 : vector<8x32xf32>
    %361 = math.tanh %360 : vector<8x32xf32>
    %362 = arith.mulf %355, %361 : vector<8x32xf32>
    %363 = vector.extract_strided_slice %345 {offsets = [0, 128], sizes = [8, 128], strides = [1, 1]} : vector<8x256xf32> to vector<8x128xf32>
    %cst_83 = arith.constant dense<0.000000e+00> : vector<8x128xf32>
    %364 = tpu.matmul %362, %13, %cst_83 {dimension_numbers = #tpu.dot_dimension_numbers<[1], [0], [0], [1], [0, 0, 1, 1], [], []>} : vector<8x32xf32>, vector<32x128xf32>, vector<8x128xf32> -> vector<8x128xf32>
    %365 = arith.addf %363, %364 : vector<8x128xf32>
    %366 = vector.extract_strided_slice %365 {offsets = [0, 0], sizes = [8, 96], strides = [1, 1]} : vector<8x128xf32> to vector<8x96xf32>
    %367 = arith.negf %366 : vector<8x96xf32>
    %368 = math.exp %367 : vector<8x96xf32>
    %cst_84 = arith.constant 1.000000e+00 : f32
    %369 = vector.broadcast %cst_84 : f32 to vector<8x96xf32>
    %370 = arith.addf %369, %368 : vector<8x96xf32>
    %371 = arith.divf %369, %370 : vector<8x96xf32>
    %372 = vector.extract_strided_slice %371 {offsets = [0, 0], sizes = [8, 32], strides = [1, 1]} : vector<8x96xf32> to vector<8x32xf32>
    %373 = vector.extract_strided_slice %371 {offsets = [0, 32], sizes = [8, 32], strides = [1, 1]} : vector<8x96xf32> to vector<8x32xf32>
    %374 = vector.extract_strided_slice %371 {offsets = [0, 64], sizes = [8, 32], strides = [1, 1]} : vector<8x96xf32> to vector<8x32xf32>
    %375 = vector.extract_strided_slice %365 {offsets = [0, 96], sizes = [8, 32], strides = [1, 1]} : vector<8x128xf32> to vector<8x32xf32>
    %376 = math.tanh %375 : vector<8x32xf32>
    %377 = arith.mulf %373, %333 : vector<8x32xf32>
    %378 = arith.mulf %372, %376 : vector<8x32xf32>
    %379 = arith.addf %377, %378 : vector<8x32xf32>
    %380 = math.tanh %379 : vector<8x32xf32>
    %381 = arith.mulf %374, %380 : vector<8x32xf32>
    %382 = tpu.concatenate %362, %381 in 1 : vector<8x32xf32>, vector<8x32xf32> -> vector<8x64xf32>
    %383 = arith.index_cast %c7_i32 : i32 to index
    %c0_85 = arith.constant 0 : index
    %c0_86 = arith.constant 0 : index
    %384 = vector.load %arg18[%383, %c0_85, %c0_86] : memref<8x8x64xf32, #tpu.memory_space<vmem>>, vector<1x8x64xf32>
    %385 = vector.shape_cast %384 : vector<1x8x64xf32> to vector<8x64xf32>
    %386 = vector.shape_cast %382 : vector<8x64xf32> to vector<1x8x64xf32>
    tpu.vector_store %arg18[%383, %c0_85, %c0_86], %386 {strides = array<i32>} : memref<8x8x64xf32, #tpu.memory_space<vmem>>, vector<1x8x64xf32>,
    %c8_i32 = arith.constant 8 : i32
    %387 = vector.extract_strided_slice %382 {offsets = [0, 0], sizes = [8, 32], strides = [1, 1]} : vector<8x64xf32> to vector<8x32xf32>
    %c0_87 = arith.constant 0 : index
    %c0_88 = arith.constant 0 : index
    %388 = vector.load %arg13[%c0_87, %c0_88] : memref<8x32xf32, #tpu.memory_space<vmem>>, vector<8x32xf32>
    tpu.vector_store %arg13[%c0_87, %c0_88], %387 {strides = array<i32>} : memref<8x32xf32, #tpu.memory_space<vmem>>, vector<8x32xf32>,
    %389 = vector.extract_strided_slice %382 {offsets = [0, 32], sizes = [8, 32], strides = [1, 1]} : vector<8x64xf32> to vector<8x32xf32>
    %c0_89 = arith.constant 0 : index
    %c0_90 = arith.constant 0 : index
    %390 = vector.load %arg15[%c0_89, %c0_90] : memref<8x32xf32, #tpu.memory_space<vmem>>, vector<8x32xf32>
    tpu.vector_store %arg15[%c0_89, %c0_90], %389 {strides = array<i32>} : memref<8x32xf32, #tpu.memory_space<vmem>>, vector<8x32xf32>,
    %c0_91 = arith.constant 0 : index
    %c0_92 = arith.constant 0 : index
    %391 = vector.load %arg14[%c0_91, %c0_92] : memref<8x32xf32, #tpu.memory_space<vmem>>, vector<8x32xf32>
    tpu.vector_store %arg14[%c0_91, %c0_92], %360 {strides = array<i32>} : memref<8x32xf32, #tpu.memory_space<vmem>>, vector<8x32xf32>,
    %c0_93 = arith.constant 0 : index
    %c0_94 = arith.constant 0 : index
    %392 = vector.load %arg16[%c0_93, %c0_94] : memref<8x32xf32, #tpu.memory_space<vmem>>, vector<8x32xf32>
    tpu.vector_store %arg16[%c0_93, %c0_94], %379 {strides = array<i32>} : memref<8x32xf32, #tpu.memory_space<vmem>>, vector<8x32xf32>,
    %c0_95 = arith.constant 0 : index
    %c0_96 = arith.constant 0 : index
    %c0_97 = arith.constant 0 : index
    %393 = vector.load %arg18[%c0_95, %c0_96, %c0_97] : memref<8x8x64xf32, #tpu.memory_space<vmem>>, vector<8x8x64xf32>
    %394 = vector.shape_cast %393 : vector<8x8x64xf32> to vector<64x64xf32>
    %c0_98 = arith.constant 0 : index
    %c0_99 = arith.constant 0 : index
    %395 = vector.load %arg10[%c0_98, %c0_99] : memref<64x128xf32, #tpu.memory_space<vmem>>, vector<64x128xf32>
    %cst_100 = arith.constant dense<0.000000e+00> : vector<64x128xf32>
    %396 = tpu.matmul %394, %395, %cst_100 {dimension_numbers = #tpu.dot_dimension_numbers<[1], [0], [0], [1], [0, 0, 1, 1], [], []>} : vector<64x64xf32>, vector<64x128xf32>, vector<64x128xf32> -> vector<64x128xf32>
    %c0_101 = arith.constant 0 : index
    %c0_102 = arith.constant 0 : index
    %397 = vector.load %arg11[%c0_101, %c0_102] : memref<1x128xf32, #tpu.memory_space<vmem>>, vector<1x128xf32>
    %398 = vector.broadcast %397 : vector<1x128xf32> to vector<64x128xf32>
    %399 = arith.addf %396, %398 : vector<64x128xf32>
    %400 = vector.shape_cast %399 : vector<64x128xf32> to vector<8x8x128xf32>
    %c0_103 = arith.constant 0 : index
    %c0_104 = arith.constant 0 : index
    %c0_105 = arith.constant 0 : index
    %401 = vector.load %arg12[%c0_103, %c0_104, %c0_105] : memref<8x8x128xf32, #tpu.memory_space<vmem>>, vector<8x8x128xf32>
    tpu.vector_store %arg12[%c0_103, %c0_104, %c0_105], %400 {strides = array<i32>} : memref<8x8x128xf32, #tpu.memory_space<vmem>>, vector<8x8x128xf32>,
    return
  }
  func.func @transform_0(%arg0: i32) -> (i32, i32, i32) {
    %c0_i32 = arith.constant 0 : i32
    %c0_i32_0 = arith.constant 0 : i32
    %c0_i32_1 = arith.constant 0 : i32
    return %arg0, %c0_i32, %c0_i32_0 : i32, i32, i32
  }
  func.func @transform_1(%arg0: i32) -> (i32, i32) {
    %c0_i32 = arith.constant 0 : i32
    %c0_i32_0 = arith.constant 0 : i32
    %c0_i32_1 = arith.constant 0 : i32
    return %c0_i32, %c0_i32_0 : i32, i32
  }
  func.func @transform_2(%arg0: i32) -> (i32, i32) {
    %c0_i32 = arith.constant 0 : i32
    %c0_i32_0 = arith.constant 0 : i32
    %c0_i32_1 = arith.constant 0 : i32
    return %c0_i32, %c0_i32_0 : i32, i32
  }
  func.func @transform_3(%arg0: i32) -> (i32, i32) {
    %c0_i32 = arith.constant 0 : i32
    %c0_i32_0 = arith.constant 0 : i32
    %c0_i32_1 = arith.constant 0 : i32
    return %c0_i32, %c0_i32_0 : i32, i32
  }
  func.func @transform_4(%arg0: i32) -> (i32, i32) {
    %c0_i32 = arith.constant 0 : i32
    %c0_i32_0 = arith.constant 0 : i32
    %c0_i32_1 = arith.constant 0 : i32
    return %c0_i32, %c0_i32_0 : i32, i32
  }
  func.func @transform_5(%arg0: i32) -> (i32, i32) {
    %c0_i32 = arith.constant 0 : i32
    %c0_i32_0 = arith.constant 0 : i32
    %c0_i32_1 = arith.constant 0 : i32
    return %c0_i32, %c0_i32_0 : i32, i32
  }
  func.func @transform_6(%arg0: i32) -> (i32, i32) {
    %c0_i32 = arith.constant 0 : i32
    %c0_i32_0 = arith.constant 0 : i32
    %c0_i32_1 = arith.constant 0 : i32
    return %c0_i32, %c0_i32_0 : i32, i32
  }
  func.func @transform_7(%arg0: i32) -> (i32, i32) {
    %c0_i32 = arith.constant 0 : i32
    %c0_i32_0 = arith.constant 0 : i32
    %c0_i32_1 = arith.constant 0 : i32
    return %c0_i32, %c0_i32_0 : i32, i32
  }
  func.func @transform_8(%arg0: i32) -> (i32, i32) {
    %c0_i32 = arith.constant 0 : i32
    %c0_i32_0 = arith.constant 0 : i32
    %c0_i32_1 = arith.constant 0 : i32
    return %c0_i32, %c0_i32_0 : i32, i32
  }
  func.func @transform_9(%arg0: i32) -> (i32, i32) {
    %c0_i32 = arith.constant 0 : i32
    %c0_i32_0 = arith.constant 0 : i32
    %c0_i32_1 = arith.constant 0 : i32
    return %c0_i32, %c0_i32_0 : i32, i32
  }
  func.func @transform_10(%arg0: i32) -> (i32, i32) {
    %c0_i32 = arith.constant 0 : i32
    %c0_i32_0 = arith.constant 0 : i32
    %c0_i32_1 = arith.constant 0 : i32
    return %c0_i32, %c0_i32_0 : i32, i32
  }
  func.func @transform_11(%arg0: i32) -> (i32, i32, i32) {
    %c0_i32 = arith.constant 0 : i32
    %c0_i32_0 = arith.constant 0 : i32
    %c0_i32_1 = arith.constant 0 : i32
    return %arg0, %c0_i32, %c0_i32_0 : i32, i32, i32
  }
  func.func @transform_12(%arg0: i32) -> (i32, i32) {
    %c0_i32 = arith.constant 0 : i32
    %c0_i32_0 = arith.constant 0 : i32
    %c0_i32_1 = arith.constant 0 : i32
    return %c0_i32, %c0_i32_0 : i32, i32
  }
  func.func @transform_13(%arg0: i32) -> (i32, i32) {
    %c0_i32 = arith.constant 0 : i32
    %c0_i32_0 = arith.constant 0 : i32
    %c0_i32_1 = arith.constant 0 : i32
    return %c0_i32, %c0_i32_0 : i32, i32
  }
  func.func @transform_14(%arg0: i32) -> (i32, i32) {
    %c0_i32 = arith.constant 0 : i32
    %c0_i32_0 = arith.constant 0 : i32
    %c0_i32_1 = arith.constant 0 : i32
    return %c0_i32, %c0_i32_0 : i32, i32
  }
  func.func @transform_15(%arg0: i32) -> (i32, i32) {
    %c0_i32 = arith.constant 0 : i32
    %c0_i32_0 = arith.constant 0 : i32
    %c0_i32_1 = arith.constant 0 : i32
    return %c0_i32, %c0_i32_0 : i32, i32
  }
}

</mosaic_0001>

<llo_original>
// kernel: mog_handwriting_forward.1
$region0: #{mog_handwriting_forward.1}
  #allocation0 [shape = 'u32[]', space=smem, size = 0x4, offset = 0x4, fixed_abs, tag = 'smem constant byte address 0x4 - core index']
  #allocation1 [shape = 'u32[144,128]{1,0:T(1,128)}', space=vmem, size = 0x12000, scoped, tag = 'internal scratch']
  #allocation2 [shape = 'f32[8,8,256]{2,1,0:T(8,128)}', space=vmem, size = 0x10000, scoped, tag = 'scratch operand']
  #allocation3 [shape = 'f32[8,8,64]{2,1,0:T(8,128)}', space=vmem, size = 0x8000, scoped, tag = 'scratch operand']
  %s0 = inlined_call_operand.vmem [shape: f32[8,8,3], index: 0, kind: input, shape index: {}]
  %s1 = inlined_call_operand.vmem [shape: f32[8,32], index: 1, kind: input, shape index: {}]
  %s2 = inlined_call_operand.vmem [shape: f32[8,32], index: 2, kind: input, shape index: {}]
  %s3 = inlined_call_operand.vmem [shape: f32[8,32], index: 3, kind: input, shape index: {}]
  %s4 = inlined_call_operand.vmem [shape: f32[8,32], index: 4, kind: input, shape index: {}]
  %s5 = inlined_call_operand.vmem [shape: f32[3,256], index: 5, kind: input, shape index: {}]
  %s6 = inlined_call_operand.vmem [shape: f32[1,256], index: 6, kind: input, shape index: {}]
  %s7 = inlined_call_operand.vmem [shape: f32[64,256], index: 7, kind: input, shape index: {}]
  %s8 = inlined_call_operand.vmem [shape: f32[32,128], index: 8, kind: input, shape index: {}]
  %s9 = inlined_call_operand.vmem [shape: f32[64,128], index: 9, kind: input, shape index: {}]
  %s10 = inlined_call_operand.vmem [shape: f32[1,128], index: 10, kind: input, shape index: {}]
  %s11 = inlined_call_operand.vmem [shape: f32[8,8,128], index: 11, kind: output, shape index: {0}]
  %s12 = inlined_call_operand.vmem [shape: f32[8,32], index: 12, kind: output, shape index: {1}]
  %s13 = inlined_call_operand.vmem [shape: f32[8,32], index: 13, kind: output, shape index: {2}]
  %s14 = inlined_call_operand.vmem [shape: f32[8,32], index: 14, kind: output, shape index: {3}]
  %s15 = inlined_call_operand.vmem [shape: f32[8,32], index: 15, kind: output, shape index: {4}]
  %16 = xla_tuple %s11, %s12, %s13, %s14, %s15
  %s17 = sld [smem:[#allocation0]]
  $region90: #{mog_handwriting_forward.1} parent=0
    _
  %s19 = ssub.s32 1, %s17
  %s20 = scalar_select 0, %s19, %s17
  // Predicated region
  $region2: #{mog_handwriting_forward.1} parent=0 // pred_check
    _
  $region3: #{mog_handwriting_forward.1} parent=0 // pred_check_branch
    %22 = sbr.rel (0) target = $region5
  $region4: #{mog_handwriting_forward.1} parent=0 // pred_region
    _
  $region5: #{mog_handwriting_forward.1} parent=0 // pred_fallthru
    _
  // Predicated region
  $region6: #{mog_handwriting_forward.1} parent=0 // pred_check
    _
  $region7: #{mog_handwriting_forward.1} parent=0 // pred_check_branch
    %24 = sbr.rel (0) target = $region9
  $region8: #{mog_handwriting_forward.1} parent=0 // pred_region
    _
  $region9: #{mog_handwriting_forward.1} parent=0 // pred_fallthru
    _
  // Predicated region
  $region10: #{mog_handwriting_forward.1} parent=0 // pred_check
    _
  $region11: #{mog_handwriting_forward.1} parent=0 // pred_check_branch
    %26 = sbr.rel (0) target = $region13
  $region12: #{mog_handwriting_forward.1} parent=0 // pred_region
    _
  $region13: #{mog_handwriting_forward.1} parent=0 // pred_fallthru
    _
  // Predicated region
  $region14: #{mog_handwriting_forward.1} parent=0 // pred_check
    _
  $region15: #{mog_handwriting_forward.1} parent=0 // pred_check_branch
    %28 = sbr.rel (0) target = $region17
  $region16: #{mog_handwriting_forward.1} parent=0 // pred_region
    _
  $region17: #{mog_handwriting_forward.1} parent=0 // pred_fallthru
    _
  // Predicated region
  $region18: #{mog_handwriting_forward.1} parent=0 // pred_check
    _
  $region19: #{mog_handwriting_forward.1} parent=0 // pred_check_branch
    %30 = sbr.rel (0) target = $region21
  $region20: #{mog_handwriting_forward.1} parent=0 // pred_region
    _
  $region21: #{mog_handwriting_forward.1} parent=0 // pred_fallthru
    _
  // Predicated region
  $region22: #{mog_handwriting_forward.1} parent=0 // pred_check
    _
  $region23: #{mog_handwriting_forward.1} parent=0 // pred_check_branch
    %32 = sbr.rel (0) target = $region25
  $region24: #{mog_handwriting_forward.1} parent=0 // pred_region
    _
  $region25: #{mog_handwriting_forward.1} parent=0 // pred_fallthru
    _
  // Predicated region
  $region26: #{mog_handwriting_forward.1} parent=0 // pred_check
    _
  $region27: #{mog_handwriting_forward.1} parent=0 // pred_check_branch
    %34 = sbr.rel (0) target = $region29
  $region28: #{mog_handwriting_forward.1} parent=0 // pred_region
    _
  $region29: #{mog_handwriting_forward.1} parent=0 // pred_fallthru
    _
  // Predicated region
  $region30: #{mog_handwriting_forward.1} parent=0 // pred_check
    _
  $region31: #{mog_handwriting_forward.1} parent=0 // pred_check_branch
    %36 = sbr.rel (0) target = $region33
  $region32: #{mog_handwriting_forward.1} parent=0 // pred_region
    _
  $region33: #{mog_handwriting_forward.1} parent=0 // pred_fallthru
    _
  // Predicated region
  $region34: #{mog_handwriting_forward.1} parent=0 // pred_check
    _
  $region35: #{mog_handwriting_forward.1} parent=0 // pred_check_branch
    %38 = sbr.rel (0) target = $region37
  $region36: #{mog_handwriting_forward.1} parent=0 // pred_region
    _
  $region37: #{mog_handwriting_forward.1} parent=0 // pred_fallthru
    _
  // Predicated region
  $region38: #{mog_handwriting_forward.1} parent=0 // pred_check
    _
  $region39: #{mog_handwriting_forward.1} parent=0 // pred_check_branch
    %40 = sbr.rel (0) target = $region41
  $region40: #{mog_handwriting_forward.1} parent=0 // pred_region
    _
  $region41: #{mog_handwriting_forward.1} parent=0 // pred_fallthru
    _
  // Predicated region
  $region42: #{mog_handwriting_forward.1} parent=0 // pred_check
    _
  $region43: #{mog_handwriting_forward.1} parent=0 // pred_check_branch
    %42 = sbr.rel (0) target = $region45
  $region44: #{mog_handwriting_forward.1} parent=0 // pred_region
    _
  $region45: #{mog_handwriting_forward.1} parent=0 // pred_fallthru
    _
  %p43 = scmp.eq.s32.totalorder 0, 0
  // Predicated region
  $region46: #{mog_handwriting_forward.1} parent=0 // pred_check
    %p44 = pneg %p43
  $region47: #{mog_handwriting_forward.1} parent=0 // pred_check_branch
    %46 = sbr.rel (%p44) target = $region49
  $region48: #{mog_handwriting_forward.1} parent=0 // pred_region
    %v47 = vld [vmem:[%s1] sm:$0xff]
    %vm48 = vcmask 261120
    %49 = vst.msk [vmem:[%s12] sm:$0xff] %vm48, %v47
    %v50 = vld [vmem:[%s2] sm:$0xff]
    %51 = vst.msk [vmem:[%s13] sm:$0xff] %vm48, %v50
    %v52 = vld [vmem:[%s3] sm:$0xff]
    %53 = vst.msk [vmem:[%s14] sm:$0xff] %vm48, %v52
    %v54 = vld [vmem:[%s4] sm:$0xff]
    %55 = vst.msk [vmem:[%s15] sm:$0xff] %vm48, %v54
  $region49: #{mog_handwriting_forward.1} parent=0 // pred_fallthru
    _
  %v56 = vld [vmem:[%s0] sm:$0xff]
  %v57 = vld [vmem:[%s0 + $0x8] sm:$0xff]
  %v58 = vld [vmem:[%s0 + $0x10] sm:$0xff]
  %v59 = vld [vmem:[%s0 + $0x18] sm:$0xff]
  %v60 = vld [vmem:[%s0 + $0x20] sm:$0xff]
  %v61 = vld [vmem:[%s0 + $0x28] sm:$0xff]
  %v62 = vld [vmem:[%s0 + $0x30] sm:$0xff]
  %v63 = vld [vmem:[%s0 + $0x38] sm:$0xff]
  %v64 = vld [vmem:[%s5] sm:$0x77]
  %v65 = vld [vmem:[%s6] sm:$0x3]
  %v67 = vlaneseq
  %v68 = vshrl.u32 %v67, 7
  %v69 = vsub.s32 0, %v68
  %v70 = vrot.slane %v65, %v69
  %v71 = vlaneseq
  %v72 = vshrl.u32 %v71, 7
  %v73 = vsub.s32 1, %v72
  %v74 = vrot.slane %v65, %v73
  %v78 = vcombine.high %v64, %v64
  %vm79 = vcmask 23552
  %v81 = vsel %vm79, %v56, 0
  %v84 = vsel %vm79, %v57, 0
  %v87 = vsel %vm79, %v58, 0
  %v90 = vsel %vm79, %v59, 0
  %v93 = vsel %vm79, %v60, 0
  %v96 = vsel %vm79, %v61, 0
  %v99 = vsel %vm79, %v62, 0
  %v102 = vsel %vm79, %v63, 0
  %vm104 = vcmask 1042432
  %v105 = vsel %vm104, %v64, 0
  %v107 = vsel %vm104, %v78, 0
  %109 = vmatprep.subr.mxu0 %v107
  %110 = vmatpush1.msra.mxu0 %v105
  %111 = vmatprep.subr.mxu0 0.0
  %112 = vmatpush1.msra.mxu0 0.0
  %113 = vmatprep.subr.mxu0 0.0
  %114 = vmatpush1.msra.mxu0 0.0
  %115 = vmatprep.subr.mxu0 0.0
  %116 = vmatpush1.msra.mxu0 0.0
  %117 = vmatprep.subr.mxu0 0.0
  %118 = vmatpush1.msra.mxu0 0.0
  %119 = vmatprep.subr.mxu0 0.0
  %120 = vmatpush1.msra.mxu0 0.0
  %121 = vmatprep.subr.mxu0 0.0
  %122 = vmatpush1.msra.mxu0 0.0
  %123 = vmatprep.subr.mxu0 0.0
  %124 = vmatpush1.msra.mxu0 0.0
  %125 = vmatprep.subr.mxu0 0.0
  %126 = vmatpush1.msra.mxu0 0.0
  %127 = vmatprep.subr.mxu0 0.0
  %128 = vmatpush1.msra.mxu0 0.0
  %129 = vmatprep.subr.mxu0 0.0
  %130 = vmatpush1.msra.mxu0 0.0
  %131 = vmatprep.subr.mxu0 0.0
  %132 = vmatpush1.msra.mxu0 0.0
  %133 = vmatprep.subr.mxu0 0.0
  %134 = vmatpush1.msra.mxu0 0.0
  %135 = vmatprep.subr.mxu0 0.0
  %136 = vmatpush1.msra.mxu0 0.0
  %137 = vmatprep.subr.mxu0 0.0
  %138 = vmatpush1.msra.mxu0 0.0
  %139 = vmatprep.subr.mxu0 0.0
  %140 = vmatpush1.msra.mxu0 0.0
  %141 = vmatprep.subr.mxu0 0.0
  %142 = vmatpush1.msra.mxu0 0.0
  %143 = vmatprep.subr.mxu0 0.0
  %144 = vmatpush1.msra.mxu0 0.0
  %145 = vmatprep.subr.mxu0 0.0
  %146 = vmatpush1.msra.mxu0 0.0
  %147 = vmatprep.subr.mxu0 0.0
  %148 = vmatpush1.msra.mxu0 0.0
  %149 = vmatprep.subr.mxu0 0.0
  %150 = vmatpush1.msra.mxu0 0.0
  %151 = vmatprep.subr.mxu0 0.0
  %152 = vmatpush1.msra.mxu0 0.0
  %153 = vmatprep.subr.mxu0 0.0
  %154 = vmatpush1.msra.mxu0 0.0
  %155 = vmatprep.subr.mxu0 0.0
  %156 = vmatpush1.msra.mxu0 0.0
  %157 = vmatprep.subr.mxu0 0.0
  %158 = vmatpush1.msra.mxu0 0.0
  %159 = vmatprep.subr.mxu0 0.0
  %160 = vmatpush1.msra.mxu0 0.0
  %161 = vmatprep.subr.mxu0 0.0
  %162 = vmatpush1.msra.mxu0 0.0
  %163 = vmatprep.subr.mxu0 0.0
  %164 = vmatpush1.msra.mxu0 0.0
  %165 = vmatprep.subr.mxu0 0.0
  %166 = vmatpush1.msra.mxu0 0.0
  %167 = vmatprep.subr.mxu0 0.0
  %168 = vmatpush1.msra.mxu0 0.0
  %169 = vmatprep.subr.mxu0 0.0
  %170 = vmatpush1.msra.mxu0 0.0
  %171 = vmatprep.subr.mxu0 0.0
  %172 = vmatpush1.msra.mxu0 0.0
  %173 = vmatprep.mubr.f32.mxu0 0.0
  %174 = vmatmul.mubr.f32.gmra.mrb[0].mxu0 %v81
  %v175 = vpop.f32.mrb[0].mxu0
  %v176 = vadd.f32 %v70, %v175
  %v177 = vpop.f32.mrb[0].mxu0
  %v178 = vadd.f32 %v74, %v177
  %179 = vmatprep.mubr.f32.mxu0 0.0
  %180 = vmatmul.mubr.f32.gmra.mrb[0].mxu0 %v84
  %v181 = vpop.f32.mrb[0].mxu0
  %v182 = vadd.f32 %v70, %v181
  %v183 = vpop.f32.mrb[0].mxu0
  %v184 = vadd.f32 %v74, %v183
  %185 = vmatprep.mubr.f32.mxu0 0.0
  %186 = vmatmul.mubr.f32.gmra.mrb[0].mxu0 %v87
  %v187 = vpop.f32.mrb[0].mxu0
  %v188 = vadd.f32 %v70, %v187
  %v189 = vpop.f32.mrb[0].mxu0
  %v190 = vadd.f32 %v74, %v189
  %191 = vmatprep.mubr.f32.mxu0 0.0
  %192 = vmatmul.mubr.f32.gmra.mrb[0].mxu0 %v90
  %v193 = vpop.f32.mrb[0].mxu0
  %v194 = vadd.f32 %v70, %v193
  %v195 = vpop.f32.mrb[0].mxu0
  %v196 = vadd.f32 %v74, %v195
  %197 = vmatprep.mubr.f32.mxu0 0.0
  %198 = vmatmul.mubr.f32.gmra.mrb[0].mxu0 %v93
  %v199 = vpop.f32.mrb[0].mxu0
  %v200 = vadd.f32 %v70, %v199
  %v201 = vpop.f32.mrb[0].mxu0
  %v202 = vadd.f32 %v74, %v201
  %203 = vmatprep.mubr.f32.mxu0 0.0
  %204 = vmatmul.mubr.f32.gmra.mrb[0].mxu0 %v96
  %v205 = vpop.f32.mrb[0].mxu0
  %v206 = vadd.f32 %v70, %v205
  %v207 = vpop.f32.mrb[0].mxu0
  %v208 = vadd.f32 %v74, %v207
  %209 = vmatprep.mubr.f32.mxu0 0.0
  %210 = vmatmul.mubr.f32.gmra.mrb[0].mxu0 %v99
  %v211 = vpop.f32.mrb[0].mxu0
  %v212 = vadd.f32 %v70, %v211
  %v213 = vpop.f32.mrb[0].mxu0
  %v214 = vadd.f32 %v74, %v213
  %215 = vmatprep.mubr.f32.mxu0 0.0
  %216 = vmatmul.mubr.f32.gmra.mrb[0].mxu0 %v102
  %v217 = vpop.f32.mrb[0].mxu0
  %v218 = vadd.f32 %v70, %v217
  %v219 = vpop.f32.mrb[0].mxu0
  %v220 = vadd.f32 %v74, %v219
  %221 = vdwg.mxu0
  %222 = vst [vmem:[#allocation2] sm:$0xff] %v176
  %223 = vst [vmem:[#allocation2 + $0x8] sm:$0xff] %v178
  %224 = vst [vmem:[#allocation2 + $0x10] sm:$0xff] %v182
  %225 = vst [vmem:[#allocation2 + $0x18] sm:$0xff] %v184
  %226 = vst [vmem:[#allocation2 + $0x20] sm:$0xff] %v188
  %227 = vst [vmem:[#allocation2 + $0x28] sm:$0xff] %v190
  %228 = vst [vmem:[#allocation2 + $0x30] sm:$0xff] %v194
  %229 = vst [vmem:[#allocation2 + $0x38] sm:$0xff] %v196
  %230 = vst [vmem:[#allocation2 + $0x40] sm:$0xff] %v200
  %231 = vst [vmem:[#allocation2 + $0x48] sm:$0xff] %v202
  %232 = vst [vmem:[#allocation2 + $0x50] sm:$0xff] %v206
  %233 = vst [vmem:[#allocation2 + $0x58] sm:$0xff] %v208
  %234 = vst [vmem:[#allocation2 + $0x60] sm:$0xff] %v212
  %235 = vst [vmem:[#allocation2 + $0x68] sm:$0xff] %v214
  %236 = vst [vmem:[#allocation2 + $0x70] sm:$0xff] %v218
  %237 = vst [vmem:[#allocation2 + $0x78] sm:$0xff] %v220
  %v238 = vld [vmem:[%s7] sm:$0xff]
  %v239 = vld [vmem:[%s7 + $0x8] sm:$0xff]
  %v240 = vld [vmem:[%s7 + $0x10] sm:$0xff]
  %v241 = vld [vmem:[%s7 + $0x18] sm:$0xff]
  %v242 = vld [vmem:[%s7 + $0x20] sm:$0xff]
  %v243 = vld [vmem:[%s7 + $0x28] sm:$0xff]
  %v244 = vld [vmem:[%s7 + $0x30] sm:$0xff]
  %v245 = vld [vmem:[%s7 + $0x38] sm:$0xff]
  %v246 = vld [vmem:[%s7 + $0x40] sm:$0xff]
  %v247 = vld [vmem:[%s7 + $0x48] sm:$0xff]
  %v248 = vld [vmem:[%s7 + $0x50] sm:$0xff]
  %v249 = vld [vmem:[%s7 + $0x58] sm:$0xff]
  %v250 = vld [vmem:[%s7 + $0x60] sm:$0xff]
  %v251 = vld [vmem:[%s7 + $0x68] sm:$0xff]
  %v252 = vld [vmem:[%s7 + $0x70] sm:$0xff]
  %v253 = vld [vmem:[%s7 + $0x78] sm:$0xff]
  %v254 = vld [vmem:[%s8] sm:$0xff]
  %v255 = vld [vmem:[%s8 + $0x8] sm:$0xff]
  %v256 = vld [vmem:[%s8 + $0x10] sm:$0xff]
  %v257 = vld [vmem:[%s8 + $0x18] sm:$0xff]
  %v258 = vld [vmem:[%s12] sm:$0xff]
  %v259 = vld [vmem:[%s14] sm:$0xff]
  %261 = vrot.lane.b32.xlu0 %v259, 32
  %v262 = vpop.permute.xlu0 %261
  %vm264 = vcmask 261120
  %v265 = vsel %vm264, %v258, %v262
  %v266 = vld [vmem:[%s13] sm:$0xff]
  %v267 = vld [vmem:[%s15] sm:$0xff]
  %vm268 = vcmask 523264
  %v270 = vsel %vm268, %v265, 0
  %272 = vmatprep.subr.mxu0 %v239
  %273 = vmatpush1.msra.mxu0 %v238
  %274 = vmatprep.subr.mxu0 %v241
  %275 = vmatpush1.msra.mxu0 %v240
  %276 = vmatprep.subr.mxu0 %v243
  %277 = vmatpush1.msra.mxu0 %v242
  %278 = vmatprep.subr.mxu0 %v245
  %279 = vmatpush1.msra.mxu0 %v244
  %280 = vmatprep.subr.mxu0 %v247
  %281 = vmatpush1.msra.mxu0 %v246
  %282 = vmatprep.subr.mxu0 %v249
  %283 = vmatpush1.msra.mxu0 %v248
  %284 = vmatprep.subr.mxu0 %v251
  %285 = vmatpush1.msra.mxu0 %v250
  %286 = vmatprep.subr.mxu0 %v253
  %287 = vmatpush1.msra.mxu0 %v252
  %288 = vmatprep.subr.mxu0 0.0
  %289 = vmatpush1.msra.mxu0 0.0
  %290 = vmatprep.subr.mxu0 0.0
  %291 = vmatpush1.msra.mxu0 0.0
  %292 = vmatprep.subr.mxu0 0.0
  %293 = vmatpush1.msra.mxu0 0.0
  %294 = vmatprep.subr.mxu0 0.0
  %295 = vmatpush1.msra.mxu0 0.0
  %296 = vmatprep.subr.mxu0 0.0
  %297 = vmatpush1.msra.mxu0 0.0
  %298 = vmatprep.subr.mxu0 0.0
  %299 = vmatpush1.msra.mxu0 0.0
  %300 = vmatprep.subr.mxu0 0.0
  %301 = vmatpush1.msra.mxu0 0.0
  %302 = vmatprep.subr.mxu0 0.0
  %303 = vmatpush1.msra.mxu0 0.0
  %304 = vmatprep.subr.mxu0 0.0
  %305 = vmatpush1.msra.mxu0 0.0
  %306 = vmatprep.subr.mxu0 0.0
  %307 = vmatpush1.msra.mxu0 0.0
  %308 = vmatprep.subr.mxu0 0.0
  %309 = vmatpush1.msra.mxu0 0.0
  %310 = vmatprep.subr.mxu0 0.0
  %311 = vmatpush1.msra.mxu0 0.0
  %312 = vmatprep.subr.mxu0 0.0
  %313 = vmatpush1.msra.mxu0 0.0
  %314 = vmatprep.subr.mxu0 0.0
  %315 = vmatpush1.msra.mxu0 0.0
  %316 = vmatprep.subr.mxu0 0.0
  %317 = vmatpush1.msra.mxu0 0.0
  %318 = vmatprep.subr.mxu0 0.0
  %319 = vmatpush1.msra.mxu0 0.0
  %320 = vmatprep.subr.mxu0 0.0
  %321 = vmatpush1.msra.mxu0 0.0
  %322 = vmatprep.subr.mxu0 0.0
  %323 = vmatpush1.msra.mxu0 0.0
  %324 = vmatprep.subr.mxu0 0.0
  %325 = vmatpush1.msra.mxu0 0.0
  %326 = vmatprep.subr.mxu0 0.0
  %327 = vmatpush1.msra.mxu0 0.0
  %328 = vmatprep.subr.mxu0 0.0
  %329 = vmatpush1.msra.mxu0 0.0
  %330 = vmatprep.subr.mxu0 0.0
  %331 = vmatpush1.msra.mxu0 0.0
  %332 = vmatprep.subr.mxu0 0.0
  %333 = vmatpush1.msra.mxu0 0.0
  %334 = vmatprep.subr.mxu0 0.0
  %335 = vmatpush1.msra.mxu0 0.0
  %336 = vmatprep.mubr.f32.mxu0 0.0
  %337 = vmatmul.mubr.f32.gmra.mrb[0].mxu0 %v270
  %v338 = vpop.f32.mrb[0].mxu0
  %v339 = vadd.f32 0.0, %v338
  %v340 = vpop.f32.mrb[0].mxu0
  %v341 = vadd.f32 0.0, %v340
  %342 = vdwg.mxu0
  %v343 = vld [vmem:[#allocation2] sm:$0xff]
  %v344 = vld [vmem:[#allocation2 + $0x8] sm:$0xff]
  %v345 = vadd.f32 %v343, %v339
  %v346 = vadd.f32 %v344, %v341
  %v347 = vxor.u32 %v345, 2147483648
  %v348 = vmul.f32 %v347, 1.442695
  %v349 = vpow.pop %v348
  %v350 = vadd.f32 %v349, 1.0
  %v351 = vrcp.pop %v350
  %v352 = vmul.f32 1.0, %v351
  %v353 = vtanh.pop %v345
  %355 = vrot.lane.b32.xlu0 %v266, 32
  %v356 = vpop.permute.xlu0 %355
  %v358 = vmul.f32 %v352, %v356
  %360 = vrot.lane.b32.xlu0 %v353, 32
  %v361 = vpop.permute.xlu0 %360
  %v363 = vmul.f32 %v352, %v361
  %365 = vrot.lane.b32.xlu0 %v363, 32
  %v366 = vpop.permute.xlu0 %365
  %v368 = vadd.f32 %v358, %v366
  %v369 = vtanh.pop %v368
  %371 = vrot.lane.b32.xlu0 %v369, 32
  %v372 = vpop.permute.xlu0 %371
  %v374 = vmul.f32 %v352, %v372
  %376 = vrot.lane.b32.xlu0 %v374, 64
  %v377 = vpop.permute.xlu0 %376
  %v378 = vsel %vm264, %v377, 0
  %380 = vmatprep.subr.mxu0 0.0
  %381 = vmatpush1.msra.mxu0 %v254
  %382 = vmatprep.subr.mxu0 0.0
  %383 = vmatpush1.msra.mxu0 %v255
  %384 = vmatprep.subr.mxu0 0.0
  %385 = vmatpush1.msra.mxu0 %v256
  %386 = vmatprep.subr.mxu0 0.0
  %387 = vmatpush1.msra.mxu0 %v257
  %388 = vmatprep.subr.mxu0 0.0
  %389 = vmatpush1.msra.mxu0 0.0
  %390 = vmatprep.subr.mxu0 0.0
  %391 = vmatpush1.msra.mxu0 0.0
  %392 = vmatprep.subr.mxu0 0.0
  %393 = vmatpush1.msra.mxu0 0.0
  %394 = vmatprep.subr.mxu0 0.0
  %395 = vmatpush1.msra.mxu0 0.0
  %396 = vmatprep.subr.mxu0 0.0
  %397 = vmatpush1.msra.mxu0 0.0
  %398 = vmatprep.subr.mxu0 0.0
  %399 = vmatpush1.msra.mxu0 0.0
  %400 = vmatprep.subr.mxu0 0.0
  %401 = vmatpush1.msra.mxu0 0.0
  %402 = vmatprep.subr.mxu0 0.0
  %403 = vmatpush1.msra.mxu0 0.0
  %404 = vmatprep.subr.mxu0 0.0
  %405 = vmatpush1.msra.mxu0 0.0
  %406 = vmatprep.subr.mxu0 0.0
  %407 = vmatpush1.msra.mxu0 0.0
  %408 = vmatprep.subr.mxu0 0.0
  %409 = vmatpush1.msra.mxu0 0.0
  %410 = vmatprep.subr.mxu0 0.0
  %411 = vmatpush1.msra.mxu0 0.0
  %412 = vmatprep.subr.mxu0 0.0
  %413 = vmatpush1.msra.mxu0 0.0
  %414 = vmatprep.subr.mxu0 0.0
  %415 = vmatpush1.msra.mxu0 0.0
  %416 = vmatprep.subr.mxu0 0.0
  %417 = vmatpush1.msra.mxu0 0.0
  %418 = vmatprep.subr.mxu0 0.0
  %419 = vmatpush1.msra.mxu0 0.0
  %420 = vmatprep.subr.mxu0 0.0
  %421 = vmatpush1.msra.mxu0 0.0
  %422 = vmatprep.subr.mxu0 0.0
  %423 = vmatpush1.msra.mxu0 0.0
  %424 = vmatprep.subr.mxu0 0.0
  %425 = vmatpush1.msra.mxu0 0.0
  %426 = vmatprep.subr.mxu0 0.0
  %427 = vmatpush1.msra.mxu0 0.0
  %428 = vmatprep.subr.mxu0 0.0
  %429 = vmatpush1.msra.mxu0 0.0
  %430 = vmatprep.subr.mxu0 0.0
  %431 = vmatpush1.msra.mxu0 0.0
  %432 = vmatprep.subr.mxu0 0.0
  %433 = vmatpush1.msra.mxu0 0.0
  %434 = vmatprep.subr.mxu0 0.0
  %435 = vmatpush1.msra.mxu0 0.0
  %436 = vmatprep.subr.mxu0 0.0
  %437 = vmatpush1.msra.mxu0 0.0
  %438 = vmatprep.subr.mxu0 0.0
  %439 = vmatpush1.msra.mxu0 0.0
  %440 = vmatprep.subr.mxu0 0.0
  %441 = vmatpush1.msra.mxu0 0.0
  %442 = vmatprep.subr.mxu0 0.0
  %443 = vmatpush1.msra.mxu0 0.0
  %444 = vmatprep.mubr.f32.mxu0 0.0
  %445 = vmatmul.mubr.f32.gmra.mrb[0].mxu0 %v378
  %v446 = vpop.f32.mrb[0].mxu0
  %v447 = vadd.f32 0.0, %v446
  %v448 = vpop.f32.mrb[0].mxu0
  %449 = vdwg.mxu0
  %v450 = vadd.f32 %v346, %v447
  %v451 = vxor.u32 %v450, 2147483648
  %v452 = vmul.f32 %v451, 1.442695
  %v453 = vpow.pop %v452
  %v454 = vadd.f32 %v453, 1.0
  %v455 = vrcp.pop %v454
  %v456 = vmul.f32 1.0, %v455
  %v457 = vtanh.pop %v450
  %459 = vrot.lane.b32.xlu0 %v267, 32
  %v460 = vpop.permute.xlu0 %459
  %v462 = vmul.f32 %v456, %v460
  %464 = vrot.lane.b32.xlu0 %v457, 32
  %v465 = vpop.permute.xlu0 %464
  %v467 = vmul.f32 %v456, %v465
  %469 = vrot.lane.b32.xlu0 %v467, 32
  %v470 = vpop.permute.xlu0 %469
  %v472 = vadd.f32 %v462, %v470
  %v473 = vtanh.pop %v472
  %475 = vrot.lane.b32.xlu0 %v473, 32
  %v476 = vpop.permute.xlu0 %475
  %v478 = vmul.f32 %v456, %v476
  %481 = vrot.lane.b32.xlu0 %v478, 96
  %v482 = vpop.permute.xlu0 %481
  %v484 = vsel %vm264, %v377, %v482
  %485 = vst.msk [vmem:[#allocation3] sm:$0xff] %vm268, %v484
  %v487 = vsel %vm268, %v484, 0
  %489 = vmatprep.subr.mxu0 %v239
  %490 = vmatpush1.msra.mxu0 %v238
  %491 = vmatprep.subr.mxu0 %v241
  %492 = vmatpush1.msra.mxu0 %v240
  %493 = vmatprep.subr.mxu0 %v243
  %494 = vmatpush1.msra.mxu0 %v242
  %495 = vmatprep.subr.mxu0 %v245
  %496 = vmatpush1.msra.mxu0 %v244
  %497 = vmatprep.subr.mxu0 %v247
  %498 = vmatpush1.msra.mxu0 %v246
  %499 = vmatprep.subr.mxu0 %v249
  %500 = vmatpush1.msra.mxu0 %v248
  %501 = vmatprep.subr.mxu0 %v251
  %502 = vmatpush1.msra.mxu0 %v250
  %503 = vmatprep.subr.mxu0 %v253
  %504 = vmatpush1.msra.mxu0 %v252
  %505 = vmatprep.subr.mxu0 0.0
  %506 = vmatpush1.msra.mxu0 0.0
  %507 = vmatprep.subr.mxu0 0.0
  %508 = vmatpush1.msra.mxu0 0.0
  %509 = vmatprep.subr.mxu0 0.0
  %510 = vmatpush1.msra.mxu0 0.0
  %511 = vmatprep.subr.mxu0 0.0
  %512 = vmatpush1.msra.mxu0 0.0
  %513 = vmatprep.subr.mxu0 0.0
  %514 = vmatpush1.msra.mxu0 0.0
  %515 = vmatprep.subr.mxu0 0.0
  %516 = vmatpush1.msra.mxu0 0.0
  %517 = vmatprep.subr.mxu0 0.0
  %518 = vmatpush1.msra.mxu0 0.0
  %519 = vmatprep.subr.mxu0 0.0
  %520 = vmatpush1.msra.mxu0 0.0
  %521 = vmatprep.subr.mxu0 0.0
  %522 = vmatpush1.msra.mxu0 0.0
  %523 = vmatprep.subr.mxu0 0.0
  %524 = vmatpush1.msra.mxu0 0.0
  %525 = vmatprep.subr.mxu0 0.0
  %526 = vmatpush1.msra.mxu0 0.0
  %527 = vmatprep.subr.mxu0 0.0
  %528 = vmatpush1.msra.mxu0 0.0
  %529 = vmatprep.subr.mxu0 0.0
  %530 = vmatpush1.msra.mxu0 0.0
  %531 = vmatprep.subr.mxu0 0.0
  %532 = vmatpush1.msra.mxu0 0.0
  %533 = vmatprep.subr.mxu0 0.0
  %534 = vmatpush1.msra.mxu0 0.0
  %535 = vmatprep.subr.mxu0 0.0
  %536 = vmatpush1.msra.mxu0 0.0
  %537 = vmatprep.subr.mxu0 0.0
  %538 = vmatpush1.msra.mxu0 0.0
  %539 = vmatprep.subr.mxu0 0.0
  %540 = vmatpush1.msra.mxu0 0.0
  %541 = vmatprep.subr.mxu0 0.0
  %542 = vmatpush1.msra.mxu0 0.0
  %543 = vmatprep.subr.mxu0 0.0
  %544 = vmatpush1.msra.mxu0 0.0
  %545 = vmatprep.subr.mxu0 0.0
  %546 = vmatpush1.msra.mxu0 0.0
  %547 = vmatprep.subr.mxu0 0.0
  %548 = vmatpush1.msra.mxu0 0.0
  %549 = vmatprep.subr.mxu0 0.0
  %550 = vmatpush1.msra.mxu0 0.0
  %551 = vmatprep.subr.mxu0 0.0
  %552 = vmatpush1.msra.mxu0 0.0
  %553 = vmatprep.mubr.f32.mxu0 0.0
  %554 = vmatmul.mubr.f32.gmra.mrb[0].mxu0 %v487
  %v555 = vpop.f32.mrb[0].mxu0
  %v556 = vadd.f32 0.0, %v555
  %v557 = vpop.f32.mrb[0].mxu0
  %v558 = vadd.f32 0.0, %v557
  %559 = vdwg.mxu0
  %s560 = scalar_lea.vmem [#allocation2], 16
  %v561 = vld [vmem:[%s560] sm:$0xff]
  %v562 = vld [vmem:[%s560 + $0x8] sm:$0xff]
  %v563 = vadd.f32 %v561, %v556
  %v564 = vadd.f32 %v562, %v558
  %v565 = vxor.u32 %v563, 2147483648
  %v566 = vmul.f32 %v565, 1.442695
  %v567 = vpow.pop %v566
  %v568 = vadd.f32 %v567, 1.0
  %v569 = vrcp.pop %v568
  %v570 = vmul.f32 1.0, %v569
  %v571 = vtanh.pop %v563
  %v572 = vmul.f32 %v570, %v368
  %574 = vrot.lane.b32.xlu0 %v571, 32
  %v575 = vpop.permute.xlu0 %574
  %v577 = vmul.f32 %v570, %v575
  %579 = vrot.lane.b32.xlu0 %v577, 32
  %v580 = vpop.permute.xlu0 %579
  %v582 = vadd.f32 %v572, %v580
  %v583 = vtanh.pop %v582
  %585 = vrot.lane.b32.xlu0 %v583, 32
  %v586 = vpop.permute.xlu0 %585
  %v588 = vmul.f32 %v570, %v586
  %590 = vrot.lane.b32.xlu0 %v588, 64
  %v591 = vpop.permute.xlu0 %590
  %v592 = vsel %vm264, %v591, 0
  %594 = vmatprep.subr.mxu0 0.0
  %595 = vmatpush1.msra.mxu0 %v254
  %596 = vmatprep.subr.mxu0 0.0
  %597 = vmatpush1.msra.mxu0 %v255
  %598 = vmatprep.subr.mxu0 0.0
  %599 = vmatpush1.msra.mxu0 %v256
  %600 = vmatprep.subr.mxu0 0.0
  %601 = vmatpush1.msra.mxu0 %v257
  %602 = vmatprep.subr.mxu0 0.0
  %603 = vmatpush1.msra.mxu0 0.0
  %604 = vmatprep.subr.mxu0 0.0
  %605 = vmatpush1.msra.mxu0 0.0
  %606 = vmatprep.subr.mxu0 0.0
  %607 = vmatpush1.msra.mxu0 0.0
  %608 = vmatprep.subr.mxu0 0.0
  %609 = vmatpush1.msra.mxu0 0.0
  %610 = vmatprep.subr.mxu0 0.0
  %611 = vmatpush1.msra.mxu0 0.0
  %612 = vmatprep.subr.mxu0 0.0
  %613 = vmatpush1.msra.mxu0 0.0
  %614 = vmatprep.subr.mxu0 0.0
  %615 = vmatpush1.msra.mxu0 0.0
  %616 = vmatprep.subr.mxu0 0.0
  %617 = vmatpush1.msra.mxu0 0.0
  %618 = vmatprep.subr.mxu0 0.0
  %619 = vmatpush1.msra.mxu0 0.0
  %620 = vmatprep.subr.mxu0 0.0
  %621 = vmatpush1.msra.mxu0 0.0
  %622 = vmatprep.subr.mxu0 0.0
  %623 = vmatpush1.msra.mxu0 0.0
  %624 = vmatprep.subr.mxu0 0.0
  %625 = vmatpush1.msra.mxu0 0.0
  %626 = vmatprep.subr.mxu0 0.0
  %627 = vmatpush1.msra.mxu0 0.0
  %628 = vmatprep.subr.mxu0 0.0
  %629 = vmatpush1.msra.mxu0 0.0
  %630 = vmatprep.subr.mxu0 0.0
  %631 = vmatpush1.msra.mxu0 0.0
  %632 = vmatprep.subr.mxu0 0.0
  %633 = vmatpush1.msra.mxu0 0.0
  %634 = vmatprep.subr.mxu0 0.0
  %635 = vmatpush1.msra.mxu0 0.0
  %636 = vmatprep.subr.mxu0 0.0
  %637 = vmatpush1.msra.mxu0 0.0
  %638 = vmatprep.subr.mxu0 0.0
  %639 = vmatpush1.msra.mxu0 0.0
  %640 = vmatprep.subr.mxu0 0.0
  %641 = vmatpush1.msra.mxu0 0.0
  %642 = vmatprep.subr.mxu0 0.0
  %643 = vmatpush1.msra.mxu0 0.0
  %644 = vmatprep.subr.mxu0 0.0
  %645 = vmatpush1.msra.mxu0 0.0
  %646 = vmatprep.subr.mxu0 0.0
  %647 = vmatpush1.msra.mxu0 0.0
  %648 = vmatprep.subr.mxu0 0.0
  %649 = vmatpush1.msra.mxu0 0.0
  %650 = vmatprep.subr.mxu0 0.0
  %651 = vmatpush1.msra.mxu0 0.0
  %652 = vmatprep.subr.mxu0 0.0
  %653 = vmatpush1.msra.mxu0 0.0
  %654 = vmatprep.subr.mxu0 0.0
  %655 = vmatpush1.msra.mxu0 0.0
  %656 = vmatprep.subr.mxu0 0.0
  %657 = vmatpush1.msra.mxu0 0.0
  %658 = vmatprep.mubr.f32.mxu0 0.0
  %659 = vmatmul.mubr.f32.gmra.mrb[0].mxu0 %v592
  %v660 = vpop.f32.mrb[0].mxu0
  %v661 = vadd.f32 0.0, %v660
  %v662 = vpop.f32.mrb[0].mxu0
  %663 = vdwg.mxu0
  %v664 = vadd.f32 %v564, %v661
  %v665 = vxor.u32 %v664, 2147483648
  %v666 = vmul.f32 %v665, 1.442695
  %v667 = vpow.pop %v666
  %v668 = vadd.f32 %v667, 1.0
  %v669 = vrcp.pop %v668
  %v670 = vmul.f32 1.0, %v669
  %v671 = vtanh.pop %v664
  %v672 = vmul.f32 %v670, %v472
  %674 = vrot.lane.b32.xlu0 %v671, 32
  %v675 = vpop.permute.xlu0 %674
  %v677 = vmul.f32 %v670, %v675
  %679 = vrot.lane.b32.xlu0 %v677, 32
  %v680 = vpop.permute.xlu0 %679
  %v682 = vadd.f32 %v672, %v680
  %v683 = vtanh.pop %v682
  %685 = vrot.lane.b32.xlu0 %v683, 32
  %v686 = vpop.permute.xlu0 %685
  %v688 = vmul.f32 %v670, %v686
  %691 = vrot.lane.b32.xlu0 %v688, 96
  %v692 = vpop.permute.xlu0 %691
  %v694 = vsel %vm264, %v591, %v692
  %s695 = scalar_lea.vmem [#allocation3], 8
  %696 = vst.msk [vmem:[%s695] sm:$0xff] %vm268, %v694
  %v698 = vsel %vm268, %v694, 0
  %700 = vmatprep.subr.mxu0 %v239
  %701 = vmatpush1.msra.mxu0 %v238
  %702 = vmatprep.subr.mxu0 %v241
  %703 = vmatpush1.msra.mxu0 %v240
  %704 = vmatprep.subr.mxu0 %v243
  %705 = vmatpush1.msra.mxu0 %v242
  %706 = vmatprep.subr.mxu0 %v245
  %707 = vmatpush1.msra.mxu0 %v244
  %708 = vmatprep.subr.mxu0 %v247
  %709 = vmatpush1.msra.mxu0 %v246
  %710 = vmatprep.subr.mxu0 %v249
  %711 = vmatpush1.msra.mxu0 %v248
  %712 = vmatprep.subr.mxu0 %v251
  %713 = vmatpush1.msra.mxu0 %v250
  %714 = vmatprep.subr.mxu0 %v253
  %715 = vmatpush1.msra.mxu0 %v252
  %716 = vmatprep.subr.mxu0 0.0
  %717 = vmatpush1.msra.mxu0 0.0
  %718 = vmatprep.subr.mxu0 0.0
  %719 = vmatpush1.msra.mxu0 0.0
  %720 = vmatprep.subr.mxu0 0.0
  %721 = vmatpush1.msra.mxu0 0.0
  %722 = vmatprep.subr.mxu0 0.0
  %723 = vmatpush1.msra.mxu0 0.0
  %724 = vmatprep.subr.mxu0 0.0
  %725 = vmatpush1.msra.mxu0 0.0
  %726 = vmatprep.subr.mxu0 0.0
  %727 = vmatpush1.msra.mxu0 0.0
  %728 = vmatprep.subr.mxu0 0.0
  %729 = vmatpush1.msra.mxu0 0.0
  %730 = vmatprep.subr.mxu0 0.0
  %731 = vmatpush1.msra.mxu0 0.0
  %732 = vmatprep.subr.mxu0 0.0
  %733 = vmatpush1.msra.mxu0 0.0
  %734 = vmatprep.subr.mxu0 0.0
  %735 = vmatpush1.msra.mxu0 0.0
  %736 = vmatprep.subr.mxu0 0.0
  %737 = vmatpush1.msra.mxu0 0.0
  %738 = vmatprep.subr.mxu0 0.0
  %739 = vmatpush1.msra.mxu0 0.0
  %740 = vmatprep.subr.mxu0 0.0
  %741 = vmatpush1.msra.mxu0 0.0
  %742 = vmatprep.subr.mxu0 0.0
  %743 = vmatpush1.msra.mxu0 0.0
  %744 = vmatprep.subr.mxu0 0.0
  %745 = vmatpush1.msra.mxu0 0.0
  %746 = vmatprep.subr.mxu0 0.0
  %747 = vmatpush1.msra.mxu0 0.0
  %748 = vmatprep.subr.mxu0 0.0
  %749 = vmatpush1.msra.mxu0 0.0
  %750 = vmatprep.subr.mxu0 0.0
  %751 = vmatpush1.msra.mxu0 0.0
  %752 = vmatprep.subr.mxu0 0.0
  %753 = vmatpush1.msra.mxu0 0.0
  %754 = vmatprep.subr.mxu0 0.0
  %755 = vmatpush1.msra.mxu0 0.0
  %756 = vmatprep.subr.mxu0 0.0
  %757 = vmatpush1.msra.mxu0 0.0
  %758 = vmatprep.subr.mxu0 0.0
  %759 = vmatpush1.msra.mxu0 0.0
  %760 = vmatprep.subr.mxu0 0.0
  %761 = vmatpush1.msra.mxu0 0.0
  %762 = vmatprep.subr.mxu0 0.0
  %763 = vmatpush1.msra.mxu0 0.0
  %764 = vmatprep.mubr.f32.mxu0 0.0
  %765 = vmatmul.mubr.f32.gmra.mrb[0].mxu0 %v698
  %v766 = vpop.f32.mrb[0].mxu0
  %v767 = vadd.f32 0.0, %v766
  %v768 = vpop.f32.mrb[0].mxu0
  %v769 = vadd.f32 0.0, %v768
  %770 = vdwg.mxu0
  %s771 = scalar_lea.vmem [#allocation2], 32
  %v772 = vld [vmem:[%s771] sm:$0xff]
  %v773 = vld [vmem:[%s771 + $0x8] sm:$0xff]
  %v774 = vadd.f32 %v772, %v767
  %v775 = vadd.f32 %v773, %v769
  %v776 = vxor.u32 %v774, 2147483648
  %v777 = vmul.f32 %v776, 1.442695
  %v778 = vpow.pop %v777
  %v779 = vadd.f32 %v778, 1.0
  %v780 = vrcp.pop %v779
  %v781 = vmul.f32 1.0, %v780
  %v782 = vtanh.pop %v774
  %v783 = vmul.f32 %v781, %v582
  %785 = vrot.lane.b32.xlu0 %v782, 32
  %v786 = vpop.permute.xlu0 %785
  %v788 = vmul.f32 %v781, %v786
  %790 = vrot.lane.b32.xlu0 %v788, 32
  %v791 = vpop.permute.xlu0 %790
  %v793 = vadd.f32 %v783, %v791
  %v794 = vtanh.pop %v793
  %796 = vrot.lane.b32.xlu0 %v794, 32
  %v797 = vpop.permute.xlu0 %796
  %v799 = vmul.f32 %v781, %v797
  %801 = vrot.lane.b32.xlu0 %v799, 64
  %v802 = vpop.permute.xlu0 %801
  %v803 = vsel %vm264, %v802, 0
  %805 = vmatprep.subr.mxu0 0.0
  %806 = vmatpush1.msra.mxu0 %v254
  %807 = vmatprep.subr.mxu0 0.0
  %808 = vmatpush1.msra.mxu0 %v255
  %809 = vmatprep.subr.mxu0 0.0
  %810 = vmatpush1.msra.mxu0 %v256
  %811 = vmatprep.subr.mxu0 0.0
  %812 = vmatpush1.msra.mxu0 %v257
  %813 = vmatprep.subr.mxu0 0.0
  %814 = vmatpush1.msra.mxu0 0.0
  %815 = vmatprep.subr.mxu0 0.0
  %816 = vmatpush1.msra.mxu0 0.0
  %817 = vmatprep.subr.mxu0 0.0
  %818 = vmatpush1.msra.mxu0 0.0
  %819 = vmatprep.subr.mxu0 0.0
  %820 = vmatpush1.msra.mxu0 0.0
  %821 = vmatprep.subr.mxu0 0.0
  %822 = vmatpush1.msra.mxu0 0.0
  %823 = vmatprep.subr.mxu0 0.0
  %824 = vmatpush1.msra.mxu0 0.0
  %825 = vmatprep.subr.mxu0 0.0
  %826 = vmatpush1.msra.mxu0 0.0
  %827 = vmatprep.subr.mxu0 0.0
  %828 = vmatpush1.msra.mxu0 0.0
  %829 = vmatprep.subr.mxu0 0.0
  %830 = vmatpush1.msra.mxu0 0.0
  %831 = vmatprep.subr.mxu0 0.0
  %832 = vmatpush1.msra.mxu0 0.0
  %833 = vmatprep.subr.mxu0 0.0
  %834 = vmatpush1.msra.mxu0 0.0
  %835 = vmatprep.subr.mxu0 0.0
  %836 = vmatpush1.msra.mxu0 0.0
  %837 = vmatprep.subr.mxu0 0.0
  %838 = vmatpush1.msra.mxu0 0.0
  %839 = vmatprep.subr.mxu0 0.0
  %840 = vmatpush1.msra.mxu0 0.0
  %841 = vmatprep.subr.mxu0 0.0
  %842 = vmatpush1.msra.mxu0 0.0
  %843 = vmatprep.subr.mxu0 0.0
  %844 = vmatpush1.msra.mxu0 0.0
  %845 = vmatprep.subr.mxu0 0.0
  %846 = vmatpush1.msra.mxu0 0.0
  %847 = vmatprep.subr.mxu0 0.0
  %848 = vmatpush1.msra.mxu0 0.0
  %849 = vmatprep.subr.mxu0 0.0
  %850 = vmatpush1.msra.mxu0 0.0
  %851 = vmatprep.subr.mxu0 0.0
  %852 = vmatpush1.msra.mxu0 0.0
  %853 = vmatprep.subr.mxu0 0.0
  %854 = vmatpush1.msra.mxu0 0.0
  %855 = vmatprep.subr.mxu0 0.0
  %856 = vmatpush1.msra.mxu0 0.0
  %857 = vmatprep.subr.mxu0 0.0
  %858 = vmatpush1.msra.mxu0 0.0
  %859 = vmatprep.subr.mxu0 0.0
  %860 = vmatpush1.msra.mxu0 0.0
  %861 = vmatprep.subr.mxu0 0.0
  %862 = vmatpush1.msra.mxu0 0.0
  %863 = vmatprep.subr.mxu0 0.0
  %864 = vmatpush1.msra.mxu0 0.0
  %865 = vmatprep.subr.mxu0 0.0
  %866 = vmatpush1.msra.mxu0 0.0
  %867 = vmatprep.subr.mxu0 0.0
  %868 = vmatpush1.msra.mxu0 0.0
  %869 = vmatprep.mubr.f32.mxu0 0.0
  %870 = vmatmul.mubr.f32.gmra.mrb[0].mxu0 %v803
  %v871 = vpop.f32.mrb[0].mxu0
  %v872 = vadd.f32 0.0, %v871
  %v873 = vpop.f32.mrb[0].mxu0
  %874 = vdwg.mxu0
  %v875 = vadd.f32 %v775, %v872
  %v876 = vxor.u32 %v875, 2147483648
  %v877 = vmul.f32 %v876, 1.442695
  %v878 = vpow.pop %v877
  %v879 = vadd.f32 %v878, 1.0
  %v880 = vrcp.pop %v879
  %v881 = vmul.f32 1.0, %v880
  %v882 = vtanh.pop %v875
  %v883 = vmul.f32 %v881, %v682
  %885 = vrot.lane.b32.xlu0 %v882, 32
  %v886 = vpop.permute.xlu0 %885
  %v888 = vmul.f32 %v881, %v886
  %890 = vrot.lane.b32.xlu0 %v888, 32
  %v891 = vpop.permute.xlu0 %890
  %v893 = vadd.f32 %v883, %v891
  %v894 = vtanh.pop %v893
  %896 = vrot.lane.b32.xlu0 %v894, 32
  %v897 = vpop.permute.xlu0 %896
  %v899 = vmul.f32 %v881, %v897
  %902 = vrot.lane.b32.xlu0 %v899, 96
  %v903 = vpop.permute.xlu0 %902
  %v905 = vsel %vm264, %v802, %v903
  %s906 = scalar_lea.vmem [#allocation3], 16
  %907 = vst.msk [vmem:[%s906] sm:$0xff] %vm268, %v905
  %v909 = vsel %vm268, %v905, 0
  %911 = vmatprep.subr.mxu0 %v239
  %912 = vmatpush1.msra.mxu0 %v238
  %913 = vmatprep.subr.mxu0 %v241
  %914 = vmatpush1.msra.mxu0 %v240
  %915 = vmatprep.subr.mxu0 %v243
  %916 = vmatpush1.msra.mxu0 %v242
  %917 = vmatprep.subr.mxu0 %v245
  %918 = vmatpush1.msra.mxu0 %v244
  %919 = vmatprep.subr.mxu0 %v247
  %920 = vmatpush1.msra.mxu0 %v246
  %921 = vmatprep.subr.mxu0 %v249
  %922 = vmatpush1.msra.mxu0 %v248
  %923 = vmatprep.subr.mxu0 %v251
  %924 = vmatpush1.msra.mxu0 %v250
  %925 = vmatprep.subr.mxu0 %v253
  %926 = vmatpush1.msra.mxu0 %v252
  %927 = vmatprep.subr.mxu0 0.0
  %928 = vmatpush1.msra.mxu0 0.0
  %929 = vmatprep.subr.mxu0 0.0
  %930 = vmatpush1.msra.mxu0 0.0
  %931 = vmatprep.subr.mxu0 0.0
  %932 = vmatpush1.msra.mxu0 0.0
  %933 = vmatprep.subr.mxu0 0.0
  %934 = vmatpush1.msra.mxu0 0.0
  %935 = vmatprep.subr.mxu0 0.0
  %936 = vmatpush1.msra.mxu0 0.0
  %937 = vmatprep.subr.mxu0 0.0
  %938 = vmatpush1.msra.mxu0 0.0
  %939 = vmatprep.subr.mxu0 0.0
  %940 = vmatpush1.msra.mxu0 0.0
  %941 = vmatprep.subr.mxu0 0.0
  %942 = vmatpush1.msra.mxu0 0.0
  %943 = vmatprep.subr.mxu0 0.0
  %944 = vmatpush1.msra.mxu0 0.0
  %945 = vmatprep.subr.mxu0 0.0
  %946 = vmatpush1.msra.mxu0 0.0
  %947 = vmatprep.subr.mxu0 0.0
  %948 = vmatpush1.msra.mxu0 0.0
  %949 = vmatprep.subr.mxu0 0.0
  %950 = vmatpush1.msra.mxu0 0.0
  %951 = vmatprep.subr.mxu0 0.0
  %952 = vmatpush1.msra.mxu0 0.0
  %953 = vmatprep.subr.mxu0 0.0
  %954 = vmatpush1.msra.mxu0 0.0
  %955 = vmatprep.subr.mxu0 0.0
  %956 = vmatpush1.msra.mxu0 0.0
  %957 = vmatprep.subr.mxu0 0.0
  %958 = vmatpush1.msra.mxu0 0.0
  %959 = vmatprep.subr.mxu0 0.0
  %960 = vmatpush1.msra.mxu0 0.0
  %961 = vmatprep.subr.mxu0 0.0
  %962 = vmatpush1.msra.mxu0 0.0
  %963 = vmatprep.subr.mxu0 0.0
  %964 = vmatpush1.msra.mxu0 0.0
  %965 = vmatprep.subr.mxu0 0.0
  %966 = vmatpush1.msra.mxu0 0.0
  %967 = vmatprep.subr.mxu0 0.0
  %968 = vmatpush1.msra.mxu0 0.0
  %969 = vmatprep.subr.mxu0 0.0
  %970 = vmatpush1.msra.mxu0 0.0
  %971 = vmatprep.subr.mxu0 0.0
  %972 = vmatpush1.msra.mxu0 0.0
  %973 = vmatprep.subr.mxu0 0.0
  %974 = vmatpush1.msra.mxu0 0.0
  %975 = vmatprep.mubr.f32.mxu0 0.0
  %976 = vmatmul.mubr.f32.gmra.mrb[0].mxu0 %v909
  %v977 = vpop.f32.mrb[0].mxu0
  %v978 = vadd.f32 0.0, %v977
  %v979 = vpop.f32.mrb[0].mxu0
  %v980 = vadd.f32 0.0, %v979
  %981 = vdwg.mxu0
  %s982 = scalar_lea.vmem [#allocation2], 48
  %v983 = vld [vmem:[%s982] sm:$0xff]
  %v984 = vld [vmem:[%s982 + $0x8] sm:$0xff]
  %v985 = vadd.f32 %v983, %v978
  %v986 = vadd.f32 %v984, %v980
  %v987 = vxor.u32 %v985, 2147483648
  %v988 = vmul.f32 %v987, 1.442695
  %v989 = vpow.pop %v988
  %v990 = vadd.f32 %v989, 1.0
  %v991 = vrcp.pop %v990
  %v992 = vmul.f32 1.0, %v991
  %v993 = vtanh.pop %v985
  %v994 = vmul.f32 %v992, %v793
  %996 = vrot.lane.b32.xlu0 %v993, 32
  %v997 = vpop.permute.xlu0 %996
  %v999 = vmul.f32 %v992, %v997
  %1001 = vrot.lane.b32.xlu0 %v999, 32
  %v1002 = vpop.permute.xlu0 %1001
  %v1004 = vadd.f32 %v994, %v1002
  %v1005 = vtanh.pop %v1004
  %1007 = vrot.lane.b32.xlu0 %v1005, 32
  %v1008 = vpop.permute.xlu0 %1007
  %v1010 = vmul.f32 %v992, %v1008
  %1012 = vrot.lane.b32.xlu0 %v1010, 64
  %v1013 = vpop.permute.xlu0 %1012
  %v1014 = vsel %vm264, %v1013, 0
  %1016 = vmatprep.subr.mxu0 0.0
  %1017 = vmatpush1.msra.mxu0 %v254
  %1018 = vmatprep.subr.mxu0 0.0
  %1019 = vmatpush1.msra.mxu0 %v255
  %1020 = vmatprep.subr.mxu0 0.0
  %1021 = vmatpush1.msra.mxu0 %v256
  %1022 = vmatprep.subr.mxu0 0.0
  %1023 = vmatpush1.msra.mxu0 %v257
  %1024 = vmatprep.subr.mxu0 0.0
  %1025 = vmatpush1.msra.mxu0 0.0
  %1026 = vmatprep.subr.mxu0 0.0
  %1027 = vmatpush1.msra.mxu0 0.0
  %1028 = vmatprep.subr.mxu0 0.0
  %1029 = vmatpush1.msra.mxu0 0.0
  %1030 = vmatprep.subr.mxu0 0.0
  %1031 = vmatpush1.msra.mxu0 0.0
  %1032 = vmatprep.subr.mxu0 0.0
  %1033 = vmatpush1.msra.mxu0 0.0
  %1034 = vmatprep.subr.mxu0 0.0
  %1035 = vmatpush1.msra.mxu0 0.0
  %1036 = vmatprep.subr.mxu0 0.0
  %1037 = vmatpush1.msra.mxu0 0.0
  %1038 = vmatprep.subr.mxu0 0.0
  %1039 = vmatpush1.msra.mxu0 0.0
  %1040 = vmatprep.subr.mxu0 0.0
  %1041 = vmatpush1.msra.mxu0 0.0
  %1042 = vmatprep.subr.mxu0 0.0
  %1043 = vmatpush1.msra.mxu0 0.0
  %1044 = vmatprep.subr.mxu0 0.0
  %1045 = vmatpush1.msra.mxu0 0.0
  %1046 = vmatprep.subr.mxu0 0.0
  %1047 = vmatpush1.msra.mxu0 0.0
  %1048 = vmatprep.subr.mxu0 0.0
  %1049 = vmatpush1.msra.mxu0 0.0
  %1050 = vmatprep.subr.mxu0 0.0
  %1051 = vmatpush1.msra.mxu0 0.0
  %1052 = vmatprep.subr.mxu0 0.0
  %1053 = vmatpush1.msra.mxu0 0.0
  %1054 = vmatprep.subr.mxu0 0.0
  %1055 = vmatpush1.msra.mxu0 0.0
  %1056 = vmatprep.subr.mxu0 0.0
  %1057 = vmatpush1.msra.mxu0 0.0
  %1058 = vmatprep.subr.mxu0 0.0
  %1059 = vmatpush1.msra.mxu0 0.0
  %1060 = vmatprep.subr.mxu0 0.0
  %1061 = vmatpush1.msra.mxu0 0.0
  %1062 = vmatprep.subr.mxu0 0.0
  %1063 = vmatpush1.msra.mxu0 0.0
  %1064 = vmatprep.subr.mxu0 0.0
  %1065 = vmatpush1.msra.mxu0 0.0
  %1066 = vmatprep.subr.mxu0 0.0
  %1067 = vmatpush1.msra.mxu0 0.0
  %1068 = vmatprep.subr.mxu0 0.0
  %1069 = vmatpush1.msra.mxu0 0.0
  %1070 = vmatprep.subr.mxu0 0.0
  %1071 = vmatpush1.msra.mxu0 0.0
  %1072 = vmatprep.subr.mxu0 0.0
  %1073 = vmatpush1.msra.mxu0 0.0
  %1074 = vmatprep.subr.mxu0 0.0
  %1075 = vmatpush1.msra.mxu0 0.0
  %1076 = vmatprep.subr.mxu0 0.0
  %1077 = vmatpush1.msra.mxu0 0.0
  %1078 = vmatprep.subr.mxu0 0.0
  %1079 = vmatpush1.msra.mxu0 0.0
  %1080 = vmatprep.mubr.f32.mxu0 0.0
  %1081 = vmatmul.mubr.f32.gmra.mrb[0].mxu0 %v1014
  %v1082 = vpop.f32.mrb[0].mxu0
  %v1083 = vadd.f32 0.0, %v1082
  %v1084 = vpop.f32.mrb[0].mxu0
  %1085 = vdwg.mxu0
  %v1086 = vadd.f32 %v986, %v1083
  %v1087 = vxor.u32 %v1086, 2147483648
  %v1088 = vmul.f32 %v1087, 1.442695
  %v1089 = vpow.pop %v1088
  %v1090 = vadd.f32 %v1089, 1.0
  %v1091 = vrcp.pop %v1090
  %v1092 = vmul.f32 1.0, %v1091
  %v1093 = vtanh.pop %v1086
  %v1094 = vmul.f32 %v1092, %v893
  %1096 = vrot.lane.b32.xlu0 %v1093, 32
  %v1097 = vpop.permute.xlu0 %1096
  %v1099 = vmul.f32 %v1092, %v1097
  %1101 = vrot.lane.b32.xlu0 %v1099, 32
  %v1102 = vpop.permute.xlu0 %1101
  %v1104 = vadd.f32 %v1094, %v1102
  %v1105 = vtanh.pop %v1104
  %1107 = vrot.lane.b32.xlu0 %v1105, 32
  %v1108 = vpop.permute.xlu0 %1107
  %v1110 = vmul.f32 %v1092, %v1108
  %1113 = vrot.lane.b32.xlu0 %v1110, 96
  %v1114 = vpop.permute.xlu0 %1113
  %v1116 = vsel %vm264, %v1013, %v1114
  %s1117 = scalar_lea.vmem [#allocation3], 24
  %1118 = vst.msk [vmem:[%s1117] sm:$0xff] %vm268, %v1116
  %v1120 = vsel %vm268, %v1116, 0
  %1122 = vmatprep.subr.mxu0 %v239
  %1123 = vmatpush1.msra.mxu0 %v238
  %1124 = vmatprep.subr.mxu0 %v241
  %1125 = vmatpush1.msra.mxu0 %v240
  %1126 = vmatprep.subr.mxu0 %v243
  %1127 = vmatpush1.msra.mxu0 %v242
  %1128 = vmatprep.subr.mxu0 %v245
  %1129 = vmatpush1.msra.mxu0 %v244
  %1130 = vmatprep.subr.mxu0 %v247
  %1131 = vmatpush1.msra.mxu0 %v246
  %1132 = vmatprep.subr.mxu0 %v249
  %1133 = vmatpush1.msra.mxu0 %v248
  %1134 = vmatprep.subr.mxu0 %v251
  %1135 = vmatpush1.msra.mxu0 %v250
  %1136 = vmatprep.subr.mxu0 %v253
  %1137 = vmatpush1.msra.mxu0 %v252
  %1138 = vmatprep.subr.mxu0 0.0
  %1139 = vmatpush1.msra.mxu0 0.0
  %1140 = vmatprep.subr.mxu0 0.0
  %1141 = vmatpush1.msra.mxu0 0.0
  %1142 = vmatprep.subr.mxu0 0.0
  %1143 = vmatpush1.msra.mxu0 0.0
  %1144 = vmatprep.subr.mxu0 0.0
  %1145 = vmatpush1.msra.mxu0 0.0
  %1146 = vmatprep.subr.mxu0 0.0
  %1147 = vmatpush1.msra.mxu0 0.0
  %1148 = vmatprep.subr.mxu0 0.0
  %1149 = vmatpush1.msra.mxu0 0.0
  %1150 = vmatprep.subr.mxu0 0.0
  %1151 = vmatpush1.msra.mxu0 0.0
  %1152 = vmatprep.subr.mxu0 0.0
  %1153 = vmatpush1.msra.mxu0 0.0
  %1154 = vmatprep.subr.mxu0 0.0
  %1155 = vmatpush1.msra.mxu0 0.0
  %1156 = vmatprep.subr.mxu0 0.0
  %1157 = vmatpush1.msra.mxu0 0.0
  %1158 = vmatprep.subr.mxu0 0.0
  %1159 = vmatpush1.msra.mxu0 0.0
  %1160 = vmatprep.subr.mxu0 0.0
  %1161 = vmatpush1.msra.mxu0 0.0
  %1162 = vmatprep.subr.mxu0 0.0
  %1163 = vmatpush1.msra.mxu0 0.0
  %1164 = vmatprep.subr.mxu0 0.0
  %1165 = vmatpush1.msra.mxu0 0.0
  %1166 = vmatprep.subr.mxu0 0.0
  %1167 = vmatpush1.msra.mxu0 0.0
  %1168 = vmatprep.subr.mxu0 0.0
  %1169 = vmatpush1.msra.mxu0 0.0
  %1170 = vmatprep.subr.mxu0 0.0
  %1171 = vmatpush1.msra.mxu0 0.0
  %1172 = vmatprep.subr.mxu0 0.0
  %1173 = vmatpush1.msra.mxu0 0.0
  %1174 = vmatprep.subr.mxu0 0.0
  %1175 = vmatpush1.msra.mxu0 0.0
  %1176 = vmatprep.subr.mxu0 0.0
  %1177 = vmatpush1.msra.mxu0 0.0
  %1178 = vmatprep.subr.mxu0 0.0
  %1179 = vmatpush1.msra.mxu0 0.0
  %1180 = vmatprep.subr.mxu0 0.0
  %1181 = vmatpush1.msra.mxu0 0.0
  %1182 = vmatprep.subr.mxu0 0.0
  %1183 = vmatpush1.msra.mxu0 0.0
  %1184 = vmatprep.subr.mxu0 0.0
  %1185 = vmatpush1.msra.mxu0 0.0
  %1186 = vmatprep.mubr.f32.mxu0 0.0
  %1187 = vmatmul.mubr.f32.gmra.mrb[0].mxu0 %v1120
  %v1188 = vpop.f32.mrb[0].mxu0
  %v1189 = vadd.f32 0.0, %v1188
  %v1190 = vpop.f32.mrb[0].mxu0
  %v1191 = vadd.f32 0.0, %v1190
  %1192 = vdwg.mxu0
  %s1193 = scalar_lea.vmem [#allocation2], 64
  %v1194 = vld [vmem:[%s1193] sm:$0xff]
  %v1195 = vld [vmem:[%s1193 + $0x8] sm:$0xff]
  %v1196 = vadd.f32 %v1194, %v1189
  %v1197 = vadd.f32 %v1195, %v1191
  %v1198 = vxor.u32 %v1196, 2147483648
  %v1199 = vmul.f32 %v1198, 1.442695
  %v1200 = vpow.pop %v1199
  %v1201 = vadd.f32 %v1200, 1.0
  %v1202 = vrcp.pop %v1201
  %v1203 = vmul.f32 1.0, %v1202
  %v1204 = vtanh.pop %v1196
  %v1205 = vmul.f32 %v1203, %v1004
  %1207 = vrot.lane.b32.xlu0 %v1204, 32
  %v1208 = vpop.permute.xlu0 %1207
  %v1210 = vmul.f32 %v1203, %v1208
  %1212 = vrot.lane.b32.xlu0 %v1210, 32
  %v1213 = vpop.permute.xlu0 %1212
  %v1215 = vadd.f32 %v1205, %v1213
  %v1216 = vtanh.pop %v1215
  %1218 = vrot.lane.b32.xlu0 %v1216, 32
  %v1219 = vpop.permute.xlu0 %1218
  %v1221 = vmul.f32 %v1203, %v1219
  %1223 = vrot.lane.b32.xlu0 %v1221, 64
  %v1224 = vpop.permute.xlu0 %1223
  %v1225 = vsel %vm264, %v1224, 0
  %1227 = vmatprep.subr.mxu0 0.0
  %1228 = vmatpush1.msra.mxu0 %v254
  %1229 = vmatprep.subr.mxu0 0.0
  %1230 = vmatpush1.msra.mxu0 %v255
  %1231 = vmatprep.subr.mxu0 0.0
  %1232 = vmatpush1.msra.mxu0 %v256
  %1233 = vmatprep.subr.mxu0 0.0
  %1234 = vmatpush1.msra.mxu0 %v257
  %1235 = vmatprep.subr.mxu0 0.0
  %1236 = vmatpush1.msra.mxu0 0.0
  %1237 = vmatprep.subr.mxu0 0.0
  %1238 = vmatpush1.msra.mxu0 0.0
  %1239 = vmatprep.subr.mxu0 0.0
  %1240 = vmatpush1.msra.mxu0 0.0
  %1241 = vmatprep.subr.mxu0 0.0
  %1242 = vmatpush1.msra.mxu0 0.0
  %1243 = vmatprep.subr.mxu0 0.0
  %1244 = vmatpush1.msra.mxu0 0.0
  %1245 = vmatprep.subr.mxu0 0.0
  %1246 = vmatpush1.msra.mxu0 0.0
  %1247 = vmatprep.subr.mxu0 0.0
  %1248 = vmatpush1.msra.mxu0 0.0
  %1249 = vmatprep.subr.mxu0 0.0
  %1250 = vmatpush1.msra.mxu0 0.0
  %1251 = vmatprep.subr.mxu0 0.0
  %1252 = vmatpush1.msra.mxu0 0.0
  %1253 = vmatprep.subr.mxu0 0.0
  %1254 = vmatpush1.msra.mxu0 0.0
  %1255 = vmatprep.subr.mxu0 0.0
  %1256 = vmatpush1.msra.mxu0 0.0
  %1257 = vmatprep.subr.mxu0 0.0
  %1258 = vmatpush1.msra.mxu0 0.0
  %1259 = vmatprep.subr.mxu0 0.0
  %1260 = vmatpush1.msra.mxu0 0.0
  %1261 = vmatprep.subr.mxu0 0.0
  %1262 = vmatpush1.msra.mxu0 0.0
  %1263 = vmatprep.subr.mxu0 0.0
  %1264 = vmatpush1.msra.mxu0 0.0
  %1265 = vmatprep.subr.mxu0 0.0
  %1266 = vmatpush1.msra.mxu0 0.0
  %1267 = vmatprep.subr.mxu0 0.0
  %1268 = vmatpush1.msra.mxu0 0.0
  %1269 = vmatprep.subr.mxu0 0.0
  %1270 = vmatpush1.msra.mxu0 0.0
  %1271 = vmatprep.subr.mxu0 0.0
  %1272 = vmatpush1.msra.mxu0 0.0
  %1273 = vmatprep.subr.mxu0 0.0
  %1274 = vmatpush1.msra.mxu0 0.0
  %1275 = vmatprep.subr.mxu0 0.0
  %1276 = vmatpush1.msra.mxu0 0.0
  %1277 = vmatprep.subr.mxu0 0.0
  %1278 = vmatpush1.msra.mxu0 0.0
  %1279 = vmatprep.subr.mxu0 0.0
  %1280 = vmatpush1.msra.mxu0 0.0
  %1281 = vmatprep.subr.mxu0 0.0
  %1282 = vmatpush1.msra.mxu0 0.0
  %1283 = vmatprep.subr.mxu0 0.0
  %1284 = vmatpush1.msra.mxu0 0.0
  %1285 = vmatprep.subr.mxu0 0.0
  %1286 = vmatpush1.msra.mxu0 0.0
  %1287 = vmatprep.subr.mxu0 0.0
  %1288 = vmatpush1.msra.mxu0 0.0
  %1289 = vmatprep.subr.mxu0 0.0
  %1290 = vmatpush1.msra.mxu0 0.0
  %1291 = vmatprep.mubr.f32.mxu0 0.0
  %1292 = vmatmul.mubr.f32.gmra.mrb[0].mxu0 %v1225
  %v1293 = vpop.f32.mrb[0].mxu0
  %v1294 = vadd.f32 0.0, %v1293
  %v1295 = vpop.f32.mrb[0].mxu0
  %1296 = vdwg.mxu0
  %v1297 = vadd.f32 %v1197, %v1294
  %v1298 = vxor.u32 %v1297, 2147483648
  %v1299 = vmul.f32 %v1298, 1.442695
  %v1300 = vpow.pop %v1299
  %v1301 = vadd.f32 %v1300, 1.0
  %v1302 = vrcp.pop %v1301
  %v1303 = vmul.f32 1.0, %v1302
  %v1304 = vtanh.pop %v1297
  %v1305 = vmul.f32 %v1303, %v1104
  %1307 = vrot.lane.b32.xlu0 %v1304, 32
  %v1308 = vpop.permute.xlu0 %1307
  %v1310 = vmul.f32 %v1303, %v1308
  %1312 = vrot.lane.b32.xlu0 %v1310, 32
  %v1313 = vpop.permute.xlu0 %1312
  %v1315 = vadd.f32 %v1305, %v1313
  %v1316 = vtanh.pop %v1315
  %1318 = vrot.lane.b32.xlu0 %v1316, 32
  %v1319 = vpop.permute.xlu0 %1318
  %v1321 = vmul.f32 %v1303, %v1319
  %1324 = vrot.lane.b32.xlu0 %v1321, 96
  %v1325 = vpop.permute.xlu0 %1324
  %v1327 = vsel %vm264, %v1224, %v1325
  %s1328 = scalar_lea.vmem [#allocation3], 32
  %1329 = vst.msk [vmem:[%s1328] sm:$0xff] %vm268, %v1327
  %v1331 = vsel %vm268, %v1327, 0
  %1333 = vmatprep.subr.mxu0 %v239
  %1334 = vmatpush1.msra.mxu0 %v238
  %1335 = vmatprep.subr.mxu0 %v241
  %1336 = vmatpush1.msra.mxu0 %v240
  %1337 = vmatprep.subr.mxu0 %v243
  %1338 = vmatpush1.msra.mxu0 %v242
  %1339 = vmatprep.subr.mxu0 %v245
  %1340 = vmatpush1.msra.mxu0 %v244
  %1341 = vmatprep.subr.mxu0 %v247
  %1342 = vmatpush1.msra.mxu0 %v246
  %1343 = vmatprep.subr.mxu0 %v249
  %1344 = vmatpush1.msra.mxu0 %v248
  %1345 = vmatprep.subr.mxu0 %v251
  %1346 = vmatpush1.msra.mxu0 %v250
  %1347 = vmatprep.subr.mxu0 %v253
  %1348 = vmatpush1.msra.mxu0 %v252
  %1349 = vmatprep.subr.mxu0 0.0
  %1350 = vmatpush1.msra.mxu0 0.0
  %1351 = vmatprep.subr.mxu0 0.0
  %1352 = vmatpush1.msra.mxu0 0.0
  %1353 = vmatprep.subr.mxu0 0.0
  %1354 = vmatpush1.msra.mxu0 0.0
  %1355 = vmatprep.subr.mxu0 0.0
  %1356 = vmatpush1.msra.mxu0 0.0
  %1357 = vmatprep.subr.mxu0 0.0
  %1358 = vmatpush1.msra.mxu0 0.0
  %1359 = vmatprep.subr.mxu0 0.0
  %1360 = vmatpush1.msra.mxu0 0.0
  %1361 = vmatprep.subr.mxu0 0.0
  %1362 = vmatpush1.msra.mxu0 0.0
  %1363 = vmatprep.subr.mxu0 0.0
  %1364 = vmatpush1.msra.mxu0 0.0
  %1365 = vmatprep.subr.mxu0 0.0
  %1366 = vmatpush1.msra.mxu0 0.0
  %1367 = vmatprep.subr.mxu0 0.0
  %1368 = vmatpush1.msra.mxu0 0.0
  %1369 = vmatprep.subr.mxu0 0.0
  %1370 = vmatpush1.msra.mxu0 0.0
  %1371 = vmatprep.subr.mxu0 0.0
  %1372 = vmatpush1.msra.mxu0 0.0
  %1373 = vmatprep.subr.mxu0 0.0
  %1374 = vmatpush1.msra.mxu0 0.0
  %1375 = vmatprep.subr.mxu0 0.0
  %1376 = vmatpush1.msra.mxu0 0.0
  %1377 = vmatprep.subr.mxu0 0.0
  %1378 = vmatpush1.msra.mxu0 0.0
  %1379 = vmatprep.subr.mxu0 0.0
  %1380 = vmatpush1.msra.mxu0 0.0
  %1381 = vmatprep.subr.mxu0 0.0
  %1382 = vmatpush1.msra.mxu0 0.0
  %1383 = vmatprep.subr.mxu0 0.0
  %1384 = vmatpush1.msra.mxu0 0.0
  %1385 = vmatprep.subr.mxu0 0.0
  %1386 = vmatpush1.msra.mxu0 0.0
  %1387 = vmatprep.subr.mxu0 0.0
  %1388 = vmatpush1.msra.mxu0 0.0
  %1389 = vmatprep.subr.mxu0 0.0
  %1390 = vmatpush1.msra.mxu0 0.0
  %1391 = vmatprep.subr.mxu0 0.0
  %1392 = vmatpush1.msra.mxu0 0.0
  %1393 = vmatprep.subr.mxu0 0.0
  %1394 = vmatpush1.msra.mxu0 0.0
  %1395 = vmatprep.subr.mxu0 0.0
  %1396 = vmatpush1.msra.mxu0 0.0
  %1397 = vmatprep.mubr.f32.mxu0 0.0
  %1398 = vmatmul.mubr.f32.gmra.mrb[0].mxu0 %v1331
  %v1399 = vpop.f32.mrb[0].mxu0
  %v1400 = vadd.f32 0.0, %v1399
  %v1401 = vpop.f32.mrb[0].mxu0
  %v1402 = vadd.f32 0.0, %v1401
  %1403 = vdwg.mxu0
  %s1404 = scalar_lea.vmem [#allocation2], 80
  %v1405 = vld [vmem:[%s1404] sm:$0xff]
  %v1406 = vld [vmem:[%s1404 + $0x8] sm:$0xff]
  %v1407 = vadd.f32 %v1405, %v1400
  %v1408 = vadd.f32 %v1406, %v1402
  %v1409 = vxor.u32 %v1407, 2147483648
  %v1410 = vmul.f32 %v1409, 1.442695
  %v1411 = vpow.pop %v1410
  %v1412 = vadd.f32 %v1411, 1.0
  %v1413 = vrcp.pop %v1412
  %v1414 = vmul.f32 1.0, %v1413
  %v1415 = vtanh.pop %v1407
  %v1416 = vmul.f32 %v1414, %v1215
  %1418 = vrot.lane.b32.xlu0 %v1415, 32
  %v1419 = vpop.permute.xlu0 %1418
  %v1421 = vmul.f32 %v1414, %v1419
  %1423 = vrot.lane.b32.xlu0 %v1421, 32
  %v1424 = vpop.permute.xlu0 %1423
  %v1426 = vadd.f32 %v1416, %v1424
  %v1427 = vtanh.pop %v1426
  %1429 = vrot.lane.b32.xlu0 %v1427, 32
  %v1430 = vpop.permute.xlu0 %1429
  %v1432 = vmul.f32 %v1414, %v1430
  %1434 = vrot.lane.b32.xlu0 %v1432, 64
  %v1435 = vpop.permute.xlu0 %1434
  %v1436 = vsel %vm264, %v1435, 0
  %1438 = vmatprep.subr.mxu0 0.0
  %1439 = vmatpush1.msra.mxu0 %v254
  %1440 = vmatprep.subr.mxu0 0.0
  %1441 = vmatpush1.msra.mxu0 %v255
  %1442 = vmatprep.subr.mxu0 0.0
  %1443 = vmatpush1.msra.mxu0 %v256
  %1444 = vmatprep.subr.mxu0 0.0
  %1445 = vmatpush1.msra.mxu0 %v257
  %1446 = vmatprep.subr.mxu0 0.0
  %1447 = vmatpush1.msra.mxu0 0.0
  %1448 = vmatprep.subr.mxu0 0.0
  %1449 = vmatpush1.msra.mxu0 0.0
  %1450 = vmatprep.subr.mxu0 0.0
  %1451 = vmatpush1.msra.mxu0 0.0
  %1452 = vmatprep.subr.mxu0 0.0
  %1453 = vmatpush1.msra.mxu0 0.0
  %1454 = vmatprep.subr.mxu0 0.0
  %1455 = vmatpush1.msra.mxu0 0.0
  %1456 = vmatprep.subr.mxu0 0.0
  %1457 = vmatpush1.msra.mxu0 0.0
  %1458 = vmatprep.subr.mxu0 0.0
  %1459 = vmatpush1.msra.mxu0 0.0
  %1460 = vmatprep.subr.mxu0 0.0
  %1461 = vmatpush1.msra.mxu0 0.0
  %1462 = vmatprep.subr.mxu0 0.0
  %1463 = vmatpush1.msra.mxu0 0.0
  %1464 = vmatprep.subr.mxu0 0.0
  %1465 = vmatpush1.msra.mxu0 0.0
  %1466 = vmatprep.subr.mxu0 0.0
  %1467 = vmatpush1.msra.mxu0 0.0
  %1468 = vmatprep.subr.mxu0 0.0
  %1469 = vmatpush1.msra.mxu0 0.0
  %1470 = vmatprep.subr.mxu0 0.0
  %1471 = vmatpush1.msra.mxu0 0.0
  %1472 = vmatprep.subr.mxu0 0.0
  %1473 = vmatpush1.msra.mxu0 0.0
  %1474 = vmatprep.subr.mxu0 0.0
  %1475 = vmatpush1.msra.mxu0 0.0
  %1476 = vmatprep.subr.mxu0 0.0
  %1477 = vmatpush1.msra.mxu0 0.0
  %1478 = vmatprep.subr.mxu0 0.0
  %1479 = vmatpush1.msra.mxu0 0.0
  %1480 = vmatprep.subr.mxu0 0.0
  %1481 = vmatpush1.msra.mxu0 0.0
  %1482 = vmatprep.subr.mxu0 0.0
  %1483 = vmatpush1.msra.mxu0 0.0
  %1484 = vmatprep.subr.mxu0 0.0
  %1485 = vmatpush1.msra.mxu0 0.0
  %1486 = vmatprep.subr.mxu0 0.0
  %1487 = vmatpush1.msra.mxu0 0.0
  %1488 = vmatprep.subr.mxu0 0.0
  %1489 = vmatpush1.msra.mxu0 0.0
  %1490 = vmatprep.subr.mxu0 0.0
  %1491 = vmatpush1.msra.mxu0 0.0
  %1492 = vmatprep.subr.mxu0 0.0
  %1493 = vmatpush1.msra.mxu0 0.0
  %1494 = vmatprep.subr.mxu0 0.0
  %1495 = vmatpush1.msra.mxu0 0.0
  %1496 = vmatprep.subr.mxu0 0.0
  %1497 = vmatpush1.msra.mxu0 0.0
  %1498 = vmatprep.subr.mxu0 0.0
  %1499 = vmatpush1.msra.mxu0 0.0
  %1500 = vmatprep.subr.mxu0 0.0
  %1501 = vmatpush1.msra.mxu0 0.0
  %1502 = vmatprep.mubr.f32.mxu0 0.0
  %1503 = vmatmul.mubr.f32.gmra.mrb[0].mxu0 %v1436
  %v1504 = vpop.f32.mrb[0].mxu0
  %v1505 = vadd.f32 0.0, %v1504
  %v1506 = vpop.f32.mrb[0].mxu0
  %1507 = vdwg.mxu0
  %v1508 = vadd.f32 %v1408, %v1505
  %v1509 = vxor.u32 %v1508, 2147483648
  %v1510 = vmul.f32 %v1509, 1.442695
  %v1511 = vpow.pop %v1510
  %v1512 = vadd.f32 %v1511, 1.0
  %v1513 = vrcp.pop %v1512
  %v1514 = vmul.f32 1.0, %v1513
  %v1515 = vtanh.pop %v1508
  %v1516 = vmul.f32 %v1514, %v1315
  %1518 = vrot.lane.b32.xlu0 %v1515, 32
  %v1519 = vpop.permute.xlu0 %1518
  %v1521 = vmul.f32 %v1514, %v1519
  %1523 = vrot.lane.b32.xlu0 %v1521, 32
  %v1524 = vpop.permute.xlu0 %1523
  %v1526 = vadd.f32 %v1516, %v1524
  %v1527 = vtanh.pop %v1526
  %1529 = vrot.lane.b32.xlu0 %v1527, 32
  %v1530 = vpop.permute.xlu0 %1529
  %v1532 = vmul.f32 %v1514, %v1530
  %1535 = vrot.lane.b32.xlu0 %v1532, 96
  %v1536 = vpop.permute.xlu0 %1535
  %v1538 = vsel %vm264, %v1435, %v1536
  %s1539 = scalar_lea.vmem [#allocation3], 40
  %1540 = vst.msk [vmem:[%s1539] sm:$0xff] %vm268, %v1538
  %v1542 = vsel %vm268, %v1538, 0
  %1544 = vmatprep.subr.mxu0 %v239
  %1545 = vmatpush1.msra.mxu0 %v238
  %1546 = vmatprep.subr.mxu0 %v241
  %1547 = vmatpush1.msra.mxu0 %v240
  %1548 = vmatprep.subr.mxu0 %v243
  %1549 = vmatpush1.msra.mxu0 %v242
  %1550 = vmatprep.subr.mxu0 %v245
  %1551 = vmatpush1.msra.mxu0 %v244
  %1552 = vmatprep.subr.mxu0 %v247
  %1553 = vmatpush1.msra.mxu0 %v246
  %1554 = vmatprep.subr.mxu0 %v249
  %1555 = vmatpush1.msra.mxu0 %v248
  %1556 = vmatprep.subr.mxu0 %v251
  %1557 = vmatpush1.msra.mxu0 %v250
  %1558 = vmatprep.subr.mxu0 %v253
  %1559 = vmatpush1.msra.mxu0 %v252
  %1560 = vmatprep.subr.mxu0 0.0
  %1561 = vmatpush1.msra.mxu0 0.0
  %1562 = vmatprep.subr.mxu0 0.0
  %1563 = vmatpush1.msra.mxu0 0.0
  %1564 = vmatprep.subr.mxu0 0.0
  %1565 = vmatpush1.msra.mxu0 0.0
  %1566 = vmatprep.subr.mxu0 0.0
  %1567 = vmatpush1.msra.mxu0 0.0
  %1568 = vmatprep.subr.mxu0 0.0
  %1569 = vmatpush1.msra.mxu0 0.0
  %1570 = vmatprep.subr.mxu0 0.0
  %1571 = vmatpush1.msra.mxu0 0.0
  %1572 = vmatprep.subr.mxu0 0.0
  %1573 = vmatpush1.msra.mxu0 0.0
  %1574 = vmatprep.subr.mxu0 0.0
  %1575 = vmatpush1.msra.mxu0 0.0
  %1576 = vmatprep.subr.mxu0 0.0
  %1577 = vmatpush1.msra.mxu0 0.0
  %1578 = vmatprep.subr.mxu0 0.0
  %1579 = vmatpush1.msra.mxu0 0.0
  %1580 = vmatprep.subr.mxu0 0.0
  %1581 = vmatpush1.msra.mxu0 0.0
  %1582 = vmatprep.subr.mxu0 0.0
  %1583 = vmatpush1.msra.mxu0 0.0
  %1584 = vmatprep.subr.mxu0 0.0
  %1585 = vmatpush1.msra.mxu0 0.0
  %1586 = vmatprep.subr.mxu0 0.0
  %1587 = vmatpush1.msra.mxu0 0.0
  %1588 = vmatprep.subr.mxu0 0.0
  %1589 = vmatpush1.msra.mxu0 0.0
  %1590 = vmatprep.subr.mxu0 0.0
  %1591 = vmatpush1.msra.mxu0 0.0
  %1592 = vmatprep.subr.mxu0 0.0
  %1593 = vmatpush1.msra.mxu0 0.0
  %1594 = vmatprep.subr.mxu0 0.0
  %1595 = vmatpush1.msra.mxu0 0.0
  %1596 = vmatprep.subr.mxu0 0.0
  %1597 = vmatpush1.msra.mxu0 0.0
  %1598 = vmatprep.subr.mxu0 0.0
  %1599 = vmatpush1.msra.mxu0 0.0
  %1600 = vmatprep.subr.mxu0 0.0
  %1601 = vmatpush1.msra.mxu0 0.0
  %1602 = vmatprep.subr.mxu0 0.0
  %1603 = vmatpush1.msra.mxu0 0.0
  %1604 = vmatprep.subr.mxu0 0.0
  %1605 = vmatpush1.msra.mxu0 0.0
  %1606 = vmatprep.subr.mxu0 0.0
  %1607 = vmatpush1.msra.mxu0 0.0
  %1608 = vmatprep.mubr.f32.mxu0 0.0
  %1609 = vmatmul.mubr.f32.gmra.mrb[0].mxu0 %v1542
  %v1610 = vpop.f32.mrb[0].mxu0
  %v1611 = vadd.f32 0.0, %v1610
  %v1612 = vpop.f32.mrb[0].mxu0
  %v1613 = vadd.f32 0.0, %v1612
  %1614 = vdwg.mxu0
  %s1615 = scalar_lea.vmem [#allocation2], 96
  %v1616 = vld [vmem:[%s1615] sm:$0xff]
  %v1617 = vld [vmem:[%s1615 + $0x8] sm:$0xff]
  %v1618 = vadd.f32 %v1616, %v1611
  %v1619 = vadd.f32 %v1617, %v1613
  %v1620 = vxor.u32 %v1618, 2147483648
  %v1621 = vmul.f32 %v1620, 1.442695
  %v1622 = vpow.pop %v1621
  %v1623 = vadd.f32 %v1622, 1.0
  %v1624 = vrcp.pop %v1623
  %v1625 = vmul.f32 1.0, %v1624
  %v1626 = vtanh.pop %v1618
  %v1627 = vmul.f32 %v1625, %v1426
  %1629 = vrot.lane.b32.xlu0 %v1626, 32
  %v1630 = vpop.permute.xlu0 %1629
  %v1632 = vmul.f32 %v1625, %v1630
  %1634 = vrot.lane.b32.xlu0 %v1632, 32
  %v1635 = vpop.permute.xlu0 %1634
  %v1637 = vadd.f32 %v1627, %v1635
  %v1638 = vtanh.pop %v1637
  %1640 = vrot.lane.b32.xlu0 %v1638, 32
  %v1641 = vpop.permute.xlu0 %1640
  %v1643 = vmul.f32 %v1625, %v1641
  %1645 = vrot.lane.b32.xlu0 %v1643, 64
  %v1646 = vpop.permute.xlu0 %1645
  %v1647 = vsel %vm264, %v1646, 0
  %1649 = vmatprep.subr.mxu0 0.0
  %1650 = vmatpush1.msra.mxu0 %v254
  %1651 = vmatprep.subr.mxu0 0.0
  %1652 = vmatpush1.msra.mxu0 %v255
  %1653 = vmatprep.subr.mxu0 0.0
  %1654 = vmatpush1.msra.mxu0 %v256
  %1655 = vmatprep.subr.mxu0 0.0
  %1656 = vmatpush1.msra.mxu0 %v257
  %1657 = vmatprep.subr.mxu0 0.0
  %1658 = vmatpush1.msra.mxu0 0.0
  %1659 = vmatprep.subr.mxu0 0.0
  %1660 = vmatpush1.msra.mxu0 0.0
  %1661 = vmatprep.subr.mxu0 0.0
  %1662 = vmatpush1.msra.mxu0 0.0
  %1663 = vmatprep.subr.mxu0 0.0
  %1664 = vmatpush1.msra.mxu0 0.0
  %1665 = vmatprep.subr.mxu0 0.0
  %1666 = vmatpush1.msra.mxu0 0.0
  %1667 = vmatprep.subr.mxu0 0.0
  %1668 = vmatpush1.msra.mxu0 0.0
  %1669 = vmatprep.subr.mxu0 0.0
  %1670 = vmatpush1.msra.mxu0 0.0
  %1671 = vmatprep.subr.mxu0 0.0
  %1672 = vmatpush1.msra.mxu0 0.0
  %1673 = vmatprep.subr.mxu0 0.0
  %1674 = vmatpush1.msra.mxu0 0.0
  %1675 = vmatprep.subr.mxu0 0.0
  %1676 = vmatpush1.msra.mxu0 0.0
  %1677 = vmatprep.subr.mxu0 0.0
  %1678 = vmatpush1.msra.mxu0 0.0
  %1679 = vmatprep.subr.mxu0 0.0
  %1680 = vmatpush1.msra.mxu0 0.0
  %1681 = vmatprep.subr.mxu0 0.0
  %1682 = vmatpush1.msra.mxu0 0.0
  %1683 = vmatprep.subr.mxu0 0.0
  %1684 = vmatpush1.msra.mxu0 0.0
  %1685 = vmatprep.subr.mxu0 0.0
  %1686 = vmatpush1.msra.mxu0 0.0
  %1687 = vmatprep.subr.mxu0 0.0
  %1688 = vmatpush1.msra.mxu0 0.0
  %1689 = vmatprep.subr.mxu0 0.0
  %1690 = vmatpush1.msra.mxu0 0.0
  %1691 = vmatprep.subr.mxu0 0.0
  %1692 = vmatpush1.msra.mxu0 0.0
  %1693 = vmatprep.subr.mxu0 0.0
  %1694 = vmatpush1.msra.mxu0 0.0
  %1695 = vmatprep.subr.mxu0 0.0
  %1696 = vmatpush1.msra.mxu0 0.0
  %1697 = vmatprep.subr.mxu0 0.0
  %1698 = vmatpush1.msra.mxu0 0.0
  %1699 = vmatprep.subr.mxu0 0.0
  %1700 = vmatpush1.msra.mxu0 0.0
  %1701 = vmatprep.subr.mxu0 0.0
  %1702 = vmatpush1.msra.mxu0 0.0
  %1703 = vmatprep.subr.mxu0 0.0
  %1704 = vmatpush1.msra.mxu0 0.0
  %1705 = vmatprep.subr.mxu0 0.0
  %1706 = vmatpush1.msra.mxu0 0.0
  %1707 = vmatprep.subr.mxu0 0.0
  %1708 = vmatpush1.msra.mxu0 0.0
  %1709 = vmatprep.subr.mxu0 0.0
  %1710 = vmatpush1.msra.mxu0 0.0
  %1711 = vmatprep.subr.mxu0 0.0
  %1712 = vmatpush1.msra.mxu0 0.0
  %1713 = vmatprep.mubr.f32.mxu0 0.0
  %1714 = vmatmul.mubr.f32.gmra.mrb[0].mxu0 %v1647
  %v1715 = vpop.f32.mrb[0].mxu0
  %v1716 = vadd.f32 0.0, %v1715
  %v1717 = vpop.f32.mrb[0].mxu0
  %1718 = vdwg.mxu0
  %v1719 = vadd.f32 %v1619, %v1716
  %v1720 = vxor.u32 %v1719, 2147483648
  %v1721 = vmul.f32 %v1720, 1.442695
  %v1722 = vpow.pop %v1721
  %v1723 = vadd.f32 %v1722, 1.0
  %v1724 = vrcp.pop %v1723
  %v1725 = vmul.f32 1.0, %v1724
  %v1726 = vtanh.pop %v1719
  %v1727 = vmul.f32 %v1725, %v1526
  %1729 = vrot.lane.b32.xlu0 %v1726, 32
  %v1730 = vpop.permute.xlu0 %1729
  %v1732 = vmul.f32 %v1725, %v1730
  %1734 = vrot.lane.b32.xlu0 %v1732, 32
  %v1735 = vpop.permute.xlu0 %1734
  %v1737 = vadd.f32 %v1727, %v1735
  %v1738 = vtanh.pop %v1737
  %1740 = vrot.lane.b32.xlu0 %v1738, 32
  %v1741 = vpop.permute.xlu0 %1740
  %v1743 = vmul.f32 %v1725, %v1741
  %1746 = vrot.lane.b32.xlu0 %v1743, 96
  %v1747 = vpop.permute.xlu0 %1746
  %v1749 = vsel %vm264, %v1646, %v1747
  %s1750 = scalar_lea.vmem [#allocation3], 48
  %1751 = vst.msk [vmem:[%s1750] sm:$0xff] %vm268, %v1749
  %v1753 = vsel %vm268, %v1749, 0
  %1755 = vmatprep.subr.mxu0 %v239
  %1756 = vmatpush1.msra.mxu0 %v238
  %1757 = vmatprep.subr.mxu0 %v241
  %1758 = vmatpush1.msra.mxu0 %v240
  %1759 = vmatprep.subr.mxu0 %v243
  %1760 = vmatpush1.msra.mxu0 %v242
  %1761 = vmatprep.subr.mxu0 %v245
  %1762 = vmatpush1.msra.mxu0 %v244
  %1763 = vmatprep.subr.mxu0 %v247
  %1764 = vmatpush1.msra.mxu0 %v246
  %1765 = vmatprep.subr.mxu0 %v249
  %1766 = vmatpush1.msra.mxu0 %v248
  %1767 = vmatprep.subr.mxu0 %v251
  %1768 = vmatpush1.msra.mxu0 %v250
  %1769 = vmatprep.subr.mxu0 %v253
  %1770 = vmatpush1.msra.mxu0 %v252
  %1771 = vmatprep.subr.mxu0 0.0
  %1772 = vmatpush1.msra.mxu0 0.0
  %1773 = vmatprep.subr.mxu0 0.0
  %1774 = vmatpush1.msra.mxu0 0.0
  %1775 = vmatprep.subr.mxu0 0.0
  %1776 = vmatpush1.msra.mxu0 0.0
  %1777 = vmatprep.subr.mxu0 0.0
  %1778 = vmatpush1.msra.mxu0 0.0
  %1779 = vmatprep.subr.mxu0 0.0
  %1780 = vmatpush1.msra.mxu0 0.0
  %1781 = vmatprep.subr.mxu0 0.0
  %1782 = vmatpush1.msra.mxu0 0.0
  %1783 = vmatprep.subr.mxu0 0.0
  %1784 = vmatpush1.msra.mxu0 0.0
  %1785 = vmatprep.subr.mxu0 0.0
  %1786 = vmatpush1.msra.mxu0 0.0
  %1787 = vmatprep.subr.mxu0 0.0
  %1788 = vmatpush1.msra.mxu0 0.0
  %1789 = vmatprep.subr.mxu0 0.0
  %1790 = vmatpush1.msra.mxu0 0.0
  %1791 = vmatprep.subr.mxu0 0.0
  %1792 = vmatpush1.msra.mxu0 0.0
  %1793 = vmatprep.subr.mxu0 0.0
  %1794 = vmatpush1.msra.mxu0 0.0
  %1795 = vmatprep.subr.mxu0 0.0
  %1796 = vmatpush1.msra.mxu0 0.0
  %1797 = vmatprep.subr.mxu0 0.0
  %1798 = vmatpush1.msra.mxu0 0.0
  %1799 = vmatprep.subr.mxu0 0.0
  %1800 = vmatpush1.msra.mxu0 0.0
  %1801 = vmatprep.subr.mxu0 0.0
  %1802 = vmatpush1.msra.mxu0 0.0
  %1803 = vmatprep.subr.mxu0 0.0
  %1804 = vmatpush1.msra.mxu0 0.0
  %1805 = vmatprep.subr.mxu0 0.0
  %1806 = vmatpush1.msra.mxu0 0.0
  %1807 = vmatprep.subr.mxu0 0.0
  %1808 = vmatpush1.msra.mxu0 0.0
  %1809 = vmatprep.subr.mxu0 0.0
  %1810 = vmatpush1.msra.mxu0 0.0
  %1811 = vmatprep.subr.mxu0 0.0
  %1812 = vmatpush1.msra.mxu0 0.0
  %1813 = vmatprep.subr.mxu0 0.0
  %1814 = vmatpush1.msra.mxu0 0.0
  %1815 = vmatprep.subr.mxu0 0.0
  %1816 = vmatpush1.msra.mxu0 0.0
  %1817 = vmatprep.subr.mxu0 0.0
  %1818 = vmatpush1.msra.mxu0 0.0
  %1819 = vmatprep.mubr.f32.mxu0 0.0
  %1820 = vmatmul.mubr.f32.gmra.mrb[0].mxu0 %v1753
  %v1821 = vpop.f32.mrb[0].mxu0
  %v1822 = vadd.f32 0.0, %v1821
  %v1823 = vpop.f32.mrb[0].mxu0
  %v1824 = vadd.f32 0.0, %v1823
  %1825 = vdwg.mxu0
  %s1826 = scalar_lea.vmem [#allocation2], 112
  %v1827 = vld [vmem:[%s1826] sm:$0xff]
  %v1828 = vld [vmem:[%s1826 + $0x8] sm:$0xff]
  %v1829 = vadd.f32 %v1827, %v1822
  %v1830 = vadd.f32 %v1828, %v1824
  %v1831 = vxor.u32 %v1829, 2147483648
  %v1832 = vmul.f32 %v1831, 1.442695
  %v1833 = vpow.pop %v1832
  %v1834 = vadd.f32 %v1833, 1.0
  %v1835 = vrcp.pop %v1834
  %v1836 = vmul.f32 1.0, %v1835
  %v1837 = vtanh.pop %v1829
  %v1838 = vmul.f32 %v1836, %v1637
  %1840 = vrot.lane.b32.xlu0 %v1837, 32
  %v1841 = vpop.permute.xlu0 %1840
  %v1843 = vmul.f32 %v1836, %v1841
  %1845 = vrot.lane.b32.xlu0 %v1843, 32
  %v1846 = vpop.permute.xlu0 %1845
  %v1848 = vadd.f32 %v1838, %v1846
  %v1849 = vtanh.pop %v1848
  %1851 = vrot.lane.b32.xlu0 %v1849, 32
  %v1852 = vpop.permute.xlu0 %1851
  %v1854 = vmul.f32 %v1836, %v1852
  %1856 = vrot.lane.b32.xlu0 %v1854, 64
  %v1857 = vpop.permute.xlu0 %1856
  %v1858 = vsel %vm264, %v1857, 0
  %1860 = vmatprep.subr.mxu0 0.0
  %1861 = vmatpush1.msra.mxu0 %v254
  %1862 = vmatprep.subr.mxu0 0.0
  %1863 = vmatpush1.msra.mxu0 %v255
  %1864 = vmatprep.subr.mxu0 0.0
  %1865 = vmatpush1.msra.mxu0 %v256
  %1866 = vmatprep.subr.mxu0 0.0
  %1867 = vmatpush1.msra.mxu0 %v257
  %1868 = vmatprep.subr.mxu0 0.0
  %1869 = vmatpush1.msra.mxu0 0.0
  %1870 = vmatprep.subr.mxu0 0.0
  %1871 = vmatpush1.msra.mxu0 0.0
  %1872 = vmatprep.subr.mxu0 0.0
  %1873 = vmatpush1.msra.mxu0 0.0
  %1874 = vmatprep.subr.mxu0 0.0
  %1875 = vmatpush1.msra.mxu0 0.0
  %1876 = vmatprep.subr.mxu0 0.0
  %1877 = vmatpush1.msra.mxu0 0.0
  %1878 = vmatprep.subr.mxu0 0.0
  %1879 = vmatpush1.msra.mxu0 0.0
  %1880 = vmatprep.subr.mxu0 0.0
  %1881 = vmatpush1.msra.mxu0 0.0
  %1882 = vmatprep.subr.mxu0 0.0
  %1883 = vmatpush1.msra.mxu0 0.0
  %1884 = vmatprep.subr.mxu0 0.0
  %1885 = vmatpush1.msra.mxu0 0.0
  %1886 = vmatprep.subr.mxu0 0.0
  %1887 = vmatpush1.msra.mxu0 0.0
  %1888 = vmatprep.subr.mxu0 0.0
  %1889 = vmatpush1.msra.mxu0 0.0
  %1890 = vmatprep.subr.mxu0 0.0
  %1891 = vmatpush1.msra.mxu0 0.0
  %1892 = vmatprep.subr.mxu0 0.0
  %1893 = vmatpush1.msra.mxu0 0.0
  %1894 = vmatprep.subr.mxu0 0.0
  %1895 = vmatpush1.msra.mxu0 0.0
  %1896 = vmatprep.subr.mxu0 0.0
  %1897 = vmatpush1.msra.mxu0 0.0
  %1898 = vmatprep.subr.mxu0 0.0
  %1899 = vmatpush1.msra.mxu0 0.0
  %1900 = vmatprep.subr.mxu0 0.0
  %1901 = vmatpush1.msra.mxu0 0.0
  %1902 = vmatprep.subr.mxu0 0.0
  %1903 = vmatpush1.msra.mxu0 0.0
  %1904 = vmatprep.subr.mxu0 0.0
  %1905 = vmatpush1.msra.mxu0 0.0
  %1906 = vmatprep.subr.mxu0 0.0
  %1907 = vmatpush1.msra.mxu0 0.0
  %1908 = vmatprep.subr.mxu0 0.0
  %1909 = vmatpush1.msra.mxu0 0.0
  %1910 = vmatprep.subr.mxu0 0.0
  %1911 = vmatpush1.msra.mxu0 0.0
  %1912 = vmatprep.subr.mxu0 0.0
  %1913 = vmatpush1.msra.mxu0 0.0
  %1914 = vmatprep.subr.mxu0 0.0
  %1915 = vmatpush1.msra.mxu0 0.0
  %1916 = vmatprep.subr.mxu0 0.0
  %1917 = vmatpush1.msra.mxu0 0.0
  %1918 = vmatprep.subr.mxu0 0.0
  %1919 = vmatpush1.msra.mxu0 0.0
  %1920 = vmatprep.subr.mxu0 0.0
  %1921 = vmatpush1.msra.mxu0 0.0
  %1922 = vmatprep.subr.mxu0 0.0
  %1923 = vmatpush1.msra.mxu0 0.0
  %1924 = vmatprep.mubr.f32.mxu0 0.0
  %1925 = vmatmul.mubr.f32.gmra.mrb[0].mxu0 %v1858
  %v1926 = vpop.f32.mrb[0].mxu0
  %v1927 = vadd.f32 0.0, %v1926
  %v1928 = vpop.f32.mrb[0].mxu0
  %1929 = vdwg.mxu0
  %v1930 = vadd.f32 %v1830, %v1927
  %v1931 = vxor.u32 %v1930, 2147483648
  %v1932 = vmul.f32 %v1931, 1.442695
  %v1933 = vpow.pop %v1932
  %v1934 = vadd.f32 %v1933, 1.0
  %v1935 = vrcp.pop %v1934
  %v1936 = vmul.f32 1.0, %v1935
  %v1937 = vtanh.pop %v1930
  %v1938 = vmul.f32 %v1936, %v1737
  %1940 = vrot.lane.b32.xlu0 %v1937, 32
  %v1941 = vpop.permute.xlu0 %1940
  %v1943 = vmul.f32 %v1936, %v1941
  %1945 = vrot.lane.b32.xlu0 %v1943, 32
  %v1946 = vpop.permute.xlu0 %1945
  %v1948 = vadd.f32 %v1938, %v1946
  %v1949 = vtanh.pop %v1948
  %1951 = vrot.lane.b32.xlu0 %v1949, 32
  %v1952 = vpop.permute.xlu0 %1951
  %v1954 = vmul.f32 %v1936, %v1952
  %1957 = vrot.lane.b32.xlu0 %v1954, 96
  %v1958 = vpop.permute.xlu0 %1957
  %v1960 = vsel %vm264, %v1857, %v1958
  %s1961 = scalar_lea.vmem [#allocation3], 56
  %1962 = vst.msk [vmem:[%s1961] sm:$0xff] %vm268, %v1960
  %1963 = vst.msk [vmem:[%s12] sm:$0xff] %vm264, %v1960
  %1965 = vrot.lane.b32.xlu0 %v1960, 96
  %v1966 = vpop.permute.xlu0 %1965
  %1968 = vst.msk [vmem:[%s14] sm:$0xff] %vm264, %v1966
  %1970 = vrot.lane.b32.xlu0 %v1848, 96
  %v1971 = vpop.permute.xlu0 %1970
  %1973 = vst.msk [vmem:[%s13] sm:$0xff] %vm264, %v1971
  %1975 = vrot.lane.b32.xlu0 %v1948, 96
  %v1976 = vpop.permute.xlu0 %1975
  %1978 = vst.msk [vmem:[%s15] sm:$0xff] %vm264, %v1976
  %v1979 = vld [vmem:[#allocation3] sm:$0xff]
  %v1980 = vld [vmem:[#allocation3 + $0x8] sm:$0xff]
  %v1981 = vld [vmem:[#allocation3 + $0x10] sm:$0xff]
  %v1982 = vld [vmem:[#allocation3 + $0x18] sm:$0xff]
  %v1983 = vld [vmem:[#allocation3 + $0x20] sm:$0xff]
  %v1984 = vld [vmem:[#allocation3 + $0x28] sm:$0xff]
  %v1985 = vld [vmem:[#allocation3 + $0x30] sm:$0xff]
  %v1986 = vld [vmem:[#allocation3 + $0x38] sm:$0xff]
  %v1987 = vld [vmem:[%s9] sm:$0xff]
  %v1988 = vld [vmem:[%s9 + $0x8] sm:$0xff]
  %v1989 = vld [vmem:[%s9 + $0x10] sm:$0xff]
  %v1990 = vld [vmem:[%s9 + $0x18] sm:$0xff]
  %v1991 = vld [vmem:[%s9 + $0x20] sm:$0xff]
  %v1992 = vld [vmem:[%s9 + $0x28] sm:$0xff]
  %v1993 = vld [vmem:[%s9 + $0x30] sm:$0xff]
  %v1994 = vld [vmem:[%s9 + $0x38] sm:$0xff]
  %v1995 = vld [vmem:[%s10] sm:$0x1]
  %v1997 = vlaneseq
  %v1998 = vshrl.u32 %v1997, 7
  %v1999 = vsub.s32 0, %v1998
  %v2000 = vrot.slane %v1995, %v1999
  %v2003 = vsel %vm268, %v1979, 0
  %v2006 = vsel %vm268, %v1980, 0
  %v2009 = vsel %vm268, %v1981, 0
  %v2012 = vsel %vm268, %v1982, 0
  %v2015 = vsel %vm268, %v1983, 0
  %v2018 = vsel %vm268, %v1984, 0
  %v2021 = vsel %vm268, %v1985, 0
  %v2024 = vsel %vm268, %v1986, 0
  %2026 = vmatprep.subr.mxu0 0.0
  %2027 = vmatpush1.msra.mxu0 %v1987
  %2028 = vmatprep.subr.mxu0 0.0
  %2029 = vmatpush1.msra.mxu0 %v1988
  %2030 = vmatprep.subr.mxu0 0.0
  %2031 = vmatpush1.msra.mxu0 %v1989
  %2032 = vmatprep.subr.mxu0 0.0
  %2033 = vmatpush1.msra.mxu0 %v1990
  %2034 = vmatprep.subr.mxu0 0.0
  %2035 = vmatpush1.msra.mxu0 %v1991
  %2036 = vmatprep.subr.mxu0 0.0
  %2037 = vmatpush1.msra.mxu0 %v1992
  %2038 = vmatprep.subr.mxu0 0.0
  %2039 = vmatpush1.msra.mxu0 %v1993
  %2040 = vmatprep.subr.mxu0 0.0
  %2041 = vmatpush1.msra.mxu0 %v1994
  %2042 = vmatprep.subr.mxu0 0.0
  %2043 = vmatpush1.msra.mxu0 0.0
  %2044 = vmatprep.subr.mxu0 0.0
  %2045 = vmatpush1.msra.mxu0 0.0
  %2046 = vmatprep.subr.mxu0 0.0
  %2047 = vmatpush1.msra.mxu0 0.0
  %2048 = vmatprep.subr.mxu0 0.0
  %2049 = vmatpush1.msra.mxu0 0.0
  %2050 = vmatprep.subr.mxu0 0.0
  %2051 = vmatpush1.msra.mxu0 0.0
  %2052 = vmatprep.subr.mxu0 0.0
  %2053 = vmatpush1.msra.mxu0 0.0
  %2054 = vmatprep.subr.mxu0 0.0
  %2055 = vmatpush1.msra.mxu0 0.0
  %2056 = vmatprep.subr.mxu0 0.0
  %2057 = vmatpush1.msra.mxu0 0.0
  %2058 = vmatprep.subr.mxu0 0.0
  %2059 = vmatpush1.msra.mxu0 0.0
  %2060 = vmatprep.subr.mxu0 0.0
  %2061 = vmatpush1.msra.mxu0 0.0
  %2062 = vmatprep.subr.mxu0 0.0
  %2063 = vmatpush1.msra.mxu0 0.0
  %2064 = vmatprep.subr.mxu0 0.0
  %2065 = vmatpush1.msra.mxu0 0.0
  %2066 = vmatprep.subr.mxu0 0.0
  %2067 = vmatpush1.msra.mxu0 0.0
  %2068 = vmatprep.subr.mxu0 0.0
  %2069 = vmatpush1.msra.mxu0 0.0
  %2070 = vmatprep.subr.mxu0 0.0
  %2071 = vmatpush1.msra.mxu0 0.0
  %2072 = vmatprep.subr.mxu0 0.0
  %2073 = vmatpush1.msra.mxu0 0.0
  %2074 = vmatprep.subr.mxu0 0.0
  %2075 = vmatpush1.msra.mxu0 0.0
  %2076 = vmatprep.subr.mxu0 0.0
  %2077 = vmatpush1.msra.mxu0 0.0
  %2078 = vmatprep.subr.mxu0 0.0
  %2079 = vmatpush1.msra.mxu0 0.0
  %2080 = vmatprep.subr.mxu0 0.0
  %2081 = vmatpush1.msra.mxu0 0.0
  %2082 = vmatprep.subr.mxu0 0.0
  %2083 = vmatpush1.msra.mxu0 0.0
  %2084 = vmatprep.subr.mxu0 0.0
  %2085 = vmatpush1.msra.mxu0 0.0
  %2086 = vmatprep.subr.mxu0 0.0
  %2087 = vmatpush1.msra.mxu0 0.0
  %2088 = vmatprep.subr.mxu0 0.0
  %2089 = vmatpush1.msra.mxu0 0.0
  %2090 = vmatprep.mubr.f32.mxu0 0.0
  %2091 = vmatmul.mubr.f32.gmra.mrb[0].mxu0 %v2003
  %v2092 = vpop.f32.mrb[0].mxu0
  %v2093 = vadd.f32 %v2000, %v2092
  %v2094 = vpop.f32.mrb[0].mxu0
  %2095 = vmatprep.mubr.f32.mxu0 0.0
  %2096 = vmatmul.mubr.f32.gmra.mrb[0].mxu0 %v2006
  %v2097 = vpop.f32.mrb[0].mxu0
  %v2098 = vadd.f32 %v2000, %v2097
  %v2099 = vpop.f32.mrb[0].mxu0
  %2100 = vmatprep.mubr.f32.mxu0 0.0
  %2101 = vmatmul.mubr.f32.gmra.mrb[0].mxu0 %v2009
  %v2102 = vpop.f32.mrb[0].mxu0
  %v2103 = vadd.f32 %v2000, %v2102
  %v2104 = vpop.f32.mrb[0].mxu0
  %2105 = vmatprep.mubr.f32.mxu0 0.0
  %2106 = vmatmul.mubr.f32.gmra.mrb[0].mxu0 %v2012
  %v2107 = vpop.f32.mrb[0].mxu0
  %v2108 = vadd.f32 %v2000, %v2107
  %v2109 = vpop.f32.mrb[0].mxu0
  %2110 = vmatprep.mubr.f32.mxu0 0.0
  %2111 = vmatmul.mubr.f32.gmra.mrb[0].mxu0 %v2015
  %v2112 = vpop.f32.mrb[0].mxu0
  %v2113 = vadd.f32 %v2000, %v2112
  %v2114 = vpop.f32.mrb[0].mxu0
  %2115 = vmatprep.mubr.f32.mxu0 0.0
  %2116 = vmatmul.mubr.f32.gmra.mrb[0].mxu0 %v2018
  %v2117 = vpop.f32.mrb[0].mxu0
  %v2118 = vadd.f32 %v2000, %v2117
  %v2119 = vpop.f32.mrb[0].mxu0
  %2120 = vmatprep.mubr.f32.mxu0 0.0
  %2121 = vmatmul.mubr.f32.gmra.mrb[0].mxu0 %v2021
  %v2122 = vpop.f32.mrb[0].mxu0
  %v2123 = vadd.f32 %v2000, %v2122
  %v2124 = vpop.f32.mrb[0].mxu0
  %2125 = vmatprep.mubr.f32.mxu0 0.0
  %2126 = vmatmul.mubr.f32.gmra.mrb[0].mxu0 %v2024
  %v2127 = vpop.f32.mrb[0].mxu0
  %v2128 = vadd.f32 %v2000, %v2127
  %v2129 = vpop.f32.mrb[0].mxu0
  %2130 = vdwg.mxu0
  %2131 = vst [vmem:[%s11] sm:$0xff] %v2093
  %2132 = vst [vmem:[%s11 + $0x8] sm:$0xff] %v2098
  %2133 = vst [vmem:[%s11 + $0x10] sm:$0xff] %v2103
  %2134 = vst [vmem:[%s11 + $0x18] sm:$0xff] %v2108
  %2135 = vst [vmem:[%s11 + $0x20] sm:$0xff] %v2113
  %2136 = vst [vmem:[%s11 + $0x28] sm:$0xff] %v2118
  %2137 = vst [vmem:[%s11 + $0x30] sm:$0xff] %v2123
  %2138 = vst [vmem:[%s11 + $0x38] sm:$0xff] %v2128
  // Predicated region
  $region50: #{mog_handwriting_forward.1} parent=0 // pred_check
    _
  $region51: #{mog_handwriting_forward.1} parent=0 // pred_check_branch
    %2140 = sbr.rel (0) target = $region53
  $region52: #{mog_handwriting_forward.1} parent=0 // pred_region
    _
  $region53: #{mog_handwriting_forward.1} parent=0 // pred_fallthru
    _
  // Predicated region
  $region54: #{mog_handwriting_forward.1} parent=0 // pred_check
    _
  $region55: #{mog_handwriting_forward.1} parent=0 // pred_check_branch
    %2142 = sbr.rel (0) target = $region57
  $region56: #{mog_handwriting_forward.1} parent=0 // pred_region
    _
  $region57: #{mog_handwriting_forward.1} parent=0 // pred_fallthru
    _
  // Predicated region
  $region58: #{mog_handwriting_forward.1} parent=0 // pred_check
    _
  $region59: #{mog_handwriting_forward.1} parent=0 // pred_check_branch
    %2144 = sbr.rel (0) target = $region61
  $region60: #{mog_handwriting_forward.1} parent=0 // pred_region
    _
  $region61: #{mog_handwriting_forward.1} parent=0 // pred_fallthru
    _
  // Predicated region
  $region62: #{mog_handwriting_forward.1} parent=0 // pred_check
    _
  $region63: #{mog_handwriting_forward.1} parent=0 // pred_check_branch
    %2146 = sbr.rel (0) target = $region65
  $region64: #{mog_handwriting_forward.1} parent=0 // pred_region
    _
  $region65: #{mog_handwriting_forward.1} parent=0 // pred_fallthru
    _
  // Predicated region
  $region66: #{mog_handwriting_forward.1} parent=0 // pred_check
    _
  $region67: #{mog_handwriting_forward.1} parent=0 // pred_check_branch
    %2148 = sbr.rel (0) target = $region69
  $region68: #{mog_handwriting_forward.1} parent=0 // pred_region
    _
  $region69: #{mog_handwriting_forward.1} parent=0 // pred_fallthru
    _
  // Predicated region
  $region70: #{mog_handwriting_forward.1} parent=0 // pred_check
    _
  $region71: #{mog_handwriting_forward.1} parent=0 // pred_check_branch
    %2150 = sbr.rel (0) target = $region73
  $region72: #{mog_handwriting_forward.1} parent=0 // pred_region
    _
  $region73: #{mog_handwriting_forward.1} parent=0 // pred_fallthru
    _
  // Predicated region
  $region74: #{mog_handwriting_forward.1} parent=0 // pred_check
    _
  $region75: #{mog_handwriting_forward.1} parent=0 // pred_check_branch
    %2152 = sbr.rel (0) target = $region77
  $region76: #{mog_handwriting_forward.1} parent=0 // pred_region
    _
  $region77: #{mog_handwriting_forward.1} parent=0 // pred_fallthru
    _
  // Predicated region
  $region78: #{mog_handwriting_forward.1} parent=0 // pred_check
    _
  $region79: #{mog_handwriting_forward.1} parent=0 // pred_check_branch
    %2154 = sbr.rel (0) target = $region81
  $region80: #{mog_handwriting_forward.1} parent=0 // pred_region
    _
  $region81: #{mog_handwriting_forward.1} parent=0 // pred_fallthru
    _
  // Predicated region
  $region82: #{mog_handwriting_forward.1} parent=0 // pred_check
    _
  $region83: #{mog_handwriting_forward.1} parent=0 // pred_check_branch
    %2156 = sbr.rel (0) target = $region85
  $region84: #{mog_handwriting_forward.1} parent=0 // pred_region
    _
  $region85: #{mog_handwriting_forward.1} parent=0 // pred_fallthru
    _
  // Predicated region
  $region86: #{mog_handwriting_forward.1} parent=0 // pred_check
    _
  $region87: #{mog_handwriting_forward.1} parent=0 // pred_check_branch
    %2158 = sbr.rel (0) target = $region89
  $region88: #{mog_handwriting_forward.1} parent=0 // pred_region
    _
  $region89: #{mog_handwriting_forward.1} parent=0 // pred_fallthru
    _

</llo_original>
